<compile_context>
chip_gen: v7x
topology: tpu7x:2x2x1
jax: 0.10.0
libtpu: 0.0.40
codegen_flags: <defaults>
</compile_context>

<pallas_src>
import functools
import math

import jax
import jax.numpy as jnp
from jax.experimental import pallas as pl
from jax.experimental.pallas import tpu as pltpu


CFG = dict(
    vocab_size=128,
    max_pos=32,
    type_vocab=2,
    hidden=32,
    num_layers=2,
    num_heads=4,
    intermediate=64,
    num_classes=23,
)

LANE = 128            # lane-dense width for padded rows / classifier output
LN_EPS = 1e-12
MASK_NEG = -10000.0   # HF BERT additive-mask convention
ROWS_PER_LAYER = 8    # rows per layer in the packed small-parameter array


# ----------------------------------------------------------------------------
# In-kernel math helpers (operate on loaded values, everything stays in vregs)
# ----------------------------------------------------------------------------

def _erf(x):
    """Abramowitz & Stegun 7.1.26 erf approximation (max abs err ~1.5e-7)."""
    a1, a2, a3, a4, a5 = (0.254829592, -0.284496736, 1.421413741,
                          -1.453152027, 1.061405429)
    p = 0.3275911
    sgn = jnp.where(x >= 0.0, 1.0, -1.0)
    ax = jnp.abs(x)
    t = 1.0 / (1.0 + p * ax)
    poly = ((((a5 * t + a4) * t + a3) * t + a2) * t + a1) * t
    return sgn * (1.0 - poly * jnp.exp(-ax * ax))


def _gelu_exact(x):
    return 0.5 * x * (1.0 + _erf(x * (1.0 / math.sqrt(2.0))))


def _layernorm(x, g, b, eps):
    mu = jnp.mean(x, axis=-1, keepdims=True)
    var = jnp.mean((x - mu) ** 2, axis=-1, keepdims=True)
    return (x - mu) * jax.lax.rsqrt(var + eps) * g + b


# ----------------------------------------------------------------------------
# The single fused kernel: one grid step == one slice of the batch (Bp seqs)
# ----------------------------------------------------------------------------

def _fused_forward_kernel(
    x_ref,        # (Bp*S, H)   embeddings (word+pos+type), pre-LN
    mask_ref,     # (Bp, 1, S)  raw 0/1 attention mask
    sp_ref,       # (4+8L, 128) packed small parameters (biases, LN gains)
    qkv_w_ref,    # (L, H, 3H)  fused QKV projection weights
    o_w_ref,      # (L, nH, dH, H) head-major attention output projection
    fc1_w_ref,    # (L, H, I)
    fc2_w_ref,    # (L, I, H)
    head_w_ref,   # (H, 2*LANE) [pooler_w | padded classifier_w]
    out_ref,      # (Bp, 1, LANE)
    *, eps):
    Mb, H = x_ref.shape
    Bp, _, S = mask_ref.shape
    L = qkv_w_ref.shape[0]
    nH, dH = o_w_ref.shape[1], o_w_ref.shape[2]
    I = fc1_w_ref.shape[2]
    scale = 1.0 / math.sqrt(dH)

    def sp(row, width):
        # one packed small-parameter row, sliced to its logical width
        return sp_ref[row:row + 1, :width]                     # (1, width)

    # ---- embeddings LayerNorm over all Bp*S rows at once ----
    x = _layernorm(x_ref[...], sp(0, H), sp(1, H), eps)        # (Mb, H)

    # additive attention mask built in-kernel from the raw 0/1 mask
    add_mask = (1.0 - mask_ref[...]) * MASK_NEG                # (Bp, 1, S)

    # ---- encoder layers (static unroll; L is a compile-time constant) ----
    for l in range(L):
        base = 2 + ROWS_PER_LAYER * l
        qkv_b = sp(base + 0, 3 * H)
        o_b = sp(base + 1, H)
        ln1_g, ln1_b = sp(base + 2, H), sp(base + 3, H)
        fc1_b = sp(base + 4, I)
        fc2_b = sp(base + 5, H)
        ln2_g, ln2_b = sp(base + 6, H), sp(base + 7, H)

        # Fused QKV projection on all Bp*S rows: one (Mb,H) x (H,3H) matmul.
        qkv = jnp.dot(x, qkv_w_ref[l],
                      preferred_element_type=jnp.float32) + qkv_b      # (Mb, 3H)

        o_w = o_w_ref[l]                                       # (nH, dH, H)

        # Attention per sequence; heads are batched into single einsums.
        attn_rows = []
        for b in range(Bp):
            qkv_s = qkv[b * S:(b + 1) * S, :]                  # (S, 3H)

            def head_batch(off, qkv_s=qkv_s):
                # gather head chunks once into a (nH, S, dH) batch
                return jnp.concatenate(
                    [qkv_s[None, :, off + h * dH: off + (h + 1) * dH]
                     for h in range(nH)], axis=0)

            qh = head_batch(0)
            kh = head_batch(H)
            vh = head_batch(2 * H)

            s = jnp.einsum("hqd,hkd->hqk", qh, kh,
                           preferred_element_type=jnp.float32) * scale  # (nH,S,S)
            s = s + add_mask[b]
            s = s - jnp.max(s, axis=-1, keepdims=True)
            p = jnp.exp(s)
            p = p / jnp.sum(p, axis=-1, keepdims=True)          # exact softmax
            ctx = jnp.einsum("hqk,hkd->hqd", p, vh,
                             preferred_element_type=jnp.float32)        # (nH,S,dH)

            # batched per-head output projection, summed over heads
            proj = jnp.einsum("hsd,hdo->hso", ctx, o_w,
                              preferred_element_type=jnp.float32)       # (nH,S,H)
            attn_s = proj[0]
            for h in range(1, nH):
                attn_s = attn_s + proj[h]
            attn_rows.append(attn_s)                            # (S, H)

        attn = attn_rows[0] if Bp == 1 else jnp.concatenate(attn_rows, axis=0)
        attn = attn + o_b                                       # (Mb, H)

        x = _layernorm(x + attn, ln1_g, ln1_b, eps)

        # FFN: dense -> exact GELU -> dense, fused with residual + LN2.
        ffn = jnp.dot(x, fc1_w_ref[l],
                      preferred_element_type=jnp.float32) + fc1_b       # (Mb, I)
        ffn = _gelu_exact(ffn)
        ffn = jnp.dot(ffn, fc2_w_ref[l],
                      preferred_element_type=jnp.float32) + fc2_b       # (Mb, H)
        x = _layernorm(x + ffn, ln2_g, ln2_b, eps)

    # ---- pooler (dense + tanh on [CLS]) fused with classifier (+ sigmoid) ----
    if Bp == 1:
        cls_rows = x[0:1, :]                                    # (1, H)
    else:
        cls_rows = jnp.concatenate([x[b * S:b * S + 1, :] for b in range(Bp)],
                                   axis=0)                      # (Bp, H)
    pool_w = head_w_ref[:, :H]                                  # (H, H)
    cls_w = head_w_ref[:, LANE:]                                # (H, LANE), padded
    pool_b = sp(2 + ROWS_PER_LAYER * L, H)
    cls_b = sp(3 + ROWS_PER_LAYER * L, LANE)

    pooled = jnp.tanh(jnp.dot(cls_rows, pool_w,
                              preferred_element_type=jnp.float32) + pool_b)
    logits = jnp.dot(pooled, cls_w,
                     preferred_element_type=jnp.float32) + cls_b        # (Bp, LANE)
    out_ref[...] = jax.nn.sigmoid(logits)[:, None, :]           # lane-dense store


# ----------------------------------------------------------------------------
# Deterministic parameter init + packing of the kernel operands
# ----------------------------------------------------------------------------

def init_params(key, cfg):
    H, I, L = cfg["hidden"], cfg["intermediate"], cfg["num_layers"]
    C, nH = cfg["num_classes"], cfg["num_heads"]
    dH = H // nH

    keys = iter(jax.random.split(key, 256))

    def mat(shape):
        return 0.02 * jax.random.normal(next(keys), shape, dtype=jnp.float32)

    def vec(n):
        return 0.02 * jax.random.normal(next(keys), (n,), dtype=jnp.float32)

    raw = dict(
        word_emb=mat((cfg["vocab_size"], H)),
        pos_emb=mat((cfg["max_pos"], H)),
        type_emb=mat((cfg["type_vocab"], H)),
        emb_ln_g=1.0 + vec(H), emb_ln_b=vec(H),
        pooler_w=mat((H, H)), pooler_b=vec(H),
        cls_w=mat((H, C)), cls_b=vec(C),
        layers=[],
    )
    for _ in range(L):
        q_w, k_w, v_w = mat((H, H)), mat((H, H)), mat((H, H))
        raw["layers"].append(dict(
            qkv_w=jnp.concatenate([q_w, k_w, v_w], axis=1),     # (H, 3H)
            qkv_b=vec(3 * H),
            o_w=mat((H, H)), o_b=vec(H),
            ln1_g=1.0 + vec(H), ln1_b=vec(H),
            fc1_w=mat((H, I)), fc1_b=vec(I),
            fc2_w=mat((I, H)), fc2_b=vec(H),
            ln2_g=1.0 + vec(H), ln2_b=vec(H),
        ))

    # ---- pack the ~14 tiny vectors into one (4+8L, 128) array ----
    def row(v):
        v = v.reshape(1, -1)
        return jnp.pad(v, ((0, 0), (0, LANE - v.shape[1])))

    rows = [row(raw["emb_ln_g"]), row(raw["emb_ln_b"])]
    for lyr in raw["layers"]:
        rows += [row(lyr["qkv_b"]), row(lyr["o_b"]),
                 row(lyr["ln1_g"]), row(lyr["ln1_b"]),
                 row(lyr["fc1_b"]), row(lyr["fc2_b"]),
                 row(lyr["ln2_g"]), row(lyr["ln2_b"])]
    rows += [row(raw["pooler_b"]), row(raw["cls_b"])]
    small_pack = jnp.concatenate(rows, axis=0)                  # (4+8L, 128)

    # ---- stacked weight matrices (head-major attention out-proj) ----
    qkv_w = jnp.stack([lyr["qkv_w"] for lyr in raw["layers"]])              # (L,H,3H)
    o_w_heads = jnp.stack([lyr["o_w"].reshape(nH, dH, H)
                           for lyr in raw["layers"]])                       # (L,nH,dH,H)
    fc1_w = jnp.stack([lyr["fc1_w"] for lyr in raw["layers"]])              # (L,H,I)
    fc2_w = jnp.stack([lyr["fc2_w"] for lyr in raw["layers"]])              # (L,I,H)

    pool_pad = jnp.pad(raw["pooler_w"], ((0, 0), (0, LANE - H)))            # (H,128)
    cls_pad = jnp.pad(raw["cls_w"], ((0, 0), (0, LANE - C)))                # (H,128)
    head_w = jnp.concatenate([pool_pad, cls_pad], axis=1)                   # (H,256)

    return dict(
        raw=raw,
        word_emb=raw["word_emb"], pos_emb=raw["pos_emb"], type_emb=raw["type_emb"],
        small_pack=small_pack, qkv_w=qkv_w, o_w_heads=o_w_heads,
        fc1_w=fc1_w, fc2_w=fc2_w, head_w=head_w,
    )


# ----------------------------------------------------------------------------
# Grid-step selection: 1 step on single-core chips, one per TC on v7x
# ----------------------------------------------------------------------------

def _num_grid_steps(batch):
    try:
        kind = jax.devices()[0].device_kind.lower()
    except Exception:  # pragma: no cover - defensive
        kind = ""
    cores = 2 if "v7" in kind else 1
    steps = max(1, min(batch, cores))
    while batch % steps:
        steps -= 1
    return steps


# ----------------------------------------------------------------------------
# Forward pass: embedding gather in XLA glue, everything else in ONE kernel
# ----------------------------------------------------------------------------

def legalbert_multicls_forward(params, input_ids, attention_mask, cfg,
                               grid_steps=None):
    B, S = input_ids.shape
    H, I, L = cfg["hidden"], cfg["intermediate"], cfg["num_layers"]
    nH, C = cfg["num_heads"], cfg["num_classes"]
    dH = H // nH

    # --- BERT embeddings: gather + sum is cheap XLA glue ---
    we = jnp.take(params["word_emb"], input_ids, axis=0)            # (B, S, H)
    pe = params["pos_emb"][:S][None, :, :]
    te = params["type_emb"][0][None, None, :]                       # type ids == 0
    x2d = (we + pe + te).astype(jnp.float32).reshape(B * S, H)      # (B*S, H)

    mask = attention_mask.astype(jnp.float32).reshape(B, 1, S)      # raw 0/1 mask

    if grid_steps is None:
        grid_steps = _num_grid_steps(B)
    Bp = B // grid_steps            # sequences per grid step
    Mb = Bp * S                     # rows per grid step
    sp_rows = 4 + ROWS_PER_LAYER * L

    kernel = functools.partial(_fused_forward_kernel, eps=LN_EPS)

    out = pl.pallas_call(
        kernel,
        out_shape=jax.ShapeDtypeStruct((B, 1, LANE), jnp.float32),
        grid=(grid_steps,),
        in_specs=[
            pl.BlockSpec((Mb, H), lambda g: (g, 0)),                 # embeddings
            pl.BlockSpec((Bp, 1, S), lambda g: (g, 0, 0)),           # attention mask
            pl.BlockSpec((sp_rows, LANE), lambda g: (0, 0)),         # packed small params
            pl.BlockSpec((L, H, 3 * H), lambda g: (0, 0, 0)),        # fused QKV weights
            pl.BlockSpec((L, nH, dH, H), lambda g: (0, 0, 0, 0)),    # head-major W_o
            pl.BlockSpec((L, H, I), lambda g: (0, 0, 0)),            # FFN fc1
            pl.BlockSpec((L, I, H), lambda g: (0, 0, 0)),            # FFN fc2
            pl.BlockSpec((H, 2 * LANE), lambda g: (0, 0)),           # pooler | classifier
        ],
        out_specs=pl.BlockSpec((Bp, 1, LANE), lambda g: (g, 0, 0)),
        compiler_params=pltpu.CompilerParams(
            dimension_semantics=("parallel",)),                      # megacore on v7x
    )(
        x2d, mask,
        params["small_pack"],
        params["qkv_w"], params["o_w_heads"],
        params["fc1_w"], params["fc2_w"],
        params["head_w"],
    )
    return out[:, 0, :C]                                             # (B, 23)


# ----------------------------------------------------------------------------
# Pure-JAX reference (uses the RAW per-tensor params, so packing bugs show up)
# ----------------------------------------------------------------------------

def _reference_forward(params, input_ids, attention_mask, cfg):
    raw = params["raw"]
    B, S = input_ids.shape
    H, nH, C = cfg["hidden"], cfg["num_heads"], cfg["num_classes"]
    dH = H // nH

    def ln(v, g, b):
        mu = v.mean(-1, keepdims=True)
        var = ((v - mu) ** 2).mean(-1, keepdims=True)
        return (v - mu) / jnp.sqrt(var + LN_EPS) * g + b

    with jax.default_matmul_precision("float32"):
        x = jnp.take(raw["word_emb"], input_ids, axis=0)
        x = x + raw["pos_emb"][:S][None] + raw["type_emb"][0][None, None]
        x = ln(x, raw["emb_ln_g"], raw["emb_ln_b"])
        add_mask = (1.0 - attention_mask.astype(jnp.float32)) * MASK_NEG

        for lyr in raw["layers"]:
            qkv = x @ lyr["qkv_w"] + lyr["qkv_b"]
            q, k, v = jnp.split(qkv, 3, axis=-1)
            heads = lambda t: t.reshape(B, S, nH, dH).transpose(0, 2, 1, 3)
            qh, kh, vh = heads(q), heads(k), heads(v)
            s = jnp.einsum("bhqd,bhkd->bhqk", qh, kh) / math.sqrt(dH)
            s = s + add_mask[:, None, None, :]
            p = jax.nn.softmax(s, axis=-1)
            ctx = jnp.einsum("bhqk,bhkd->bhqd", p, vh)
            ctx = ctx.transpose(0, 2, 1, 3).reshape(B, S, H)
            attn = ctx @ lyr["o_w"] + lyr["o_b"]
            x = ln(x + attn, lyr["ln1_g"], lyr["ln1_b"])
            ffn = x @ lyr["fc1_w"] + lyr["fc1_b"]
            ffn = 0.5 * ffn * (1.0 + jax.scipy.special.erf(ffn / math.sqrt(2.0)))
            ffn = ffn @ lyr["fc2_w"] + lyr["fc2_b"]
            x = ln(x + ffn, lyr["ln2_g"], lyr["ln2_b"])

        pooled = jnp.tanh(x[:, 0] @ raw["pooler_w"] + raw["pooler_b"])
        logits = pooled @ raw["cls_w"] + raw["cls_b"]
        return jax.nn.sigmoid(logits)


# ----------------------------------------------------------------------------

if __name__ == "__main__":
    key = jax.random.PRNGKey(0)
    k_params, k_ids = jax.random.split(key)

    B, S = 2, 8
    params = init_params(k_params, CFG)

    input_ids = jax.random.randint(k_ids, (B, S), 0, CFG["vocab_size"],
                                   dtype=jnp.int32)
    # first sequence fully attended, second has 3 padding positions
    attention_mask = jnp.array(
        [[1, 1, 1, 1, 1, 1, 1, 1],
         [1, 1, 1, 1, 1, 0, 0, 0]], dtype=jnp.int32)

    fwd = jax.jit(functools.partial(legalbert_multicls_forward, cfg=CFG))
    preds = jax.block_until_ready(fwd(params, input_ids, attention_mask))

    assert preds.shape == (B, CFG["num_classes"])
    assert bool(jnp.all(jnp.isfinite(preds)))
    assert bool(jnp.all((preds >= 0.0) & (preds <= 1.0)))

    # exact softmax division + polynomial erf: deviation vs the f32 reference is
    # dominated by matmul rounding, well below 5e-3.
    ref = _reference_forward(params, input_ids, attention_mask, CFG)
    err = float(jnp.max(jnp.abs(preds - ref)))
    assert err < 5e-3, f"max abs err {err}"

    print("KERNEL_OK")
</pallas_src>

<mosaic_0001>
module attributes {stable_mosaic.version = 11 : i64} {
  func.func @_fused_forward_kernel(%arg0: i32, %arg1: memref<16x32xf32, #tpu.memory_space<vmem>>, %arg2: memref<2x1x8xf32, #tpu.memory_space<vmem>>, %arg3: memref<20x128xf32, #tpu.memory_space<vmem>>, %arg4: memref<2x32x96xf32, #tpu.memory_space<vmem>>, %arg5: memref<2x4x8x32xf32, #tpu.memory_space<vmem>>, %arg6: memref<2x32x64xf32, #tpu.memory_space<vmem>>, %arg7: memref<2x64x32xf32, #tpu.memory_space<vmem>>, %arg8: memref<32x256xf32, #tpu.memory_space<vmem>>, %arg9: memref<2x1x128xf32, #tpu.memory_space<vmem>>) attributes {dimension_semantics = [#tpu.dimension_semantics<parallel>], iteration_bounds = array<i64: 1>, scalar_prefetch = 0 : i64, scratch_operands = 0 : i64, tpu.core_type = #tpu.core_type<tc>, window_params = [{transform_indices = @transform_0, window_bounds = array<i64: 16, 32>}, {transform_indices = @transform_1, window_bounds = array<i64: 2, 1, 8>}, {pipeline_mode = #tpu.pipeline_mode<synchronous>, transform_indices = @transform_2, window_bounds = array<i64: 20, 128>}, {pipeline_mode = #tpu.pipeline_mode<synchronous>, transform_indices = @transform_3, window_bounds = array<i64: 2, 32, 96>}, {pipeline_mode = #tpu.pipeline_mode<synchronous>, transform_indices = @transform_4, window_bounds = array<i64: 2, 4, 8, 32>}, {pipeline_mode = #tpu.pipeline_mode<synchronous>, transform_indices = @transform_5, window_bounds = array<i64: 2, 32, 64>}, {pipeline_mode = #tpu.pipeline_mode<synchronous>, transform_indices = @transform_6, window_bounds = array<i64: 2, 64, 32>}, {pipeline_mode = #tpu.pipeline_mode<synchronous>, transform_indices = @transform_7, window_bounds = array<i64: 32, 256>}, {transform_indices = @transform_8, window_bounds = array<i64: 2, 1, 128>}]} {
    %c0 = arith.constant 0 : index
    %c0_0 = arith.constant 0 : index
    %0 = vector.load %arg1[%c0, %c0_0] : memref<16x32xf32, #tpu.memory_space<vmem>>, vector<16x32xf32>
    %c0_1 = arith.constant 0 : index
    %c0_2 = arith.constant 0 : index
    %1 = vector.load %arg3[%c0_1, %c0_2] : memref<20x128xf32, #tpu.memory_space<vmem>>, vector<1x32xf32>
    %c1 = arith.constant 1 : index
    %c0_3 = arith.constant 0 : index
    %2 = vector.load %arg3[%c1, %c0_3] : memref<20x128xf32, #tpu.memory_space<vmem>>, vector<1x32xf32>
    %cst = arith.constant dense<0.000000e+00> : vector<16xf32>
    %3 = vector.multi_reduction <add>, %0, %cst [1] : vector<16x32xf32> to vector<16xf32>
    %4 = vector.shape_cast %3 : vector<16xf32> to vector<16x1xf32>
    %cst_4 = arith.constant 3.200000e+01 : f32
    %5 = vector.broadcast %cst_4 : f32 to vector<16x1xf32>
    %6 = arith.divf %4, %5 : vector<16x1xf32>
    %7 = vector.broadcast %6 : vector<16x1xf32> to vector<16x32xf32>
    %8 = arith.subf %0, %7 : vector<16x32xf32>
    %9 = arith.mulf %8, %8 : vector<16x32xf32>
    %cst_5 = arith.constant dense<0.000000e+00> : vector<16xf32>
    %10 = vector.multi_reduction <add>, %9, %cst_5 [1] : vector<16x32xf32> to vector<16xf32>
    %11 = vector.shape_cast %10 : vector<16xf32> to vector<16x1xf32>
    %cst_6 = arith.constant 3.200000e+01 : f32
    %12 = vector.broadcast %cst_6 : f32 to vector<16x1xf32>
    %13 = arith.divf %11, %12 : vector<16x1xf32>
    %14 = vector.broadcast %6 : vector<16x1xf32> to vector<16x32xf32>
    %15 = arith.subf %0, %14 : vector<16x32xf32>
    %cst_7 = arith.constant 9.99999996E-13 : f32
    %16 = vector.broadcast %cst_7 : f32 to vector<16x1xf32>
    %17 = arith.addf %13, %16 : vector<16x1xf32>
    %18 = math.rsqrt %17 : vector<16x1xf32>
    %19 = vector.broadcast %18 : vector<16x1xf32> to vector<16x32xf32>
    %20 = arith.mulf %15, %19 : vector<16x32xf32>
    %21 = vector.broadcast %1 : vector<1x32xf32> to vector<16x32xf32>
    %22 = arith.mulf %20, %21 : vector<16x32xf32>
    %23 = vector.broadcast %2 : vector<1x32xf32> to vector<16x32xf32>
    %24 = arith.addf %22, %23 : vector<16x32xf32>
    %c0_8 = arith.constant 0 : index
    %c0_9 = arith.constant 0 : index
    %c0_10 = arith.constant 0 : index
    %25 = vector.load %arg2[%c0_8, %c0_9, %c0_10] : memref<2x1x8xf32, #tpu.memory_space<vmem>>, vector<2x1x8xf32>
    %cst_11 = arith.constant 1.000000e+00 : f32
    %26 = vector.broadcast %cst_11 : f32 to vector<2x1x8xf32>
    %27 = arith.subf %26, %25 : vector<2x1x8xf32>
    %cst_12 = arith.constant -1.000000e+04 : f32
    %28 = vector.broadcast %cst_12 : f32 to vector<2x1x8xf32>
    %29 = arith.mulf %27, %28 : vector<2x1x8xf32>
    %c2 = arith.constant 2 : index
    %c0_13 = arith.constant 0 : index
    %30 = vector.load %arg3[%c2, %c0_13] : memref<20x128xf32, #tpu.memory_space<vmem>>, vector<1x96xf32>
    %c3 = arith.constant 3 : index
    %c0_14 = arith.constant 0 : index
    %31 = vector.load %arg3[%c3, %c0_14] : memref<20x128xf32, #tpu.memory_space<vmem>>, vector<1x32xf32>
    %c4 = arith.constant 4 : index
    %c0_15 = arith.constant 0 : index
    %32 = vector.load %arg3[%c4, %c0_15] : memref<20x128xf32, #tpu.memory_space<vmem>>, vector<1x32xf32>
    %c5 = arith.constant 5 : index
    %c0_16 = arith.constant 0 : index
    %33 = vector.load %arg3[%c5, %c0_16] : memref<20x128xf32, #tpu.memory_space<vmem>>, vector<1x32xf32>
    %c6 = arith.constant 6 : index
    %c0_17 = arith.constant 0 : index
    %34 = vector.load %arg3[%c6, %c0_17] : memref<20x128xf32, #tpu.memory_space<vmem>>, vector<1x64xf32>
    %c7 = arith.constant 7 : index
    %c0_18 = arith.constant 0 : index
    %35 = vector.load %arg3[%c7, %c0_18] : memref<20x128xf32, #tpu.memory_space<vmem>>, vector<1x32xf32>
    %c8 = arith.constant 8 : index
    %c0_19 = arith.constant 0 : index
    %36 = vector.load %arg3[%c8, %c0_19] : memref<20x128xf32, #tpu.memory_space<vmem>>, vector<1x32xf32>
    %c9 = arith.constant 9 : index
    %c0_20 = arith.constant 0 : index
    %37 = vector.load %arg3[%c9, %c0_20] : memref<20x128xf32, #tpu.memory_space<vmem>>, vector<1x32xf32>
    %c0_21 = arith.constant 0 : index
    %c0_22 = arith.constant 0 : index
    %c0_23 = arith.constant 0 : index
    %38 = vector.load %arg4[%c0_21, %c0_22, %c0_23] : memref<2x32x96xf32, #tpu.memory_space<vmem>>, vector<1x32x96xf32>
    %39 = vector.shape_cast %38 : vector<1x32x96xf32> to vector<32x96xf32>
    %cst_24 = arith.constant dense<0.000000e+00> : vector<16x96xf32>
    %40 = tpu.matmul %24, %39, %cst_24 {dimension_numbers = #tpu.dot_dimension_numbers<[1], [0], [0], [1], [0, 0, 1, 1], [], []>} : vector<16x32xf32>, vector<32x96xf32>, vector<16x96xf32> -> vector<16x96xf32>
    %41 = vector.broadcast %30 : vector<1x96xf32> to vector<16x96xf32>
    %42 = arith.addf %40, %41 : vector<16x96xf32>
    %c0_25 = arith.constant 0 : index
    %c0_26 = arith.constant 0 : index
    %c0_27 = arith.constant 0 : index
    %c0_28 = arith.constant 0 : index
    %43 = vector.load %arg5[%c0_25, %c0_26, %c0_27, %c0_28] : memref<2x4x8x32xf32, #tpu.memory_space<vmem>>, vector<1x4x8x32xf32>
    %44 = vector.shape_cast %43 : vector<1x4x8x32xf32> to vector<4x8x32xf32>
    %45 = vector.extract_strided_slice %42 {offsets = [0, 0], sizes = [8, 96], strides = [1, 1]} : vector<16x96xf32> to vector<8x96xf32>
    %46 = vector.extract_strided_slice %45 {offsets = [0, 0], sizes = [8, 8], strides = [1, 1]} : vector<8x96xf32> to vector<8x8xf32>
    %47 = vector.shape_cast %46 : vector<8x8xf32> to vector<1x8x8xf32>
    %48 = vector.extract_strided_slice %45 {offsets = [0, 8], sizes = [8, 8], strides = [1, 1]} : vector<8x96xf32> to vector<8x8xf32>
    %49 = vector.shape_cast %48 : vector<8x8xf32> to vector<1x8x8xf32>
    %50 = vector.extract_strided_slice %45 {offsets = [0, 16], sizes = [8, 8], strides = [1, 1]} : vector<8x96xf32> to vector<8x8xf32>
    %51 = vector.shape_cast %50 : vector<8x8xf32> to vector<1x8x8xf32>
    %52 = vector.extract_strided_slice %45 {offsets = [0, 24], sizes = [8, 8], strides = [1, 1]} : vector<8x96xf32> to vector<8x8xf32>
    %53 = vector.shape_cast %52 : vector<8x8xf32> to vector<1x8x8xf32>
    %54 = tpu.concatenate %47, %49, %51, %53 in 0 : vector<1x8x8xf32>, vector<1x8x8xf32>, vector<1x8x8xf32>, vector<1x8x8xf32> -> vector<4x8x8xf32>
    %55 = vector.extract_strided_slice %45 {offsets = [0, 32], sizes = [8, 8], strides = [1, 1]} : vector<8x96xf32> to vector<8x8xf32>
    %56 = vector.shape_cast %55 : vector<8x8xf32> to vector<1x8x8xf32>
    %57 = vector.extract_strided_slice %45 {offsets = [0, 40], sizes = [8, 8], strides = [1, 1]} : vector<8x96xf32> to vector<8x8xf32>
    %58 = vector.shape_cast %57 : vector<8x8xf32> to vector<1x8x8xf32>
    %59 = vector.extract_strided_slice %45 {offsets = [0, 48], sizes = [8, 8], strides = [1, 1]} : vector<8x96xf32> to vector<8x8xf32>
    %60 = vector.shape_cast %59 : vector<8x8xf32> to vector<1x8x8xf32>
    %61 = vector.extract_strided_slice %45 {offsets = [0, 56], sizes = [8, 8], strides = [1, 1]} : vector<8x96xf32> to vector<8x8xf32>
    %62 = vector.shape_cast %61 : vector<8x8xf32> to vector<1x8x8xf32>
    %63 = tpu.concatenate %56, %58, %60, %62 in 0 : vector<1x8x8xf32>, vector<1x8x8xf32>, vector<1x8x8xf32>, vector<1x8x8xf32> -> vector<4x8x8xf32>
    %64 = vector.extract_strided_slice %45 {offsets = [0, 64], sizes = [8, 8], strides = [1, 1]} : vector<8x96xf32> to vector<8x8xf32>
    %65 = vector.shape_cast %64 : vector<8x8xf32> to vector<1x8x8xf32>
    %66 = vector.extract_strided_slice %45 {offsets = [0, 72], sizes = [8, 8], strides = [1, 1]} : vector<8x96xf32> to vector<8x8xf32>
    %67 = vector.shape_cast %66 : vector<8x8xf32> to vector<1x8x8xf32>
    %68 = vector.extract_strided_slice %45 {offsets = [0, 80], sizes = [8, 8], strides = [1, 1]} : vector<8x96xf32> to vector<8x8xf32>
    %69 = vector.shape_cast %68 : vector<8x8xf32> to vector<1x8x8xf32>
    %70 = vector.extract_strided_slice %45 {offsets = [0, 88], sizes = [8, 8], strides = [1, 1]} : vector<8x96xf32> to vector<8x8xf32>
    %71 = vector.shape_cast %70 : vector<8x8xf32> to vector<1x8x8xf32>
    %72 = tpu.concatenate %65, %67, %69, %71 in 0 : vector<1x8x8xf32>, vector<1x8x8xf32>, vector<1x8x8xf32>, vector<1x8x8xf32> -> vector<4x8x8xf32>
    "tpu.trace_start"() <{level = 10 : i32, message = "hqd,hkd->hqk"}> : () -> ()
    %cst_29 = arith.constant dense<0.000000e+00> : vector<4x8x8xf32>
    %73 = tpu.matmul %54, %63, %cst_29 {dimension_numbers = #tpu.dot_dimension_numbers<[2], [2], [1], [1], [0, 0, 0, 1, 1, 1], [0], [0]>} : vector<4x8x8xf32>, vector<4x8x8xf32>, vector<4x8x8xf32> -> vector<4x8x8xf32>
    "tpu.trace_stop"() : () -> ()
    %cst_30 = arith.constant 0.353553385 : f32
    %74 = vector.broadcast %cst_30 : f32 to vector<4x8x8xf32>
    %75 = arith.mulf %73, %74 : vector<4x8x8xf32>
    %76 = vector.extract_strided_slice %29 {offsets = [0, 0, 0], sizes = [1, 1, 8], strides = [1, 1, 1]} : vector<2x1x8xf32> to vector<1x1x8xf32>
    %77 = vector.shape_cast %76 : vector<1x1x8xf32> to vector<1x8xf32>
    %78 = vector.shape_cast %77 : vector<1x8xf32> to vector<1x1x8xf32>
    %79 = vector.broadcast %78 : vector<1x1x8xf32> to vector<4x8x8xf32>
    %80 = arith.addf %75, %79 : vector<4x8x8xf32>
    %cst_31 = arith.constant dense<0xFF800000> : vector<4x8xf32>
    %81 = vector.multi_reduction <maximumf>, %80, %cst_31 [2] : vector<4x8x8xf32> to vector<4x8xf32>
    %82 = vector.shape_cast %81 : vector<4x8xf32> to vector<4x8x1xf32>
    %83 = vector.broadcast %82 : vector<4x8x1xf32> to vector<4x8x8xf32>
    %84 = arith.subf %80, %83 : vector<4x8x8xf32>
    %85 = math.exp %84 : vector<4x8x8xf32>
    %cst_32 = arith.constant dense<0.000000e+00> : vector<4x8xf32>
    %86 = vector.multi_reduction <add>, %85, %cst_32 [2] : vector<4x8x8xf32> to vector<4x8xf32>
    %87 = vector.shape_cast %86 : vector<4x8xf32> to vector<4x8x1xf32>
    %88 = vector.broadcast %87 : vector<4x8x1xf32> to vector<4x8x8xf32>
    %89 = arith.divf %85, %88 : vector<4x8x8xf32>
    "tpu.trace_start"() <{level = 10 : i32, message = "hqk,hkd->hqd"}> : () -> ()
    %cst_33 = arith.constant dense<0.000000e+00> : vector<4x8x8xf32>
    %90 = tpu.matmul %89, %72, %cst_33 {dimension_numbers = #tpu.dot_dimension_numbers<[2], [1], [1], [2], [0, 0, 0, 1, 1, 2], [0], [0]>} : vector<4x8x8xf32>, vector<4x8x8xf32>, vector<4x8x8xf32> -> vector<4x8x8xf32>
    "tpu.trace_stop"() : () -> ()
    "tpu.trace_start"() <{level = 10 : i32, message = "hsd,hdo->hso"}> : () -> ()
    %cst_34 = arith.constant dense<0.000000e+00> : vector<4x8x32xf32>
    %91 = tpu.matmul %90, %44, %cst_34 {dimension_numbers = #tpu.dot_dimension_numbers<[2], [1], [1], [2], [0, 0, 0, 1, 1, 2], [0], [0]>} : vector<4x8x8xf32>, vector<4x8x32xf32>, vector<4x8x32xf32> -> vector<4x8x32xf32>
    "tpu.trace_stop"() : () -> ()
    %92 = vector.extract_strided_slice %91 {offsets = [0, 0, 0], sizes = [1, 8, 32], strides = [1, 1, 1]} : vector<4x8x32xf32> to vector<1x8x32xf32>
    %93 = vector.shape_cast %92 : vector<1x8x32xf32> to vector<8x32xf32>
    %94 = vector.extract_strided_slice %91 {offsets = [1, 0, 0], sizes = [1, 8, 32], strides = [1, 1, 1]} : vector<4x8x32xf32> to vector<1x8x32xf32>
    %95 = vector.shape_cast %94 : vector<1x8x32xf32> to vector<8x32xf32>
    %96 = arith.addf %93, %95 : vector<8x32xf32>
    %97 = vector.extract_strided_slice %91 {offsets = [2, 0, 0], sizes = [1, 8, 32], strides = [1, 1, 1]} : vector<4x8x32xf32> to vector<1x8x32xf32>
    %98 = vector.shape_cast %97 : vector<1x8x32xf32> to vector<8x32xf32>
    %99 = arith.addf %96, %98 : vector<8x32xf32>
    %100 = vector.extract_strided_slice %91 {offsets = [3, 0, 0], sizes = [1, 8, 32], strides = [1, 1, 1]} : vector<4x8x32xf32> to vector<1x8x32xf32>
    %101 = vector.shape_cast %100 : vector<1x8x32xf32> to vector<8x32xf32>
    %102 = arith.addf %99, %101 : vector<8x32xf32>
    %103 = vector.extract_strided_slice %42 {offsets = [8, 0], sizes = [8, 96], strides = [1, 1]} : vector<16x96xf32> to vector<8x96xf32>
    %104 = vector.extract_strided_slice %103 {offsets = [0, 0], sizes = [8, 8], strides = [1, 1]} : vector<8x96xf32> to vector<8x8xf32>
    %105 = vector.shape_cast %104 : vector<8x8xf32> to vector<1x8x8xf32>
    %106 = vector.extract_strided_slice %103 {offsets = [0, 8], sizes = [8, 8], strides = [1, 1]} : vector<8x96xf32> to vector<8x8xf32>
    %107 = vector.shape_cast %106 : vector<8x8xf32> to vector<1x8x8xf32>
    %108 = vector.extract_strided_slice %103 {offsets = [0, 16], sizes = [8, 8], strides = [1, 1]} : vector<8x96xf32> to vector<8x8xf32>
    %109 = vector.shape_cast %108 : vector<8x8xf32> to vector<1x8x8xf32>
    %110 = vector.extract_strided_slice %103 {offsets = [0, 24], sizes = [8, 8], strides = [1, 1]} : vector<8x96xf32> to vector<8x8xf32>
    %111 = vector.shape_cast %110 : vector<8x8xf32> to vector<1x8x8xf32>
    %112 = tpu.concatenate %105, %107, %109, %111 in 0 : vector<1x8x8xf32>, vector<1x8x8xf32>, vector<1x8x8xf32>, vector<1x8x8xf32> -> vector<4x8x8xf32>
    %113 = vector.extract_strided_slice %103 {offsets = [0, 32], sizes = [8, 8], strides = [1, 1]} : vector<8x96xf32> to vector<8x8xf32>
    %114 = vector.shape_cast %113 : vector<8x8xf32> to vector<1x8x8xf32>
    %115 = vector.extract_strided_slice %103 {offsets = [0, 40], sizes = [8, 8], strides = [1, 1]} : vector<8x96xf32> to vector<8x8xf32>
    %116 = vector.shape_cast %115 : vector<8x8xf32> to vector<1x8x8xf32>
    %117 = vector.extract_strided_slice %103 {offsets = [0, 48], sizes = [8, 8], strides = [1, 1]} : vector<8x96xf32> to vector<8x8xf32>
    %118 = vector.shape_cast %117 : vector<8x8xf32> to vector<1x8x8xf32>
    %119 = vector.extract_strided_slice %103 {offsets = [0, 56], sizes = [8, 8], strides = [1, 1]} : vector<8x96xf32> to vector<8x8xf32>
    %120 = vector.shape_cast %119 : vector<8x8xf32> to vector<1x8x8xf32>
    %121 = tpu.concatenate %114, %116, %118, %120 in 0 : vector<1x8x8xf32>, vector<1x8x8xf32>, vector<1x8x8xf32>, vector<1x8x8xf32> -> vector<4x8x8xf32>
    %122 = vector.extract_strided_slice %103 {offsets = [0, 64], sizes = [8, 8], strides = [1, 1]} : vector<8x96xf32> to vector<8x8xf32>
    %123 = vector.shape_cast %122 : vector<8x8xf32> to vector<1x8x8xf32>
    %124 = vector.extract_strided_slice %103 {offsets = [0, 72], sizes = [8, 8], strides = [1, 1]} : vector<8x96xf32> to vector<8x8xf32>
    %125 = vector.shape_cast %124 : vector<8x8xf32> to vector<1x8x8xf32>
    %126 = vector.extract_strided_slice %103 {offsets = [0, 80], sizes = [8, 8], strides = [1, 1]} : vector<8x96xf32> to vector<8x8xf32>
    %127 = vector.shape_cast %126 : vector<8x8xf32> to vector<1x8x8xf32>
    %128 = vector.extract_strided_slice %103 {offsets = [0, 88], sizes = [8, 8], strides = [1, 1]} : vector<8x96xf32> to vector<8x8xf32>
    %129 = vector.shape_cast %128 : vector<8x8xf32> to vector<1x8x8xf32>
    %130 = tpu.concatenate %123, %125, %127, %129 in 0 : vector<1x8x8xf32>, vector<1x8x8xf32>, vector<1x8x8xf32>, vector<1x8x8xf32> -> vector<4x8x8xf32>
    "tpu.trace_start"() <{level = 10 : i32, message = "hqd,hkd->hqk"}> : () -> ()
    %cst_35 = arith.constant dense<0.000000e+00> : vector<4x8x8xf32>
    %131 = tpu.matmul %112, %121, %cst_35 {dimension_numbers = #tpu.dot_dimension_numbers<[2], [2], [1], [1], [0, 0, 0, 1, 1, 1], [0], [0]>} : vector<4x8x8xf32>, vector<4x8x8xf32>, vector<4x8x8xf32> -> vector<4x8x8xf32>
    "tpu.trace_stop"() : () -> ()
    %cst_36 = arith.constant 0.353553385 : f32
    %132 = vector.broadcast %cst_36 : f32 to vector<4x8x8xf32>
    %133 = arith.mulf %131, %132 : vector<4x8x8xf32>
    %134 = vector.extract_strided_slice %29 {offsets = [1, 0, 0], sizes = [1, 1, 8], strides = [1, 1, 1]} : vector<2x1x8xf32> to vector<1x1x8xf32>
    %135 = vector.shape_cast %134 : vector<1x1x8xf32> to vector<1x8xf32>
    %136 = vector.shape_cast %135 : vector<1x8xf32> to vector<1x1x8xf32>
    %137 = vector.broadcast %136 : vector<1x1x8xf32> to vector<4x8x8xf32>
    %138 = arith.addf %133, %137 : vector<4x8x8xf32>
    %cst_37 = arith.constant dense<0xFF800000> : vector<4x8xf32>
    %139 = vector.multi_reduction <maximumf>, %138, %cst_37 [2] : vector<4x8x8xf32> to vector<4x8xf32>
    %140 = vector.shape_cast %139 : vector<4x8xf32> to vector<4x8x1xf32>
    %141 = vector.broadcast %140 : vector<4x8x1xf32> to vector<4x8x8xf32>
    %142 = arith.subf %138, %141 : vector<4x8x8xf32>
    %143 = math.exp %142 : vector<4x8x8xf32>
    %cst_38 = arith.constant dense<0.000000e+00> : vector<4x8xf32>
    %144 = vector.multi_reduction <add>, %143, %cst_38 [2] : vector<4x8x8xf32> to vector<4x8xf32>
    %145 = vector.shape_cast %144 : vector<4x8xf32> to vector<4x8x1xf32>
    %146 = vector.broadcast %145 : vector<4x8x1xf32> to vector<4x8x8xf32>
    %147 = arith.divf %143, %146 : vector<4x8x8xf32>
    "tpu.trace_start"() <{level = 10 : i32, message = "hqk,hkd->hqd"}> : () -> ()
    %cst_39 = arith.constant dense<0.000000e+00> : vector<4x8x8xf32>
    %148 = tpu.matmul %147, %130, %cst_39 {dimension_numbers = #tpu.dot_dimension_numbers<[2], [1], [1], [2], [0, 0, 0, 1, 1, 2], [0], [0]>} : vector<4x8x8xf32>, vector<4x8x8xf32>, vector<4x8x8xf32> -> vector<4x8x8xf32>
    "tpu.trace_stop"() : () -> ()
    "tpu.trace_start"() <{level = 10 : i32, message = "hsd,hdo->hso"}> : () -> ()
    %cst_40 = arith.constant dense<0.000000e+00> : vector<4x8x32xf32>
    %149 = tpu.matmul %148, %44, %cst_40 {dimension_numbers = #tpu.dot_dimension_numbers<[2], [1], [1], [2], [0, 0, 0, 1, 1, 2], [0], [0]>} : vector<4x8x8xf32>, vector<4x8x32xf32>, vector<4x8x32xf32> -> vector<4x8x32xf32>
    "tpu.trace_stop"() : () -> ()
    %150 = vector.extract_strided_slice %149 {offsets = [0, 0, 0], sizes = [1, 8, 32], strides = [1, 1, 1]} : vector<4x8x32xf32> to vector<1x8x32xf32>
    %151 = vector.shape_cast %150 : vector<1x8x32xf32> to vector<8x32xf32>
    %152 = vector.extract_strided_slice %149 {offsets = [1, 0, 0], sizes = [1, 8, 32], strides = [1, 1, 1]} : vector<4x8x32xf32> to vector<1x8x32xf32>
    %153 = vector.shape_cast %152 : vector<1x8x32xf32> to vector<8x32xf32>
    %154 = arith.addf %151, %153 : vector<8x32xf32>
    %155 = vector.extract_strided_slice %149 {offsets = [2, 0, 0], sizes = [1, 8, 32], strides = [1, 1, 1]} : vector<4x8x32xf32> to vector<1x8x32xf32>
    %156 = vector.shape_cast %155 : vector<1x8x32xf32> to vector<8x32xf32>
    %157 = arith.addf %154, %156 : vector<8x32xf32>
    %158 = vector.extract_strided_slice %149 {offsets = [3, 0, 0], sizes = [1, 8, 32], strides = [1, 1, 1]} : vector<4x8x32xf32> to vector<1x8x32xf32>
    %159 = vector.shape_cast %158 : vector<1x8x32xf32> to vector<8x32xf32>
    %160 = arith.addf %157, %159 : vector<8x32xf32>
    %161 = tpu.concatenate %102, %160 in 0 : vector<8x32xf32>, vector<8x32xf32> -> vector<16x32xf32>
    %162 = vector.broadcast %31 : vector<1x32xf32> to vector<16x32xf32>
    %163 = arith.addf %161, %162 : vector<16x32xf32>
    %164 = arith.addf %24, %163 : vector<16x32xf32>
    %cst_41 = arith.constant dense<0.000000e+00> : vector<16xf32>
    %165 = vector.multi_reduction <add>, %164, %cst_41 [1] : vector<16x32xf32> to vector<16xf32>
    %166 = vector.shape_cast %165 : vector<16xf32> to vector<16x1xf32>
    %cst_42 = arith.constant 3.200000e+01 : f32
    %167 = vector.broadcast %cst_42 : f32 to vector<16x1xf32>
    %168 = arith.divf %166, %167 : vector<16x1xf32>
    %169 = vector.broadcast %168 : vector<16x1xf32> to vector<16x32xf32>
    %170 = arith.subf %164, %169 : vector<16x32xf32>
    %171 = arith.mulf %170, %170 : vector<16x32xf32>
    %cst_43 = arith.constant dense<0.000000e+00> : vector<16xf32>
    %172 = vector.multi_reduction <add>, %171, %cst_43 [1] : vector<16x32xf32> to vector<16xf32>
    %173 = vector.shape_cast %172 : vector<16xf32> to vector<16x1xf32>
    %cst_44 = arith.constant 3.200000e+01 : f32
    %174 = vector.broadcast %cst_44 : f32 to vector<16x1xf32>
    %175 = arith.divf %173, %174 : vector<16x1xf32>
    %176 = vector.broadcast %168 : vector<16x1xf32> to vector<16x32xf32>
    %177 = arith.subf %164, %176 : vector<16x32xf32>
    %cst_45 = arith.constant 9.99999996E-13 : f32
    %178 = vector.broadcast %cst_45 : f32 to vector<16x1xf32>
    %179 = arith.addf %175, %178 : vector<16x1xf32>
    %180 = math.rsqrt %179 : vector<16x1xf32>
    %181 = vector.broadcast %180 : vector<16x1xf32> to vector<16x32xf32>
    %182 = arith.mulf %177, %181 : vector<16x32xf32>
    %183 = vector.broadcast %32 : vector<1x32xf32> to vector<16x32xf32>
    %184 = arith.mulf %182, %183 : vector<16x32xf32>
    %185 = vector.broadcast %33 : vector<1x32xf32> to vector<16x32xf32>
    %186 = arith.addf %184, %185 : vector<16x32xf32>
    %c0_46 = arith.constant 0 : index
    %c0_47 = arith.constant 0 : index
    %c0_48 = arith.constant 0 : index
    %187 = vector.load %arg6[%c0_46, %c0_47, %c0_48] : memref<2x32x64xf32, #tpu.memory_space<vmem>>, vector<1x32x64xf32>
    %188 = vector.shape_cast %187 : vector<1x32x64xf32> to vector<32x64xf32>
    %cst_49 = arith.constant dense<0.000000e+00> : vector<16x64xf32>
    %189 = tpu.matmul %186, %188, %cst_49 {dimension_numbers = #tpu.dot_dimension_numbers<[1], [0], [0], [1], [0, 0, 1, 1], [], []>} : vector<16x32xf32>, vector<32x64xf32>, vector<16x64xf32> -> vector<16x64xf32>
    %190 = vector.broadcast %34 : vector<1x64xf32> to vector<16x64xf32>
    %191 = arith.addf %189, %190 : vector<16x64xf32>
    %cst_50 = arith.constant 5.000000e-01 : f32
    %192 = vector.broadcast %cst_50 : f32 to vector<16x64xf32>
    %193 = arith.mulf %192, %191 : vector<16x64xf32>
    %cst_51 = arith.constant 0.707106769 : f32
    %194 = vector.broadcast %cst_51 : f32 to vector<16x64xf32>
    %195 = arith.mulf %191, %194 : vector<16x64xf32>
    %cst_52 = arith.constant 0.000000e+00 : f32
    %196 = vector.broadcast %cst_52 : f32 to vector<16x64xf32>
    %197 = arith.cmpf oge, %195, %196 : vector<16x64xf32>
    %cst_53 = arith.constant 1.000000e+00 : f32
    %cst_54 = arith.constant -1.000000e+00 : f32
    %198 = vector.broadcast %cst_53 : f32 to vector<16x64xf32>
    %199 = vector.broadcast %cst_54 : f32 to vector<16x64xf32>
    %200 = arith.select %197, %198, %199 : vector<16x64xi1>, vector<16x64xf32>
    %201 = math.absf %195 : vector<16x64xf32>
    %cst_55 = arith.constant 0.327591091 : f32
    %202 = vector.broadcast %cst_55 : f32 to vector<16x64xf32>
    %203 = arith.mulf %202, %201 : vector<16x64xf32>
    %cst_56 = arith.constant 1.000000e+00 : f32
    %204 = vector.broadcast %cst_56 : f32 to vector<16x64xf32>
    %205 = arith.addf %204, %203 : vector<16x64xf32>
    %cst_57 = arith.constant 1.000000e+00 : f32
    %206 = vector.broadcast %cst_57 : f32 to vector<16x64xf32>
    %207 = arith.divf %206, %205 : vector<16x64xf32>
    %cst_58 = arith.constant 1.06140542 : f32
    %208 = vector.broadcast %cst_58 : f32 to vector<16x64xf32>
    %209 = arith.mulf %208, %207 : vector<16x64xf32>
    %cst_59 = arith.constant -1.45315206 : f32
    %210 = vector.broadcast %cst_59 : f32 to vector<16x64xf32>
    %211 = arith.addf %209, %210 : vector<16x64xf32>
    %212 = arith.mulf %211, %207 : vector<16x64xf32>
    %cst_60 = arith.constant 1.42141378 : f32
    %213 = vector.broadcast %cst_60 : f32 to vector<16x64xf32>
    %214 = arith.addf %212, %213 : vector<16x64xf32>
    %215 = arith.mulf %214, %207 : vector<16x64xf32>
    %cst_61 = arith.constant -0.284496725 : f32
    %216 = vector.broadcast %cst_61 : f32 to vector<16x64xf32>
    %217 = arith.addf %215, %216 : vector<16x64xf32>
    %218 = arith.mulf %217, %207 : vector<16x64xf32>
    %cst_62 = arith.constant 0.254829586 : f32
    %219 = vector.broadcast %cst_62 : f32 to vector<16x64xf32>
    %220 = arith.addf %218, %219 : vector<16x64xf32>
    %221 = arith.mulf %220, %207 : vector<16x64xf32>
    %cst_63 = arith.constant 0.000000e+00 : f32
    %222 = vector.broadcast %cst_63 : f32 to vector<16x64xf32>
    %223 = arith.subf %222, %201 : vector<16x64xf32>
    %224 = arith.mulf %223, %201 : vector<16x64xf32>
    %225 = math.exp %224 : vector<16x64xf32>
    %226 = arith.mulf %221, %225 : vector<16x64xf32>
    %cst_64 = arith.constant 1.000000e+00 : f32
    %227 = vector.broadcast %cst_64 : f32 to vector<16x64xf32>
    %228 = arith.subf %227, %226 : vector<16x64xf32>
    %229 = arith.mulf %200, %228 : vector<16x64xf32>
    %cst_65 = arith.constant 1.000000e+00 : f32
    %230 = vector.broadcast %cst_65 : f32 to vector<16x64xf32>
    %231 = arith.addf %230, %229 : vector<16x64xf32>
    %232 = arith.mulf %193, %231 : vector<16x64xf32>
    %c0_66 = arith.constant 0 : index
    %c0_67 = arith.constant 0 : index
    %c0_68 = arith.constant 0 : index
    %233 = vector.load %arg7[%c0_66, %c0_67, %c0_68] : memref<2x64x32xf32, #tpu.memory_space<vmem>>, vector<1x64x32xf32>
    %234 = vector.shape_cast %233 : vector<1x64x32xf32> to vector<64x32xf32>
    %cst_69 = arith.constant dense<0.000000e+00> : vector<16x32xf32>
    %235 = tpu.matmul %232, %234, %cst_69 {dimension_numbers = #tpu.dot_dimension_numbers<[1], [0], [0], [1], [0, 0, 1, 1], [], []>} : vector<16x64xf32>, vector<64x32xf32>, vector<16x32xf32> -> vector<16x32xf32>
    %236 = vector.broadcast %35 : vector<1x32xf32> to vector<16x32xf32>
    %237 = arith.addf %235, %236 : vector<16x32xf32>
    %238 = arith.addf %186, %237 : vector<16x32xf32>
    %cst_70 = arith.constant dense<0.000000e+00> : vector<16xf32>
    %239 = vector.multi_reduction <add>, %238, %cst_70 [1] : vector<16x32xf32> to vector<16xf32>
    %240 = vector.shape_cast %239 : vector<16xf32> to vector<16x1xf32>
    %cst_71 = arith.constant 3.200000e+01 : f32
    %241 = vector.broadcast %cst_71 : f32 to vector<16x1xf32>
    %242 = arith.divf %240, %241 : vector<16x1xf32>
    %243 = vector.broadcast %242 : vector<16x1xf32> to vector<16x32xf32>
    %244 = arith.subf %238, %243 : vector<16x32xf32>
    %245 = arith.mulf %244, %244 : vector<16x32xf32>
    %cst_72 = arith.constant dense<0.000000e+00> : vector<16xf32>
    %246 = vector.multi_reduction <add>, %245, %cst_72 [1] : vector<16x32xf32> to vector<16xf32>
    %247 = vector.shape_cast %246 : vector<16xf32> to vector<16x1xf32>
    %cst_73 = arith.constant 3.200000e+01 : f32
    %248 = vector.broadcast %cst_73 : f32 to vector<16x1xf32>
    %249 = arith.divf %247, %248 : vector<16x1xf32>
    %250 = vector.broadcast %242 : vector<16x1xf32> to vector<16x32xf32>
    %251 = arith.subf %238, %250 : vector<16x32xf32>
    %cst_74 = arith.constant 9.99999996E-13 : f32
    %252 = vector.broadcast %cst_74 : f32 to vector<16x1xf32>
    %253 = arith.addf %249, %252 : vector<16x1xf32>
    %254 = math.rsqrt %253 : vector<16x1xf32>
    %255 = vector.broadcast %254 : vector<16x1xf32> to vector<16x32xf32>
    %256 = arith.mulf %251, %255 : vector<16x32xf32>
    %257 = vector.broadcast %36 : vector<1x32xf32> to vector<16x32xf32>
    %258 = arith.mulf %256, %257 : vector<16x32xf32>
    %259 = vector.broadcast %37 : vector<1x32xf32> to vector<16x32xf32>
    %260 = arith.addf %258, %259 : vector<16x32xf32>
    %c10 = arith.constant 10 : index
    %c0_75 = arith.constant 0 : index
    %261 = vector.load %arg3[%c10, %c0_75] : memref<20x128xf32, #tpu.memory_space<vmem>>, vector<1x96xf32>
    %c11 = arith.constant 11 : index
    %c0_76 = arith.constant 0 : index
    %262 = vector.load %arg3[%c11, %c0_76] : memref<20x128xf32, #tpu.memory_space<vmem>>, vector<1x32xf32>
    %c12 = arith.constant 12 : index
    %c0_77 = arith.constant 0 : index
    %263 = vector.load %arg3[%c12, %c0_77] : memref<20x128xf32, #tpu.memory_space<vmem>>, vector<1x32xf32>
    %c13 = arith.constant 13 : index
    %c0_78 = arith.constant 0 : index
    %264 = vector.load %arg3[%c13, %c0_78] : memref<20x128xf32, #tpu.memory_space<vmem>>, vector<1x32xf32>
    %c14 = arith.constant 14 : index
    %c0_79 = arith.constant 0 : index
    %265 = vector.load %arg3[%c14, %c0_79] : memref<20x128xf32, #tpu.memory_space<vmem>>, vector<1x64xf32>
    %c15 = arith.constant 15 : index
    %c0_80 = arith.constant 0 : index
    %266 = vector.load %arg3[%c15, %c0_80] : memref<20x128xf32, #tpu.memory_space<vmem>>, vector<1x32xf32>
    %c16 = arith.constant 16 : index
    %c0_81 = arith.constant 0 : index
    %267 = vector.load %arg3[%c16, %c0_81] : memref<20x128xf32, #tpu.memory_space<vmem>>, vector<1x32xf32>
    %c17 = arith.constant 17 : index
    %c0_82 = arith.constant 0 : index
    %268 = vector.load %arg3[%c17, %c0_82] : memref<20x128xf32, #tpu.memory_space<vmem>>, vector<1x32xf32>
    %c1_83 = arith.constant 1 : index
    %c0_84 = arith.constant 0 : index
    %c0_85 = arith.constant 0 : index
    %269 = vector.load %arg4[%c1_83, %c0_84, %c0_85] : memref<2x32x96xf32, #tpu.memory_space<vmem>>, vector<1x32x96xf32>
    %270 = vector.shape_cast %269 : vector<1x32x96xf32> to vector<32x96xf32>
    %cst_86 = arith.constant dense<0.000000e+00> : vector<16x96xf32>
    %271 = tpu.matmul %260, %270, %cst_86 {dimension_numbers = #tpu.dot_dimension_numbers<[1], [0], [0], [1], [0, 0, 1, 1], [], []>} : vector<16x32xf32>, vector<32x96xf32>, vector<16x96xf32> -> vector<16x96xf32>
    %272 = vector.broadcast %261 : vector<1x96xf32> to vector<16x96xf32>
    %273 = arith.addf %271, %272 : vector<16x96xf32>
    %c1_87 = arith.constant 1 : index
    %c0_88 = arith.constant 0 : index
    %c0_89 = arith.constant 0 : index
    %c0_90 = arith.constant 0 : index
    %274 = vector.load %arg5[%c1_87, %c0_88, %c0_89, %c0_90] : memref<2x4x8x32xf32, #tpu.memory_space<vmem>>, vector<1x4x8x32xf32>
    %275 = vector.shape_cast %274 : vector<1x4x8x32xf32> to vector<4x8x32xf32>
    %276 = vector.extract_strided_slice %273 {offsets = [0, 0], sizes = [8, 96], strides = [1, 1]} : vector<16x96xf32> to vector<8x96xf32>
    %277 = vector.extract_strided_slice %276 {offsets = [0, 0], sizes = [8, 8], strides = [1, 1]} : vector<8x96xf32> to vector<8x8xf32>
    %278 = vector.shape_cast %277 : vector<8x8xf32> to vector<1x8x8xf32>
    %279 = vector.extract_strided_slice %276 {offsets = [0, 8], sizes = [8, 8], strides = [1, 1]} : vector<8x96xf32> to vector<8x8xf32>
    %280 = vector.shape_cast %279 : vector<8x8xf32> to vector<1x8x8xf32>
    %281 = vector.extract_strided_slice %276 {offsets = [0, 16], sizes = [8, 8], strides = [1, 1]} : vector<8x96xf32> to vector<8x8xf32>
    %282 = vector.shape_cast %281 : vector<8x8xf32> to vector<1x8x8xf32>
    %283 = vector.extract_strided_slice %276 {offsets = [0, 24], sizes = [8, 8], strides = [1, 1]} : vector<8x96xf32> to vector<8x8xf32>
    %284 = vector.shape_cast %283 : vector<8x8xf32> to vector<1x8x8xf32>
    %285 = tpu.concatenate %278, %280, %282, %284 in 0 : vector<1x8x8xf32>, vector<1x8x8xf32>, vector<1x8x8xf32>, vector<1x8x8xf32> -> vector<4x8x8xf32>
    %286 = vector.extract_strided_slice %276 {offsets = [0, 32], sizes = [8, 8], strides = [1, 1]} : vector<8x96xf32> to vector<8x8xf32>
    %287 = vector.shape_cast %286 : vector<8x8xf32> to vector<1x8x8xf32>
    %288 = vector.extract_strided_slice %276 {offsets = [0, 40], sizes = [8, 8], strides = [1, 1]} : vector<8x96xf32> to vector<8x8xf32>
    %289 = vector.shape_cast %288 : vector<8x8xf32> to vector<1x8x8xf32>
    %290 = vector.extract_strided_slice %276 {offsets = [0, 48], sizes = [8, 8], strides = [1, 1]} : vector<8x96xf32> to vector<8x8xf32>
    %291 = vector.shape_cast %290 : vector<8x8xf32> to vector<1x8x8xf32>
    %292 = vector.extract_strided_slice %276 {offsets = [0, 56], sizes = [8, 8], strides = [1, 1]} : vector<8x96xf32> to vector<8x8xf32>
    %293 = vector.shape_cast %292 : vector<8x8xf32> to vector<1x8x8xf32>
    %294 = tpu.concatenate %287, %289, %291, %293 in 0 : vector<1x8x8xf32>, vector<1x8x8xf32>, vector<1x8x8xf32>, vector<1x8x8xf32> -> vector<4x8x8xf32>
    %295 = vector.extract_strided_slice %276 {offsets = [0, 64], sizes = [8, 8], strides = [1, 1]} : vector<8x96xf32> to vector<8x8xf32>
    %296 = vector.shape_cast %295 : vector<8x8xf32> to vector<1x8x8xf32>
    %297 = vector.extract_strided_slice %276 {offsets = [0, 72], sizes = [8, 8], strides = [1, 1]} : vector<8x96xf32> to vector<8x8xf32>
    %298 = vector.shape_cast %297 : vector<8x8xf32> to vector<1x8x8xf32>
    %299 = vector.extract_strided_slice %276 {offsets = [0, 80], sizes = [8, 8], strides = [1, 1]} : vector<8x96xf32> to vector<8x8xf32>
    %300 = vector.shape_cast %299 : vector<8x8xf32> to vector<1x8x8xf32>
    %301 = vector.extract_strided_slice %276 {offsets = [0, 88], sizes = [8, 8], strides = [1, 1]} : vector<8x96xf32> to vector<8x8xf32>
    %302 = vector.shape_cast %301 : vector<8x8xf32> to vector<1x8x8xf32>
    %303 = tpu.concatenate %296, %298, %300, %302 in 0 : vector<1x8x8xf32>, vector<1x8x8xf32>, vector<1x8x8xf32>, vector<1x8x8xf32> -> vector<4x8x8xf32>
    "tpu.trace_start"() <{level = 10 : i32, message = "hqd,hkd->hqk"}> : () -> ()
    %cst_91 = arith.constant dense<0.000000e+00> : vector<4x8x8xf32>
    %304 = tpu.matmul %285, %294, %cst_91 {dimension_numbers = #tpu.dot_dimension_numbers<[2], [2], [1], [1], [0, 0, 0, 1, 1, 1], [0], [0]>} : vector<4x8x8xf32>, vector<4x8x8xf32>, vector<4x8x8xf32> -> vector<4x8x8xf32>
    "tpu.trace_stop"() : () -> ()
    %cst_92 = arith.constant 0.353553385 : f32
    %305 = vector.broadcast %cst_92 : f32 to vector<4x8x8xf32>
    %306 = arith.mulf %304, %305 : vector<4x8x8xf32>
    %307 = vector.extract_strided_slice %29 {offsets = [0, 0, 0], sizes = [1, 1, 8], strides = [1, 1, 1]} : vector<2x1x8xf32> to vector<1x1x8xf32>
    %308 = vector.shape_cast %307 : vector<1x1x8xf32> to vector<1x8xf32>
    %309 = vector.shape_cast %308 : vector<1x8xf32> to vector<1x1x8xf32>
    %310 = vector.broadcast %309 : vector<1x1x8xf32> to vector<4x8x8xf32>
    %311 = arith.addf %306, %310 : vector<4x8x8xf32>
    %cst_93 = arith.constant dense<0xFF800000> : vector<4x8xf32>
    %312 = vector.multi_reduction <maximumf>, %311, %cst_93 [2] : vector<4x8x8xf32> to vector<4x8xf32>
    %313 = vector.shape_cast %312 : vector<4x8xf32> to vector<4x8x1xf32>
    %314 = vector.broadcast %313 : vector<4x8x1xf32> to vector<4x8x8xf32>
    %315 = arith.subf %311, %314 : vector<4x8x8xf32>
    %316 = math.exp %315 : vector<4x8x8xf32>
    %cst_94 = arith.constant dense<0.000000e+00> : vector<4x8xf32>
    %317 = vector.multi_reduction <add>, %316, %cst_94 [2] : vector<4x8x8xf32> to vector<4x8xf32>
    %318 = vector.shape_cast %317 : vector<4x8xf32> to vector<4x8x1xf32>
    %319 = vector.broadcast %318 : vector<4x8x1xf32> to vector<4x8x8xf32>
    %320 = arith.divf %316, %319 : vector<4x8x8xf32>
    "tpu.trace_start"() <{level = 10 : i32, message = "hqk,hkd->hqd"}> : () -> ()
    %cst_95 = arith.constant dense<0.000000e+00> : vector<4x8x8xf32>
    %321 = tpu.matmul %320, %303, %cst_95 {dimension_numbers = #tpu.dot_dimension_numbers<[2], [1], [1], [2], [0, 0, 0, 1, 1, 2], [0], [0]>} : vector<4x8x8xf32>, vector<4x8x8xf32>, vector<4x8x8xf32> -> vector<4x8x8xf32>
    "tpu.trace_stop"() : () -> ()
    "tpu.trace_start"() <{level = 10 : i32, message = "hsd,hdo->hso"}> : () -> ()
    %cst_96 = arith.constant dense<0.000000e+00> : vector<4x8x32xf32>
    %322 = tpu.matmul %321, %275, %cst_96 {dimension_numbers = #tpu.dot_dimension_numbers<[2], [1], [1], [2], [0, 0, 0, 1, 1, 2], [0], [0]>} : vector<4x8x8xf32>, vector<4x8x32xf32>, vector<4x8x32xf32> -> vector<4x8x32xf32>
    "tpu.trace_stop"() : () -> ()
    %323 = vector.extract_strided_slice %322 {offsets = [0, 0, 0], sizes = [1, 8, 32], strides = [1, 1, 1]} : vector<4x8x32xf32> to vector<1x8x32xf32>
    %324 = vector.shape_cast %323 : vector<1x8x32xf32> to vector<8x32xf32>
    %325 = vector.extract_strided_slice %322 {offsets = [1, 0, 0], sizes = [1, 8, 32], strides = [1, 1, 1]} : vector<4x8x32xf32> to vector<1x8x32xf32>
    %326 = vector.shape_cast %325 : vector<1x8x32xf32> to vector<8x32xf32>
    %327 = arith.addf %324, %326 : vector<8x32xf32>
    %328 = vector.extract_strided_slice %322 {offsets = [2, 0, 0], sizes = [1, 8, 32], strides = [1, 1, 1]} : vector<4x8x32xf32> to vector<1x8x32xf32>
    %329 = vector.shape_cast %328 : vector<1x8x32xf32> to vector<8x32xf32>
    %330 = arith.addf %327, %329 : vector<8x32xf32>
    %331 = vector.extract_strided_slice %322 {offsets = [3, 0, 0], sizes = [1, 8, 32], strides = [1, 1, 1]} : vector<4x8x32xf32> to vector<1x8x32xf32>
    %332 = vector.shape_cast %331 : vector<1x8x32xf32> to vector<8x32xf32>
    %333 = arith.addf %330, %332 : vector<8x32xf32>
    %334 = vector.extract_strided_slice %273 {offsets = [8, 0], sizes = [8, 96], strides = [1, 1]} : vector<16x96xf32> to vector<8x96xf32>
    %335 = vector.extract_strided_slice %334 {offsets = [0, 0], sizes = [8, 8], strides = [1, 1]} : vector<8x96xf32> to vector<8x8xf32>
    %336 = vector.shape_cast %335 : vector<8x8xf32> to vector<1x8x8xf32>
    %337 = vector.extract_strided_slice %334 {offsets = [0, 8], sizes = [8, 8], strides = [1, 1]} : vector<8x96xf32> to vector<8x8xf32>
    %338 = vector.shape_cast %337 : vector<8x8xf32> to vector<1x8x8xf32>
    %339 = vector.extract_strided_slice %334 {offsets = [0, 16], sizes = [8, 8], strides = [1, 1]} : vector<8x96xf32> to vector<8x8xf32>
    %340 = vector.shape_cast %339 : vector<8x8xf32> to vector<1x8x8xf32>
    %341 = vector.extract_strided_slice %334 {offsets = [0, 24], sizes = [8, 8], strides = [1, 1]} : vector<8x96xf32> to vector<8x8xf32>
    %342 = vector.shape_cast %341 : vector<8x8xf32> to vector<1x8x8xf32>
    %343 = tpu.concatenate %336, %338, %340, %342 in 0 : vector<1x8x8xf32>, vector<1x8x8xf32>, vector<1x8x8xf32>, vector<1x8x8xf32> -> vector<4x8x8xf32>
    %344 = vector.extract_strided_slice %334 {offsets = [0, 32], sizes = [8, 8], strides = [1, 1]} : vector<8x96xf32> to vector<8x8xf32>
    %345 = vector.shape_cast %344 : vector<8x8xf32> to vector<1x8x8xf32>
    %346 = vector.extract_strided_slice %334 {offsets = [0, 40], sizes = [8, 8], strides = [1, 1]} : vector<8x96xf32> to vector<8x8xf32>
    %347 = vector.shape_cast %346 : vector<8x8xf32> to vector<1x8x8xf32>
    %348 = vector.extract_strided_slice %334 {offsets = [0, 48], sizes = [8, 8], strides = [1, 1]} : vector<8x96xf32> to vector<8x8xf32>
    %349 = vector.shape_cast %348 : vector<8x8xf32> to vector<1x8x8xf32>
    %350 = vector.extract_strided_slice %334 {offsets = [0, 56], sizes = [8, 8], strides = [1, 1]} : vector<8x96xf32> to vector<8x8xf32>
    %351 = vector.shape_cast %350 : vector<8x8xf32> to vector<1x8x8xf32>
    %352 = tpu.concatenate %345, %347, %349, %351 in 0 : vector<1x8x8xf32>, vector<1x8x8xf32>, vector<1x8x8xf32>, vector<1x8x8xf32> -> vector<4x8x8xf32>
    %353 = vector.extract_strided_slice %334 {offsets = [0, 64], sizes = [8, 8], strides = [1, 1]} : vector<8x96xf32> to vector<8x8xf32>
    %354 = vector.shape_cast %353 : vector<8x8xf32> to vector<1x8x8xf32>
    %355 = vector.extract_strided_slice %334 {offsets = [0, 72], sizes = [8, 8], strides = [1, 1]} : vector<8x96xf32> to vector<8x8xf32>
    %356 = vector.shape_cast %355 : vector<8x8xf32> to vector<1x8x8xf32>
    %357 = vector.extract_strided_slice %334 {offsets = [0, 80], sizes = [8, 8], strides = [1, 1]} : vector<8x96xf32> to vector<8x8xf32>
    %358 = vector.shape_cast %357 : vector<8x8xf32> to vector<1x8x8xf32>
    %359 = vector.extract_strided_slice %334 {offsets = [0, 88], sizes = [8, 8], strides = [1, 1]} : vector<8x96xf32> to vector<8x8xf32>
    %360 = vector.shape_cast %359 : vector<8x8xf32> to vector<1x8x8xf32>
    %361 = tpu.concatenate %354, %356, %358, %360 in 0 : vector<1x8x8xf32>, vector<1x8x8xf32>, vector<1x8x8xf32>, vector<1x8x8xf32> -> vector<4x8x8xf32>
    "tpu.trace_start"() <{level = 10 : i32, message = "hqd,hkd->hqk"}> : () -> ()
    %cst_97 = arith.constant dense<0.000000e+00> : vector<4x8x8xf32>
    %362 = tpu.matmul %343, %352, %cst_97 {dimension_numbers = #tpu.dot_dimension_numbers<[2], [2], [1], [1], [0, 0, 0, 1, 1, 1], [0], [0]>} : vector<4x8x8xf32>, vector<4x8x8xf32>, vector<4x8x8xf32> -> vector<4x8x8xf32>
    "tpu.trace_stop"() : () -> ()
    %cst_98 = arith.constant 0.353553385 : f32
    %363 = vector.broadcast %cst_98 : f32 to vector<4x8x8xf32>
    %364 = arith.mulf %362, %363 : vector<4x8x8xf32>
    %365 = vector.extract_strided_slice %29 {offsets = [1, 0, 0], sizes = [1, 1, 8], strides = [1, 1, 1]} : vector<2x1x8xf32> to vector<1x1x8xf32>
    %366 = vector.shape_cast %365 : vector<1x1x8xf32> to vector<1x8xf32>
    %367 = vector.shape_cast %366 : vector<1x8xf32> to vector<1x1x8xf32>
    %368 = vector.broadcast %367 : vector<1x1x8xf32> to vector<4x8x8xf32>
    %369 = arith.addf %364, %368 : vector<4x8x8xf32>
    %cst_99 = arith.constant dense<0xFF800000> : vector<4x8xf32>
    %370 = vector.multi_reduction <maximumf>, %369, %cst_99 [2] : vector<4x8x8xf32> to vector<4x8xf32>
    %371 = vector.shape_cast %370 : vector<4x8xf32> to vector<4x8x1xf32>
    %372 = vector.broadcast %371 : vector<4x8x1xf32> to vector<4x8x8xf32>
    %373 = arith.subf %369, %372 : vector<4x8x8xf32>
    %374 = math.exp %373 : vector<4x8x8xf32>
    %cst_100 = arith.constant dense<0.000000e+00> : vector<4x8xf32>
    %375 = vector.multi_reduction <add>, %374, %cst_100 [2] : vector<4x8x8xf32> to vector<4x8xf32>
    %376 = vector.shape_cast %375 : vector<4x8xf32> to vector<4x8x1xf32>
    %377 = vector.broadcast %376 : vector<4x8x1xf32> to vector<4x8x8xf32>
    %378 = arith.divf %374, %377 : vector<4x8x8xf32>
    "tpu.trace_start"() <{level = 10 : i32, message = "hqk,hkd->hqd"}> : () -> ()
    %cst_101 = arith.constant dense<0.000000e+00> : vector<4x8x8xf32>
    %379 = tpu.matmul %378, %361, %cst_101 {dimension_numbers = #tpu.dot_dimension_numbers<[2], [1], [1], [2], [0, 0, 0, 1, 1, 2], [0], [0]>} : vector<4x8x8xf32>, vector<4x8x8xf32>, vector<4x8x8xf32> -> vector<4x8x8xf32>
    "tpu.trace_stop"() : () -> ()
    "tpu.trace_start"() <{level = 10 : i32, message = "hsd,hdo->hso"}> : () -> ()
    %cst_102 = arith.constant dense<0.000000e+00> : vector<4x8x32xf32>
    %380 = tpu.matmul %379, %275, %cst_102 {dimension_numbers = #tpu.dot_dimension_numbers<[2], [1], [1], [2], [0, 0, 0, 1, 1, 2], [0], [0]>} : vector<4x8x8xf32>, vector<4x8x32xf32>, vector<4x8x32xf32> -> vector<4x8x32xf32>
    "tpu.trace_stop"() : () -> ()
    %381 = vector.extract_strided_slice %380 {offsets = [0, 0, 0], sizes = [1, 8, 32], strides = [1, 1, 1]} : vector<4x8x32xf32> to vector<1x8x32xf32>
    %382 = vector.shape_cast %381 : vector<1x8x32xf32> to vector<8x32xf32>
    %383 = vector.extract_strided_slice %380 {offsets = [1, 0, 0], sizes = [1, 8, 32], strides = [1, 1, 1]} : vector<4x8x32xf32> to vector<1x8x32xf32>
    %384 = vector.shape_cast %383 : vector<1x8x32xf32> to vector<8x32xf32>
    %385 = arith.addf %382, %384 : vector<8x32xf32>
    %386 = vector.extract_strided_slice %380 {offsets = [2, 0, 0], sizes = [1, 8, 32], strides = [1, 1, 1]} : vector<4x8x32xf32> to vector<1x8x32xf32>
    %387 = vector.shape_cast %386 : vector<1x8x32xf32> to vector<8x32xf32>
    %388 = arith.addf %385, %387 : vector<8x32xf32>
    %389 = vector.extract_strided_slice %380 {offsets = [3, 0, 0], sizes = [1, 8, 32], strides = [1, 1, 1]} : vector<4x8x32xf32> to vector<1x8x32xf32>
    %390 = vector.shape_cast %389 : vector<1x8x32xf32> to vector<8x32xf32>
    %391 = arith.addf %388, %390 : vector<8x32xf32>
    %392 = tpu.concatenate %333, %391 in 0 : vector<8x32xf32>, vector<8x32xf32> -> vector<16x32xf32>
    %393 = vector.broadcast %262 : vector<1x32xf32> to vector<16x32xf32>
    %394 = arith.addf %392, %393 : vector<16x32xf32>
    %395 = arith.addf %260, %394 : vector<16x32xf32>
    %cst_103 = arith.constant dense<0.000000e+00> : vector<16xf32>
    %396 = vector.multi_reduction <add>, %395, %cst_103 [1] : vector<16x32xf32> to vector<16xf32>
    %397 = vector.shape_cast %396 : vector<16xf32> to vector<16x1xf32>
    %cst_104 = arith.constant 3.200000e+01 : f32
    %398 = vector.broadcast %cst_104 : f32 to vector<16x1xf32>
    %399 = arith.divf %397, %398 : vector<16x1xf32>
    %400 = vector.broadcast %399 : vector<16x1xf32> to vector<16x32xf32>
    %401 = arith.subf %395, %400 : vector<16x32xf32>
    %402 = arith.mulf %401, %401 : vector<16x32xf32>
    %cst_105 = arith.constant dense<0.000000e+00> : vector<16xf32>
    %403 = vector.multi_reduction <add>, %402, %cst_105 [1] : vector<16x32xf32> to vector<16xf32>
    %404 = vector.shape_cast %403 : vector<16xf32> to vector<16x1xf32>
    %cst_106 = arith.constant 3.200000e+01 : f32
    %405 = vector.broadcast %cst_106 : f32 to vector<16x1xf32>
    %406 = arith.divf %404, %405 : vector<16x1xf32>
    %407 = vector.broadcast %399 : vector<16x1xf32> to vector<16x32xf32>
    %408 = arith.subf %395, %407 : vector<16x32xf32>
    %cst_107 = arith.constant 9.99999996E-13 : f32
    %409 = vector.broadcast %cst_107 : f32 to vector<16x1xf32>
    %410 = arith.addf %406, %409 : vector<16x1xf32>
    %411 = math.rsqrt %410 : vector<16x1xf32>
    %412 = vector.broadcast %411 : vector<16x1xf32> to vector<16x32xf32>
    %413 = arith.mulf %408, %412 : vector<16x32xf32>
    %414 = vector.broadcast %263 : vector<1x32xf32> to vector<16x32xf32>
    %415 = arith.mulf %413, %414 : vector<16x32xf32>
    %416 = vector.broadcast %264 : vector<1x32xf32> to vector<16x32xf32>
    %417 = arith.addf %415, %416 : vector<16x32xf32>
    %c1_108 = arith.constant 1 : index
    %c0_109 = arith.constant 0 : index
    %c0_110 = arith.constant 0 : index
    %418 = vector.load %arg6[%c1_108, %c0_109, %c0_110] : memref<2x32x64xf32, #tpu.memory_space<vmem>>, vector<1x32x64xf32>
    %419 = vector.shape_cast %418 : vector<1x32x64xf32> to vector<32x64xf32>
    %cst_111 = arith.constant dense<0.000000e+00> : vector<16x64xf32>
    %420 = tpu.matmul %417, %419, %cst_111 {dimension_numbers = #tpu.dot_dimension_numbers<[1], [0], [0], [1], [0, 0, 1, 1], [], []>} : vector<16x32xf32>, vector<32x64xf32>, vector<16x64xf32> -> vector<16x64xf32>
    %421 = vector.broadcast %265 : vector<1x64xf32> to vector<16x64xf32>
    %422 = arith.addf %420, %421 : vector<16x64xf32>
    %cst_112 = arith.constant 5.000000e-01 : f32
    %423 = vector.broadcast %cst_112 : f32 to vector<16x64xf32>
    %424 = arith.mulf %423, %422 : vector<16x64xf32>
    %cst_113 = arith.constant 0.707106769 : f32
    %425 = vector.broadcast %cst_113 : f32 to vector<16x64xf32>
    %426 = arith.mulf %422, %425 : vector<16x64xf32>
    %cst_114 = arith.constant 0.000000e+00 : f32
    %427 = vector.broadcast %cst_114 : f32 to vector<16x64xf32>
    %428 = arith.cmpf oge, %426, %427 : vector<16x64xf32>
    %cst_115 = arith.constant 1.000000e+00 : f32
    %cst_116 = arith.constant -1.000000e+00 : f32
    %429 = vector.broadcast %cst_115 : f32 to vector<16x64xf32>
    %430 = vector.broadcast %cst_116 : f32 to vector<16x64xf32>
    %431 = arith.select %428, %429, %430 : vector<16x64xi1>, vector<16x64xf32>
    %432 = math.absf %426 : vector<16x64xf32>
    %cst_117 = arith.constant 0.327591091 : f32
    %433 = vector.broadcast %cst_117 : f32 to vector<16x64xf32>
    %434 = arith.mulf %433, %432 : vector<16x64xf32>
    %cst_118 = arith.constant 1.000000e+00 : f32
    %435 = vector.broadcast %cst_118 : f32 to vector<16x64xf32>
    %436 = arith.addf %435, %434 : vector<16x64xf32>
    %cst_119 = arith.constant 1.000000e+00 : f32
    %437 = vector.broadcast %cst_119 : f32 to vector<16x64xf32>
    %438 = arith.divf %437, %436 : vector<16x64xf32>
    %cst_120 = arith.constant 1.06140542 : f32
    %439 = vector.broadcast %cst_120 : f32 to vector<16x64xf32>
    %440 = arith.mulf %439, %438 : vector<16x64xf32>
    %cst_121 = arith.constant -1.45315206 : f32
    %441 = vector.broadcast %cst_121 : f32 to vector<16x64xf32>
    %442 = arith.addf %440, %441 : vector<16x64xf32>
    %443 = arith.mulf %442, %438 : vector<16x64xf32>
    %cst_122 = arith.constant 1.42141378 : f32
    %444 = vector.broadcast %cst_122 : f32 to vector<16x64xf32>
    %445 = arith.addf %443, %444 : vector<16x64xf32>
    %446 = arith.mulf %445, %438 : vector<16x64xf32>
    %cst_123 = arith.constant -0.284496725 : f32
    %447 = vector.broadcast %cst_123 : f32 to vector<16x64xf32>
    %448 = arith.addf %446, %447 : vector<16x64xf32>
    %449 = arith.mulf %448, %438 : vector<16x64xf32>
    %cst_124 = arith.constant 0.254829586 : f32
    %450 = vector.broadcast %cst_124 : f32 to vector<16x64xf32>
    %451 = arith.addf %449, %450 : vector<16x64xf32>
    %452 = arith.mulf %451, %438 : vector<16x64xf32>
    %cst_125 = arith.constant 0.000000e+00 : f32
    %453 = vector.broadcast %cst_125 : f32 to vector<16x64xf32>
    %454 = arith.subf %453, %432 : vector<16x64xf32>
    %455 = arith.mulf %454, %432 : vector<16x64xf32>
    %456 = math.exp %455 : vector<16x64xf32>
    %457 = arith.mulf %452, %456 : vector<16x64xf32>
    %cst_126 = arith.constant 1.000000e+00 : f32
    %458 = vector.broadcast %cst_126 : f32 to vector<16x64xf32>
    %459 = arith.subf %458, %457 : vector<16x64xf32>
    %460 = arith.mulf %431, %459 : vector<16x64xf32>
    %cst_127 = arith.constant 1.000000e+00 : f32
    %461 = vector.broadcast %cst_127 : f32 to vector<16x64xf32>
    %462 = arith.addf %461, %460 : vector<16x64xf32>
    %463 = arith.mulf %424, %462 : vector<16x64xf32>
    %c1_128 = arith.constant 1 : index
    %c0_129 = arith.constant 0 : index
    %c0_130 = arith.constant 0 : index
    %464 = vector.load %arg7[%c1_128, %c0_129, %c0_130] : memref<2x64x32xf32, #tpu.memory_space<vmem>>, vector<1x64x32xf32>
    %465 = vector.shape_cast %464 : vector<1x64x32xf32> to vector<64x32xf32>
    %cst_131 = arith.constant dense<0.000000e+00> : vector<16x32xf32>
    %466 = tpu.matmul %463, %465, %cst_131 {dimension_numbers = #tpu.dot_dimension_numbers<[1], [0], [0], [1], [0, 0, 1, 1], [], []>} : vector<16x64xf32>, vector<64x32xf32>, vector<16x32xf32> -> vector<16x32xf32>
    %467 = vector.broadcast %266 : vector<1x32xf32> to vector<16x32xf32>
    %468 = arith.addf %466, %467 : vector<16x32xf32>
    %469 = arith.addf %417, %468 : vector<16x32xf32>
    %cst_132 = arith.constant dense<0.000000e+00> : vector<16xf32>
    %470 = vector.multi_reduction <add>, %469, %cst_132 [1] : vector<16x32xf32> to vector<16xf32>
    %471 = vector.shape_cast %470 : vector<16xf32> to vector<16x1xf32>
    %cst_133 = arith.constant 3.200000e+01 : f32
    %472 = vector.broadcast %cst_133 : f32 to vector<16x1xf32>
    %473 = arith.divf %471, %472 : vector<16x1xf32>
    %474 = vector.broadcast %473 : vector<16x1xf32> to vector<16x32xf32>
    %475 = arith.subf %469, %474 : vector<16x32xf32>
    %476 = arith.mulf %475, %475 : vector<16x32xf32>
    %cst_134 = arith.constant dense<0.000000e+00> : vector<16xf32>
    %477 = vector.multi_reduction <add>, %476, %cst_134 [1] : vector<16x32xf32> to vector<16xf32>
    %478 = vector.shape_cast %477 : vector<16xf32> to vector<16x1xf32>
    %cst_135 = arith.constant 3.200000e+01 : f32
    %479 = vector.broadcast %cst_135 : f32 to vector<16x1xf32>
    %480 = arith.divf %478, %479 : vector<16x1xf32>
    %481 = vector.broadcast %473 : vector<16x1xf32> to vector<16x32xf32>
    %482 = arith.subf %469, %481 : vector<16x32xf32>
    %cst_136 = arith.constant 9.99999996E-13 : f32
    %483 = vector.broadcast %cst_136 : f32 to vector<16x1xf32>
    %484 = arith.addf %480, %483 : vector<16x1xf32>
    %485 = math.rsqrt %484 : vector<16x1xf32>
    %486 = vector.broadcast %485 : vector<16x1xf32> to vector<16x32xf32>
    %487 = arith.mulf %482, %486 : vector<16x32xf32>
    %488 = vector.broadcast %267 : vector<1x32xf32> to vector<16x32xf32>
    %489 = arith.mulf %487, %488 : vector<16x32xf32>
    %490 = vector.broadcast %268 : vector<1x32xf32> to vector<16x32xf32>
    %491 = arith.addf %489, %490 : vector<16x32xf32>
    %492 = vector.extract_strided_slice %491 {offsets = [0, 0], sizes = [1, 32], strides = [1, 1]} : vector<16x32xf32> to vector<1x32xf32>
    %493 = vector.extract_strided_slice %491 {offsets = [8, 0], sizes = [1, 32], strides = [1, 1]} : vector<16x32xf32> to vector<1x32xf32>
    %494 = tpu.concatenate %492, %493 in 0 : vector<1x32xf32>, vector<1x32xf32> -> vector<2x32xf32>
    %c0_137 = arith.constant 0 : index
    %c0_138 = arith.constant 0 : index
    %495 = vector.load %arg8[%c0_137, %c0_138] : memref<32x256xf32, #tpu.memory_space<vmem>>, vector<32x32xf32>
    %c0_139 = arith.constant 0 : index
    %c128 = arith.constant 128 : index
    %496 = vector.load %arg8[%c0_139, %c128] : memref<32x256xf32, #tpu.memory_space<vmem>>, vector<32x128xf32>
    %c18 = arith.constant 18 : index
    %c0_140 = arith.constant 0 : index
    %497 = vector.load %arg3[%c18, %c0_140] : memref<20x128xf32, #tpu.memory_space<vmem>>, vector<1x32xf32>
    %c19 = arith.constant 19 : index
    %c0_141 = arith.constant 0 : index
    %498 = vector.load %arg3[%c19, %c0_141] : memref<20x128xf32, #tpu.memory_space<vmem>>, vector<1x128xf32>
    %cst_142 = arith.constant dense<0.000000e+00> : vector<2x32xf32>
    %499 = tpu.matmul %494, %495, %cst_142 {dimension_numbers = #tpu.dot_dimension_numbers<[1], [0], [0], [1], [0, 0, 1, 1], [], []>} : vector<2x32xf32>, vector<32x32xf32>, vector<2x32xf32> -> vector<2x32xf32>
    %500 = vector.broadcast %497 : vector<1x32xf32> to vector<2x32xf32>
    %501 = arith.addf %499, %500 : vector<2x32xf32>
    %502 = math.tanh %501 : vector<2x32xf32>
    %cst_143 = arith.constant dense<0.000000e+00> : vector<2x128xf32>
    %503 = tpu.matmul %502, %496, %cst_143 {dimension_numbers = #tpu.dot_dimension_numbers<[1], [0], [0], [1], [0, 0, 1, 1], [], []>} : vector<2x32xf32>, vector<32x128xf32>, vector<2x128xf32> -> vector<2x128xf32>
    %504 = vector.broadcast %498 : vector<1x128xf32> to vector<2x128xf32>
    %505 = arith.addf %503, %504 : vector<2x128xf32>
    %506 = arith.negf %505 : vector<2x128xf32>
    %507 = math.exp %506 : vector<2x128xf32>
    %cst_144 = arith.constant 1.000000e+00 : f32
    %508 = vector.broadcast %cst_144 : f32 to vector<2x128xf32>
    %509 = arith.addf %508, %507 : vector<2x128xf32>
    %510 = arith.divf %508, %509 : vector<2x128xf32>
    %511 = vector.shape_cast %510 : vector<2x128xf32> to vector<2x1x128xf32>
    %c0_145 = arith.constant 0 : index
    %c0_146 = arith.constant 0 : index
    %c0_147 = arith.constant 0 : index
    %512 = vector.load %arg9[%c0_145, %c0_146, %c0_147] : memref<2x1x128xf32, #tpu.memory_space<vmem>>, vector<2x1x128xf32>
    tpu.vector_store %arg9[%c0_145, %c0_146, %c0_147], %511 {strides = array<i32>} : memref<2x1x128xf32, #tpu.memory_space<vmem>>, vector<2x1x128xf32>,
    return
  }
  func.func @transform_0(%arg0: i32) -> (i32, i32) {
    %c0_i32 = arith.constant 0 : i32
    %c0_i32_0 = arith.constant 0 : i32
    return %arg0, %c0_i32 : i32, i32
  }
  func.func @transform_1(%arg0: i32) -> (i32, i32, i32) {
    %c0_i32 = arith.constant 0 : i32
    %c0_i32_0 = arith.constant 0 : i32
    %c0_i32_1 = arith.constant 0 : i32
    return %arg0, %c0_i32, %c0_i32_0 : i32, i32, i32
  }
  func.func @transform_2(%arg0: i32) -> (i32, i32) {
    %c0_i32 = arith.constant 0 : i32
    %c0_i32_0 = arith.constant 0 : i32
    %c0_i32_1 = arith.constant 0 : i32
    return %c0_i32, %c0_i32_0 : i32, i32
  }
  func.func @transform_3(%arg0: i32) -> (i32, i32, i32) {
    %c0_i32 = arith.constant 0 : i32
    %c0_i32_0 = arith.constant 0 : i32
    %c0_i32_1 = arith.constant 0 : i32
    %c0_i32_2 = arith.constant 0 : i32
    return %c0_i32, %c0_i32_0, %c0_i32_1 : i32, i32, i32
  }
  func.func @transform_4(%arg0: i32) -> (i32, i32, i32, i32) {
    %c0_i32 = arith.constant 0 : i32
    %c0_i32_0 = arith.constant 0 : i32
    %c0_i32_1 = arith.constant 0 : i32
    %c0_i32_2 = arith.constant 0 : i32
    %c0_i32_3 = arith.constant 0 : i32
    return %c0_i32, %c0_i32_0, %c0_i32_1, %c0_i32_2 : i32, i32, i32, i32
  }
  func.func @transform_5(%arg0: i32) -> (i32, i32, i32) {
    %c0_i32 = arith.constant 0 : i32
    %c0_i32_0 = arith.constant 0 : i32
    %c0_i32_1 = arith.constant 0 : i32
    %c0_i32_2 = arith.constant 0 : i32
    return %c0_i32, %c0_i32_0, %c0_i32_1 : i32, i32, i32
  }
  func.func @transform_6(%arg0: i32) -> (i32, i32, i32) {
    %c0_i32 = arith.constant 0 : i32
    %c0_i32_0 = arith.constant 0 : i32
    %c0_i32_1 = arith.constant 0 : i32
    %c0_i32_2 = arith.constant 0 : i32
    return %c0_i32, %c0_i32_0, %c0_i32_1 : i32, i32, i32
  }
  func.func @transform_7(%arg0: i32) -> (i32, i32) {
    %c0_i32 = arith.constant 0 : i32
    %c0_i32_0 = arith.constant 0 : i32
    %c0_i32_1 = arith.constant 0 : i32
    return %c0_i32, %c0_i32_0 : i32, i32
  }
  func.func @transform_8(%arg0: i32) -> (i32, i32, i32) {
    %c0_i32 = arith.constant 0 : i32
    %c0_i32_0 = arith.constant 0 : i32
    %c0_i32_1 = arith.constant 0 : i32
    return %arg0, %c0_i32, %c0_i32_0 : i32, i32, i32
  }
}

</mosaic_0001>

<llo_original>
// kernel: legalbert_multicls_forward.1
$region0: #{legalbert_multicls_forward.1}
  #allocation0 [shape = 'u32[]', space=smem, size = 0x4, offset = 0x4, fixed_abs, tag = 'smem constant byte address 0x4 - core index']
  #allocation1 [shape = 'u32[144,128]{1,0:T(1,128)}', space=vmem, size = 0x12000, scoped, tag = 'internal scratch']
  %s0 = inlined_call_operand.vmem [shape: f32[16,32], index: 0, kind: input, shape index: {}]
  %s1 = inlined_call_operand.vmem [shape: f32[2,1,8], index: 1, kind: input, shape index: {}]
  %s2 = inlined_call_operand.vmem [shape: f32[20,128], index: 2, kind: input, shape index: {}]
  %s3 = inlined_call_operand.vmem [shape: f32[2,32,96], index: 3, kind: input, shape index: {}]
  %s4 = inlined_call_operand.vmem [shape: f32[2,4,8,32], index: 4, kind: input, shape index: {}]
  %s5 = inlined_call_operand.vmem [shape: f32[2,32,64], index: 5, kind: input, shape index: {}]
  %s6 = inlined_call_operand.vmem [shape: f32[2,64,32], index: 6, kind: input, shape index: {}]
  %s7 = inlined_call_operand.vmem [shape: f32[32,256], index: 7, kind: input, shape index: {}]
  %s8 = inlined_call_operand.hbm [shape: f32[2,1,128], index: 8, kind: output, shape index: {}]
  %s9 = sld [smem:[#allocation0]]
  $region42: #{legalbert_multicls_forward.1} parent=0
    _
  %s11 = ssub.s32 1, %s9
  %s12 = scalar_select 0, %s11, %s9
  $region1: #{legalbert_multicls_forward.1} parent=0
    #allocation2 [shape = 'u8[1024]{0}', space=vmem, size = 0x400, scoped, tag = 'output window, operand 0, single buffered']
    #allocation3 [shape = 's32[1]{0}', space=sflag, size = 0x4, scoped, tag = 'scoped memory for legalbert_multicls_forward.1']
    %13 = vsyncpa [#allocation3], 0
    // Predicated region
    $region2: #{legalbert_multicls_forward.1} parent=1 // pred_check
      _
    $region3: #{legalbert_multicls_forward.1} parent=1 // pred_check_branch
      %15 = sbr.rel (0) target = $region5
    $region4: #{legalbert_multicls_forward.1} parent=1 // pred_region
      _
    $region5: #{legalbert_multicls_forward.1} parent=1 // pred_fallthru
      _
    // Predicated region
    $region6: #{legalbert_multicls_forward.1} parent=1 // pred_check
      _
    $region7: #{legalbert_multicls_forward.1} parent=1 // pred_check_branch
      %17 = sbr.rel (0) target = $region9
    $region8: #{legalbert_multicls_forward.1} parent=1 // pred_region
      _
    $region9: #{legalbert_multicls_forward.1} parent=1 // pred_fallthru
      _
    // Predicated region
    $region10: #{legalbert_multicls_forward.1} parent=1 // pred_check
      _
    $region11: #{legalbert_multicls_forward.1} parent=1 // pred_check_branch
      %19 = sbr.rel (0) target = $region13
    $region12: #{legalbert_multicls_forward.1} parent=1 // pred_region
      _
    $region13: #{legalbert_multicls_forward.1} parent=1 // pred_fallthru
      _
    // Predicated region
    $region14: #{legalbert_multicls_forward.1} parent=1 // pred_check
      _
    $region15: #{legalbert_multicls_forward.1} parent=1 // pred_check_branch
      %21 = sbr.rel (0) target = $region17
    $region16: #{legalbert_multicls_forward.1} parent=1 // pred_region
      _
    $region17: #{legalbert_multicls_forward.1} parent=1 // pred_fallthru
      _
    // Predicated region
    $region18: #{legalbert_multicls_forward.1} parent=1 // pred_check
      _
    $region19: #{legalbert_multicls_forward.1} parent=1 // pred_check_branch
      %23 = sbr.rel (0) target = $region21
    $region20: #{legalbert_multicls_forward.1} parent=1 // pred_region
      _
    $region21: #{legalbert_multicls_forward.1} parent=1 // pred_fallthru
      _
    // Predicated region
    $region22: #{legalbert_multicls_forward.1} parent=1 // pred_check
      _
    $region23: #{legalbert_multicls_forward.1} parent=1 // pred_check_branch
      %25 = sbr.rel (0) target = $region25
    $region24: #{legalbert_multicls_forward.1} parent=1 // pred_region
      _
    $region25: #{legalbert_multicls_forward.1} parent=1 // pred_fallthru
      _
    // Predicated region
    $region26: #{legalbert_multicls_forward.1} parent=1 // pred_check
      _
    $region27: #{legalbert_multicls_forward.1} parent=1 // pred_check_branch
      %27 = sbr.rel (0) target = $region29
    $region28: #{legalbert_multicls_forward.1} parent=1 // pred_region
      _
    $region29: #{legalbert_multicls_forward.1} parent=1 // pred_fallthru
      _
    // Predicated region
    $region30: #{legalbert_multicls_forward.1} parent=1 // pred_check
      _
    $region31: #{legalbert_multicls_forward.1} parent=1 // pred_check_branch
      %29 = sbr.rel (0) target = $region33
    $region32: #{legalbert_multicls_forward.1} parent=1 // pred_region
      _
    $region33: #{legalbert_multicls_forward.1} parent=1 // pred_fallthru
      _
    %v30 = vld [vmem:[%s0] sm:$0xff]
    %v31 = vld [vmem:[%s0 + $0x8] sm:$0xff]
    %v32 = vld [vmem:[%s2] sm:$0x1]
    %v33 = vld [vmem:[%s2 + $0x1] sm:$0x1]
    %vm34 = vcmask 261120
    %v35 = vsel %vm34, %v30, 0.0
    %36 = vadd.xlane.f32.xlu0 %v35
    %v37 = vpop.xlane.xlu0 %36
    %v38 = vsel %vm34, %v31, 0.0
    %39 = vadd.xlane.f32.xlu0 %v38
    %v40 = vpop.xlane.xlu0 %39
    %v41 = vrcp.pop 32.0
    %v42 = vmul.f32 %v37, %v41
    %v43 = vmul.f32 %v40, %v41
    %v44 = vsub.f32 %v30, %v42
    %v45 = vsub.f32 %v31, %v43
    %v46 = vmul.f32 %v44, %v44
    %v47 = vmul.f32 %v45, %v45
    %v48 = vsel %vm34, %v46, 0.0
    %49 = vadd.xlane.f32.xlu0 %v48
    %v50 = vpop.xlane.xlu0 %49
    %v51 = vsel %vm34, %v47, 0.0
    %52 = vadd.xlane.f32.xlu0 %v51
    %v53 = vpop.xlane.xlu0 %52
    %v54 = vmul.f32 %v50, %v41
    %v55 = vmul.f32 %v53, %v41
    %v56 = vadd.f32 %v54, 1e-12
    %v57 = vadd.f32 %v55, 1e-12
    %v58 = vrsqrt.pop %v56
    %v59 = vrsqrt.pop %v57
    %v60 = vmul.f32 %v44, %v58
    %v61 = vmul.f32 %v45, %v59
    %v62 = vlaneseq
    %v63 = vshrl.u32 %v62, 7
    %v64 = vsub.s32 0, %v63
    %v65 = vrot.slane %v32, %v64
    %v66 = vmul.f32 %v60, %v65
    %v67 = vmul.f32 %v61, %v65
    %v68 = vlaneseq
    %v69 = vshrl.u32 %v68, 7
    %v70 = vsub.s32 0, %v69
    %v71 = vrot.slane %v33, %v70
    %v72 = vadd.f32 %v66, %v71
    %v73 = vadd.f32 %v67, %v71
    %v74 = vld [vmem:[%s1] sm:$0x1]
    %v75 = vld [vmem:[%s1 + $0x1] sm:$0x1]
    %v76 = vsub.f32 1.0, %v74
    %v77 = vsub.f32 1.0, %v75
    %v78 = vmul.f32 %v76, -10000.0
    %v79 = vmul.f32 %v77, -10000.0
    %v80 = vld [vmem:[%s2 + $0x2] sm:$0x1]
    %v81 = vld [vmem:[%s2 + $0x3] sm:$0x1]
    %v82 = vld [vmem:[%s2 + $0x4] sm:$0x1]
    %v83 = vld [vmem:[%s2 + $0x5] sm:$0x1]
    %v84 = vld [vmem:[%s2 + $0x6] sm:$0x1]
    %v85 = vld [vmem:[%s2 + $0x7] sm:$0x1]
    %v86 = vld [vmem:[%s2 + $0x8] sm:$0x1]
    %v87 = vld [vmem:[%s2 + $0x9] sm:$0x1]
    %v88 = vld [vmem:[%s3] sm:$0xff]
    %v89 = vld [vmem:[%s3 + $0x8] sm:$0xff]
    %v90 = vld [vmem:[%s3 + $0x10] sm:$0xff]
    %v91 = vld [vmem:[%s3 + $0x18] sm:$0xff]
    %v92 = vlaneseq
    %v93 = vshrl.u32 %v92, 7
    %v94 = vsub.s32 0, %v93
    %v95 = vrot.slane %v80, %v94
    %v97 = vsel %vm34, %v72, 0
    %v100 = vsel %vm34, %v73, 0
    %102 = vmatprep.subr.mxu0 0.0
    %103 = vmatpush1.msra.mxu0 %v88
    %104 = vmatprep.subr.mxu0 0.0
    %105 = vmatpush1.msra.mxu0 %v89
    %106 = vmatprep.subr.mxu0 0.0
    %107 = vmatpush1.msra.mxu0 %v90
    %108 = vmatprep.subr.mxu0 0.0
    %109 = vmatpush1.msra.mxu0 %v91
    %110 = vmatprep.subr.mxu0 0.0
    %111 = vmatpush1.msra.mxu0 0.0
    %112 = vmatprep.subr.mxu0 0.0
    %113 = vmatpush1.msra.mxu0 0.0
    %114 = vmatprep.subr.mxu0 0.0
    %115 = vmatpush1.msra.mxu0 0.0
    %116 = vmatprep.subr.mxu0 0.0
    %117 = vmatpush1.msra.mxu0 0.0
    %118 = vmatprep.subr.mxu0 0.0
    %119 = vmatpush1.msra.mxu0 0.0
    %120 = vmatprep.subr.mxu0 0.0
    %121 = vmatpush1.msra.mxu0 0.0
    %122 = vmatprep.subr.mxu0 0.0
    %123 = vmatpush1.msra.mxu0 0.0
    %124 = vmatprep.subr.mxu0 0.0
    %125 = vmatpush1.msra.mxu0 0.0
    %126 = vmatprep.subr.mxu0 0.0
    %127 = vmatpush1.msra.mxu0 0.0
    %128 = vmatprep.subr.mxu0 0.0
    %129 = vmatpush1.msra.mxu0 0.0
    %130 = vmatprep.subr.mxu0 0.0
    %131 = vmatpush1.msra.mxu0 0.0
    %132 = vmatprep.subr.mxu0 0.0
    %133 = vmatpush1.msra.mxu0 0.0
    %134 = vmatprep.subr.mxu0 0.0
    %135 = vmatpush1.msra.mxu0 0.0
    %136 = vmatprep.subr.mxu0 0.0
    %137 = vmatpush1.msra.mxu0 0.0
    %138 = vmatprep.subr.mxu0 0.0
    %139 = vmatpush1.msra.mxu0 0.0
    %140 = vmatprep.subr.mxu0 0.0
    %141 = vmatpush1.msra.mxu0 0.0
    %142 = vmatprep.subr.mxu0 0.0
    %143 = vmatpush1.msra.mxu0 0.0
    %144 = vmatprep.subr.mxu0 0.0
    %145 = vmatpush1.msra.mxu0 0.0
    %146 = vmatprep.subr.mxu0 0.0
    %147 = vmatpush1.msra.mxu0 0.0
    %148 = vmatprep.subr.mxu0 0.0
    %149 = vmatpush1.msra.mxu0 0.0
    %150 = vmatprep.subr.mxu0 0.0
    %151 = vmatpush1.msra.mxu0 0.0
    %152 = vmatprep.subr.mxu0 0.0
    %153 = vmatpush1.msra.mxu0 0.0
    %154 = vmatprep.subr.mxu0 0.0
    %155 = vmatpush1.msra.mxu0 0.0
    %156 = vmatprep.subr.mxu0 0.0
    %157 = vmatpush1.msra.mxu0 0.0
    %158 = vmatprep.subr.mxu0 0.0
    %159 = vmatpush1.msra.mxu0 0.0
    %160 = vmatprep.subr.mxu0 0.0
    %161 = vmatpush1.msra.mxu0 0.0
    %162 = vmatprep.subr.mxu0 0.0
    %163 = vmatpush1.msra.mxu0 0.0
    %164 = vmatprep.subr.mxu0 0.0
    %165 = vmatpush1.msra.mxu0 0.0
    %166 = vmatprep.mubr.f32.mxu0 0.0
    %167 = vmatmul.mubr.f32.gmra.mrb[0].mxu0 %v97
    %v168 = vpop.f32.mrb[0].mxu0
    %v169 = vadd.f32 %v95, %v168
    %v170 = vpop.f32.mrb[0].mxu0
    %171 = vmatprep.mubr.f32.mxu0 0.0
    %172 = vmatmul.mubr.f32.gmra.mrb[0].mxu0 %v100
    %v173 = vpop.f32.mrb[0].mxu0
    %v174 = vadd.f32 %v95, %v173
    %v175 = vpop.f32.mrb[0].mxu0
    %176 = vdwg.mxu0
    %v177 = vld [vmem:[%s4] sm:$0xff]
    %v178 = vld [vmem:[%s4 + $0x8] sm:$0xff]
    %v179 = vld [vmem:[%s4 + $0x10] sm:$0xff]
    %v180 = vld [vmem:[%s4 + $0x18] sm:$0xff]
    %182 = vrot.lane.b32.xlu0 %v169, 120
    %v183 = vpop.permute.xlu0 %182
    %184 = vrot.lane.b32.xlu0 %v169, 112
    %v185 = vpop.permute.xlu0 %184
    %186 = vrot.lane.b32.xlu0 %v169, 104
    %v187 = vpop.permute.xlu0 %186
    %188 = vrot.lane.b32.xlu0 %v169, 96
    %v189 = vpop.permute.xlu0 %188
    %vm190 = vcmask 64512
    %v191 = vsel %vm190, %v169, 0
    %v193 = vsel %vm190, %v189, 0
    %195 = vmatprep.subr.mxu0 0.0
    %196 = vmatpush1.xpose.msra.mxu0 %v193
    %197 = vmatprep.subr.mxu0 0.0
    %198 = vmatpush1.xpose.msra.mxu0 0.0
    %199 = vmatprep.subr.mxu0 0.0
    %200 = vmatpush1.xpose.msra.mxu0 0.0
    %201 = vmatprep.subr.mxu0 0.0
    %202 = vmatpush1.xpose.msra.mxu0 0.0
    %203 = vmatprep.subr.mxu0 0.0
    %204 = vmatpush1.xpose.msra.mxu0 0.0
    %205 = vmatprep.subr.mxu0 0.0
    %206 = vmatpush1.xpose.msra.mxu0 0.0
    %207 = vmatprep.subr.mxu0 0.0
    %208 = vmatpush1.xpose.msra.mxu0 0.0
    %209 = vmatprep.subr.mxu0 0.0
    %210 = vmatpush1.xpose.msra.mxu0 0.0
    %211 = vmatprep.subr.mxu0 0.0
    %212 = vmatpush1.xpose.msra.mxu0 0.0
    %213 = vmatprep.subr.mxu0 0.0
    %214 = vmatpush1.xpose.msra.mxu0 0.0
    %215 = vmatprep.subr.mxu0 0.0
    %216 = vmatpush1.xpose.msra.mxu0 0.0
    %217 = vmatprep.subr.mxu0 0.0
    %218 = vmatpush1.xpose.msra.mxu0 0.0
    %219 = vmatprep.subr.mxu0 0.0
    %220 = vmatpush1.xpose.msra.mxu0 0.0
    %221 = vmatprep.subr.mxu0 0.0
    %222 = vmatpush1.xpose.msra.mxu0 0.0
    %223 = vmatprep.subr.mxu0 0.0
    %224 = vmatpush1.xpose.msra.mxu0 0.0
    %225 = vmatprep.subr.mxu0 0.0
    %226 = vmatpush1.xpose.msra.mxu0 0.0
    %227 = vmatprep.subr.mxu0 0.0
    %228 = vmatpush1.xpose.msra.mxu0 0.0
    %229 = vmatprep.subr.mxu0 0.0
    %230 = vmatpush1.xpose.msra.mxu0 0.0
    %231 = vmatprep.subr.mxu0 0.0
    %232 = vmatpush1.xpose.msra.mxu0 0.0
    %233 = vmatprep.subr.mxu0 0.0
    %234 = vmatpush1.xpose.msra.mxu0 0.0
    %235 = vmatprep.subr.mxu0 0.0
    %236 = vmatpush1.xpose.msra.mxu0 0.0
    %237 = vmatprep.subr.mxu0 0.0
    %238 = vmatpush1.xpose.msra.mxu0 0.0
    %239 = vmatprep.subr.mxu0 0.0
    %240 = vmatpush1.xpose.msra.mxu0 0.0
    %241 = vmatprep.subr.mxu0 0.0
    %242 = vmatpush1.xpose.msra.mxu0 0.0
    %243 = vmatprep.subr.mxu0 0.0
    %244 = vmatpush1.xpose.msra.mxu0 0.0
    %245 = vmatprep.subr.mxu0 0.0
    %246 = vmatpush1.xpose.msra.mxu0 0.0
    %247 = vmatprep.subr.mxu0 0.0
    %248 = vmatpush1.xpose.msra.mxu0 0.0
    %249 = vmatprep.subr.mxu0 0.0
    %250 = vmatpush1.xpose.msra.mxu0 0.0
    %251 = vmatprep.subr.mxu0 0.0
    %252 = vmatpush1.xpose.msra.mxu0 0.0
    %253 = vmatprep.subr.mxu0 0.0
    %254 = vmatpush1.xpose.msra.mxu0 0.0
    %255 = vmatprep.subr.mxu0 0.0
    %256 = vmatpush1.xpose.msra.mxu0 0.0
    %257 = vmatprep.subr.mxu0 0.0
    %258 = vmatpush1.xpose.msra.mxu0 0.0
    %259 = vmatprep.mubr.f32.mxu0 0.0
    %260 = vmatmul.mubr.f32.gmra.mrb[0].mxu0 %v191
    %v261 = vpop.f32.mrb[0].mxu0
    %v262 = vadd.f32 0.0, %v261
    %v263 = vpop.f32.mrb[0].mxu0
    %264 = vdwg.mxu0
    %265 = vrot.lane.b32.xlu0 %v183, 96
    %v266 = vpop.permute.xlu0 %265
    %v267 = vsel %vm190, %v183, 0
    %v269 = vsel %vm190, %v266, 0
    %271 = vmatprep.subr.mxu0 0.0
    %272 = vmatpush1.xpose.msra.mxu0 %v269
    %273 = vmatprep.subr.mxu0 0.0
    %274 = vmatpush1.xpose.msra.mxu0 0.0
    %275 = vmatprep.subr.mxu0 0.0
    %276 = vmatpush1.xpose.msra.mxu0 0.0
    %277 = vmatprep.subr.mxu0 0.0
    %278 = vmatpush1.xpose.msra.mxu0 0.0
    %279 = vmatprep.subr.mxu0 0.0
    %280 = vmatpush1.xpose.msra.mxu0 0.0
    %281 = vmatprep.subr.mxu0 0.0
    %282 = vmatpush1.xpose.msra.mxu0 0.0
    %283 = vmatprep.subr.mxu0 0.0
    %284 = vmatpush1.xpose.msra.mxu0 0.0
    %285 = vmatprep.subr.mxu0 0.0
    %286 = vmatpush1.xpose.msra.mxu0 0.0
    %287 = vmatprep.subr.mxu0 0.0
    %288 = vmatpush1.xpose.msra.mxu0 0.0
    %289 = vmatprep.subr.mxu0 0.0
    %290 = vmatpush1.xpose.msra.mxu0 0.0
    %291 = vmatprep.subr.mxu0 0.0
    %292 = vmatpush1.xpose.msra.mxu0 0.0
    %293 = vmatprep.subr.mxu0 0.0
    %294 = vmatpush1.xpose.msra.mxu0 0.0
    %295 = vmatprep.subr.mxu0 0.0
    %296 = vmatpush1.xpose.msra.mxu0 0.0
    %297 = vmatprep.subr.mxu0 0.0
    %298 = vmatpush1.xpose.msra.mxu0 0.0
    %299 = vmatprep.subr.mxu0 0.0
    %300 = vmatpush1.xpose.msra.mxu0 0.0
    %301 = vmatprep.subr.mxu0 0.0
    %302 = vmatpush1.xpose.msra.mxu0 0.0
    %303 = vmatprep.subr.mxu0 0.0
    %304 = vmatpush1.xpose.msra.mxu0 0.0
    %305 = vmatprep.subr.mxu0 0.0
    %306 = vmatpush1.xpose.msra.mxu0 0.0
    %307 = vmatprep.subr.mxu0 0.0
    %308 = vmatpush1.xpose.msra.mxu0 0.0
    %309 = vmatprep.subr.mxu0 0.0
    %310 = vmatpush1.xpose.msra.mxu0 0.0
    %311 = vmatprep.subr.mxu0 0.0
    %312 = vmatpush1.xpose.msra.mxu0 0.0
    %313 = vmatprep.subr.mxu0 0.0
    %314 = vmatpush1.xpose.msra.mxu0 0.0
    %315 = vmatprep.subr.mxu0 0.0
    %316 = vmatpush1.xpose.msra.mxu0 0.0
    %317 = vmatprep.subr.mxu0 0.0
    %318 = vmatpush1.xpose.msra.mxu0 0.0
    %319 = vmatprep.subr.mxu0 0.0
    %320 = vmatpush1.xpose.msra.mxu0 0.0
    %321 = vmatprep.subr.mxu0 0.0
    %322 = vmatpush1.xpose.msra.mxu0 0.0
    %323 = vmatprep.subr.mxu0 0.0
    %324 = vmatpush1.xpose.msra.mxu0 0.0
    %325 = vmatprep.subr.mxu0 0.0
    %326 = vmatpush1.xpose.msra.mxu0 0.0
    %327 = vmatprep.subr.mxu0 0.0
    %328 = vmatpush1.xpose.msra.mxu0 0.0
    %329 = vmatprep.subr.mxu0 0.0
    %330 = vmatpush1.xpose.msra.mxu0 0.0
    %331 = vmatprep.subr.mxu0 0.0
    %332 = vmatpush1.xpose.msra.mxu0 0.0
    %333 = vmatprep.subr.mxu0 0.0
    %334 = vmatpush1.xpose.msra.mxu0 0.0
    %335 = vmatprep.mubr.f32.mxu0 0.0
    %336 = vmatmul.mubr.f32.gmra.mrb[0].mxu0 %v267
    %v337 = vpop.f32.mrb[0].mxu0
    %v338 = vadd.f32 0.0, %v337
    %v339 = vpop.f32.mrb[0].mxu0
    %340 = vdwg.mxu0
    %341 = vrot.lane.b32.xlu0 %v185, 96
    %v342 = vpop.permute.xlu0 %341
    %v343 = vsel %vm190, %v185, 0
    %v345 = vsel %vm190, %v342, 0
    %347 = vmatprep.subr.mxu0 0.0
    %348 = vmatpush1.xpose.msra.mxu0 %v345
    %349 = vmatprep.subr.mxu0 0.0
    %350 = vmatpush1.xpose.msra.mxu0 0.0
    %351 = vmatprep.subr.mxu0 0.0
    %352 = vmatpush1.xpose.msra.mxu0 0.0
    %353 = vmatprep.subr.mxu0 0.0
    %354 = vmatpush1.xpose.msra.mxu0 0.0
    %355 = vmatprep.subr.mxu0 0.0
    %356 = vmatpush1.xpose.msra.mxu0 0.0
    %357 = vmatprep.subr.mxu0 0.0
    %358 = vmatpush1.xpose.msra.mxu0 0.0
    %359 = vmatprep.subr.mxu0 0.0
    %360 = vmatpush1.xpose.msra.mxu0 0.0
    %361 = vmatprep.subr.mxu0 0.0
    %362 = vmatpush1.xpose.msra.mxu0 0.0
    %363 = vmatprep.subr.mxu0 0.0
    %364 = vmatpush1.xpose.msra.mxu0 0.0
    %365 = vmatprep.subr.mxu0 0.0
    %366 = vmatpush1.xpose.msra.mxu0 0.0
    %367 = vmatprep.subr.mxu0 0.0
    %368 = vmatpush1.xpose.msra.mxu0 0.0
    %369 = vmatprep.subr.mxu0 0.0
    %370 = vmatpush1.xpose.msra.mxu0 0.0
    %371 = vmatprep.subr.mxu0 0.0
    %372 = vmatpush1.xpose.msra.mxu0 0.0
    %373 = vmatprep.subr.mxu0 0.0
    %374 = vmatpush1.xpose.msra.mxu0 0.0
    %375 = vmatprep.subr.mxu0 0.0
    %376 = vmatpush1.xpose.msra.mxu0 0.0
    %377 = vmatprep.subr.mxu0 0.0
    %378 = vmatpush1.xpose.msra.mxu0 0.0
    %379 = vmatprep.subr.mxu0 0.0
    %380 = vmatpush1.xpose.msra.mxu0 0.0
    %381 = vmatprep.subr.mxu0 0.0
    %382 = vmatpush1.xpose.msra.mxu0 0.0
    %383 = vmatprep.subr.mxu0 0.0
    %384 = vmatpush1.xpose.msra.mxu0 0.0
    %385 = vmatprep.subr.mxu0 0.0
    %386 = vmatpush1.xpose.msra.mxu0 0.0
    %387 = vmatprep.subr.mxu0 0.0
    %388 = vmatpush1.xpose.msra.mxu0 0.0
    %389 = vmatprep.subr.mxu0 0.0
    %390 = vmatpush1.xpose.msra.mxu0 0.0
    %391 = vmatprep.subr.mxu0 0.0
    %392 = vmatpush1.xpose.msra.mxu0 0.0
    %393 = vmatprep.subr.mxu0 0.0
    %394 = vmatpush1.xpose.msra.mxu0 0.0
    %395 = vmatprep.subr.mxu0 0.0
    %396 = vmatpush1.xpose.msra.mxu0 0.0
    %397 = vmatprep.subr.mxu0 0.0
    %398 = vmatpush1.xpose.msra.mxu0 0.0
    %399 = vmatprep.subr.mxu0 0.0
    %400 = vmatpush1.xpose.msra.mxu0 0.0
    %401 = vmatprep.subr.mxu0 0.0
    %402 = vmatpush1.xpose.msra.mxu0 0.0
    %403 = vmatprep.subr.mxu0 0.0
    %404 = vmatpush1.xpose.msra.mxu0 0.0
    %405 = vmatprep.subr.mxu0 0.0
    %406 = vmatpush1.xpose.msra.mxu0 0.0
    %407 = vmatprep.subr.mxu0 0.0
    %408 = vmatpush1.xpose.msra.mxu0 0.0
    %409 = vmatprep.subr.mxu0 0.0
    %410 = vmatpush1.xpose.msra.mxu0 0.0
    %411 = vmatprep.mubr.f32.mxu0 0.0
    %412 = vmatmul.mubr.f32.gmra.mrb[0].mxu0 %v343
    %v413 = vpop.f32.mrb[0].mxu0
    %v414 = vadd.f32 0.0, %v413
    %v415 = vpop.f32.mrb[0].mxu0
    %416 = vdwg.mxu0
    %417 = vrot.lane.b32.xlu0 %v187, 96
    %v418 = vpop.permute.xlu0 %417
    %v419 = vsel %vm190, %v187, 0
    %v421 = vsel %vm190, %v418, 0
    %423 = vmatprep.subr.mxu0 0.0
    %424 = vmatpush1.xpose.msra.mxu0 %v421
    %425 = vmatprep.subr.mxu0 0.0
    %426 = vmatpush1.xpose.msra.mxu0 0.0
    %427 = vmatprep.subr.mxu0 0.0
    %428 = vmatpush1.xpose.msra.mxu0 0.0
    %429 = vmatprep.subr.mxu0 0.0
    %430 = vmatpush1.xpose.msra.mxu0 0.0
    %431 = vmatprep.subr.mxu0 0.0
    %432 = vmatpush1.xpose.msra.mxu0 0.0
    %433 = vmatprep.subr.mxu0 0.0
    %434 = vmatpush1.xpose.msra.mxu0 0.0
    %435 = vmatprep.subr.mxu0 0.0
    %436 = vmatpush1.xpose.msra.mxu0 0.0
    %437 = vmatprep.subr.mxu0 0.0
    %438 = vmatpush1.xpose.msra.mxu0 0.0
    %439 = vmatprep.subr.mxu0 0.0
    %440 = vmatpush1.xpose.msra.mxu0 0.0
    %441 = vmatprep.subr.mxu0 0.0
    %442 = vmatpush1.xpose.msra.mxu0 0.0
    %443 = vmatprep.subr.mxu0 0.0
    %444 = vmatpush1.xpose.msra.mxu0 0.0
    %445 = vmatprep.subr.mxu0 0.0
    %446 = vmatpush1.xpose.msra.mxu0 0.0
    %447 = vmatprep.subr.mxu0 0.0
    %448 = vmatpush1.xpose.msra.mxu0 0.0
    %449 = vmatprep.subr.mxu0 0.0
    %450 = vmatpush1.xpose.msra.mxu0 0.0
    %451 = vmatprep.subr.mxu0 0.0
    %452 = vmatpush1.xpose.msra.mxu0 0.0
    %453 = vmatprep.subr.mxu0 0.0
    %454 = vmatpush1.xpose.msra.mxu0 0.0
    %455 = vmatprep.subr.mxu0 0.0
    %456 = vmatpush1.xpose.msra.mxu0 0.0
    %457 = vmatprep.subr.mxu0 0.0
    %458 = vmatpush1.xpose.msra.mxu0 0.0
    %459 = vmatprep.subr.mxu0 0.0
    %460 = vmatpush1.xpose.msra.mxu0 0.0
    %461 = vmatprep.subr.mxu0 0.0
    %462 = vmatpush1.xpose.msra.mxu0 0.0
    %463 = vmatprep.subr.mxu0 0.0
    %464 = vmatpush1.xpose.msra.mxu0 0.0
    %465 = vmatprep.subr.mxu0 0.0
    %466 = vmatpush1.xpose.msra.mxu0 0.0
    %467 = vmatprep.subr.mxu0 0.0
    %468 = vmatpush1.xpose.msra.mxu0 0.0
    %469 = vmatprep.subr.mxu0 0.0
    %470 = vmatpush1.xpose.msra.mxu0 0.0
    %471 = vmatprep.subr.mxu0 0.0
    %472 = vmatpush1.xpose.msra.mxu0 0.0
    %473 = vmatprep.subr.mxu0 0.0
    %474 = vmatpush1.xpose.msra.mxu0 0.0
    %475 = vmatprep.subr.mxu0 0.0
    %476 = vmatpush1.xpose.msra.mxu0 0.0
    %477 = vmatprep.subr.mxu0 0.0
    %478 = vmatpush1.xpose.msra.mxu0 0.0
    %479 = vmatprep.subr.mxu0 0.0
    %480 = vmatpush1.xpose.msra.mxu0 0.0
    %481 = vmatprep.subr.mxu0 0.0
    %482 = vmatpush1.xpose.msra.mxu0 0.0
    %483 = vmatprep.subr.mxu0 0.0
    %484 = vmatpush1.xpose.msra.mxu0 0.0
    %485 = vmatprep.subr.mxu0 0.0
    %486 = vmatpush1.xpose.msra.mxu0 0.0
    %487 = vmatprep.mubr.f32.mxu0 0.0
    %488 = vmatmul.mubr.f32.gmra.mrb[0].mxu0 %v419
    %v489 = vpop.f32.mrb[0].mxu0
    %v490 = vadd.f32 0.0, %v489
    %v491 = vpop.f32.mrb[0].mxu0
    %492 = vdwg.mxu0
    %v493 = vmul.f32 %v262, 0.35355338
    %v494 = vmul.f32 %v338, 0.35355338
    %v495 = vmul.f32 %v414, 0.35355338
    %v496 = vmul.f32 %v490, 0.35355338
    %v498 = vlaneseq
    %v499 = vshrl.u32 %v498, 7
    %v500 = vsub.s32 0, %v499
    %v501 = vrot.slane %v78, %v500
    %v503 = vadd.f32 %v493, %v501
    %v504 = vadd.f32 %v494, %v501
    %v505 = vadd.f32 %v495, %v501
    %v506 = vadd.f32 %v496, %v501
    %v507 = vsel %vm190, %v503, -inf
    %508 = vmax.xlane.f32.xlu0 %v507
    %v509 = vpop.xlane.xlu0 %508
    %v510 = vsel %vm190, %v504, -inf
    %511 = vmax.xlane.f32.xlu0 %v510
    %v512 = vpop.xlane.xlu0 %511
    %v513 = vsel %vm190, %v505, -inf
    %514 = vmax.xlane.f32.xlu0 %v513
    %v515 = vpop.xlane.xlu0 %514
    %v516 = vsel %vm190, %v506, -inf
    %517 = vmax.xlane.f32.xlu0 %v516
    %v518 = vpop.xlane.xlu0 %517
    %v519 = vsub.f32 %v503, %v509
    %v520 = vsub.f32 %v504, %v512
    %v521 = vsub.f32 %v505, %v515
    %v522 = vsub.f32 %v506, %v518
    %v523 = vmul.f32 %v519, 1.442695
    %v524 = vpow.pop %v523
    %v525 = vmul.f32 %v520, 1.442695
    %v526 = vpow.pop %v525
    %v527 = vmul.f32 %v521, 1.442695
    %v528 = vpow.pop %v527
    %v529 = vmul.f32 %v522, 1.442695
    %v530 = vpow.pop %v529
    %v531 = vsel %vm190, %v524, 0.0
    %532 = vadd.xlane.f32.xlu0 %v531
    %v533 = vpop.xlane.xlu0 %532
    %v534 = vsel %vm190, %v526, 0.0
    %535 = vadd.xlane.f32.xlu0 %v534
    %v536 = vpop.xlane.xlu0 %535
    %v537 = vsel %vm190, %v528, 0.0
    %538 = vadd.xlane.f32.xlu0 %v537
    %v539 = vpop.xlane.xlu0 %538
    %v540 = vsel %vm190, %v530, 0.0
    %541 = vadd.xlane.f32.xlu0 %v540
    %v542 = vpop.xlane.xlu0 %541
    %v543 = vrcp.pop %v533
    %v544 = vmul.f32 %v524, %v543
    %v545 = vrcp.pop %v536
    %v546 = vmul.f32 %v526, %v545
    %v547 = vrcp.pop %v539
    %v548 = vmul.f32 %v528, %v547
    %v549 = vrcp.pop %v542
    %v550 = vmul.f32 %v530, %v549
    %551 = vrot.lane.b32.xlu0 %v169, 64
    %v552 = vpop.permute.xlu0 %551
    %v555 = vsel %vm190, %v544, 0
    %557 = vmatprep.subr.mxu0 0.0
    %558 = vmatpush1.msra.mxu0 %v552
    %559 = vmatprep.subr.mxu0 0.0
    %560 = vmatpush1.msra.mxu0 0.0
    %561 = vmatprep.subr.mxu0 0.0
    %562 = vmatpush1.msra.mxu0 0.0
    %563 = vmatprep.subr.mxu0 0.0
    %564 = vmatpush1.msra.mxu0 0.0
    %565 = vmatprep.subr.mxu0 0.0
    %566 = vmatpush1.msra.mxu0 0.0
    %567 = vmatprep.subr.mxu0 0.0
    %568 = vmatpush1.msra.mxu0 0.0
    %569 = vmatprep.subr.mxu0 0.0
    %570 = vmatpush1.msra.mxu0 0.0
    %571 = vmatprep.subr.mxu0 0.0
    %572 = vmatpush1.msra.mxu0 0.0
    %573 = vmatprep.subr.mxu0 0.0
    %574 = vmatpush1.msra.mxu0 0.0
    %575 = vmatprep.subr.mxu0 0.0
    %576 = vmatpush1.msra.mxu0 0.0
    %577 = vmatprep.subr.mxu0 0.0
    %578 = vmatpush1.msra.mxu0 0.0
    %579 = vmatprep.subr.mxu0 0.0
    %580 = vmatpush1.msra.mxu0 0.0
    %581 = vmatprep.subr.mxu0 0.0
    %582 = vmatpush1.msra.mxu0 0.0
    %583 = vmatprep.subr.mxu0 0.0
    %584 = vmatpush1.msra.mxu0 0.0
    %585 = vmatprep.subr.mxu0 0.0
    %586 = vmatpush1.msra.mxu0 0.0
    %587 = vmatprep.subr.mxu0 0.0
    %588 = vmatpush1.msra.mxu0 0.0
    %589 = vmatprep.subr.mxu0 0.0
    %590 = vmatpush1.msra.mxu0 0.0
    %591 = vmatprep.subr.mxu0 0.0
    %592 = vmatpush1.msra.mxu0 0.0
    %593 = vmatprep.subr.mxu0 0.0
    %594 = vmatpush1.msra.mxu0 0.0
    %595 = vmatprep.subr.mxu0 0.0
    %596 = vmatpush1.msra.mxu0 0.0
    %597 = vmatprep.subr.mxu0 0.0
    %598 = vmatpush1.msra.mxu0 0.0
    %599 = vmatprep.subr.mxu0 0.0
    %600 = vmatpush1.msra.mxu0 0.0
    %601 = vmatprep.subr.mxu0 0.0
    %602 = vmatpush1.msra.mxu0 0.0
    %603 = vmatprep.subr.mxu0 0.0
    %604 = vmatpush1.msra.mxu0 0.0
    %605 = vmatprep.subr.mxu0 0.0
    %606 = vmatpush1.msra.mxu0 0.0
    %607 = vmatprep.subr.mxu0 0.0
    %608 = vmatpush1.msra.mxu0 0.0
    %609 = vmatprep.subr.mxu0 0.0
    %610 = vmatpush1.msra.mxu0 0.0
    %611 = vmatprep.subr.mxu0 0.0
    %612 = vmatpush1.msra.mxu0 0.0
    %613 = vmatprep.subr.mxu0 0.0
    %614 = vmatpush1.msra.mxu0 0.0
    %615 = vmatprep.subr.mxu0 0.0
    %616 = vmatpush1.msra.mxu0 0.0
    %617 = vmatprep.subr.mxu0 0.0
    %618 = vmatpush1.msra.mxu0 0.0
    %619 = vmatprep.subr.mxu0 0.0
    %620 = vmatpush1.msra.mxu0 0.0
    %621 = vmatprep.mubr.f32.mxu0 0.0
    %622 = vmatmul.mubr.f32.gmra.mrb[0].mxu0 %v555
    %v623 = vpop.f32.mrb[0].mxu0
    %v624 = vadd.f32 0.0, %v623
    %v625 = vpop.f32.mrb[0].mxu0
    %626 = vdwg.mxu0
    %627 = vrot.lane.b32.xlu0 %v183, 64
    %v628 = vpop.permute.xlu0 %627
    %v631 = vsel %vm190, %v546, 0
    %633 = vmatprep.subr.mxu0 0.0
    %634 = vmatpush1.msra.mxu0 %v628
    %635 = vmatprep.subr.mxu0 0.0
    %636 = vmatpush1.msra.mxu0 0.0
    %637 = vmatprep.subr.mxu0 0.0
    %638 = vmatpush1.msra.mxu0 0.0
    %639 = vmatprep.subr.mxu0 0.0
    %640 = vmatpush1.msra.mxu0 0.0
    %641 = vmatprep.subr.mxu0 0.0
    %642 = vmatpush1.msra.mxu0 0.0
    %643 = vmatprep.subr.mxu0 0.0
    %644 = vmatpush1.msra.mxu0 0.0
    %645 = vmatprep.subr.mxu0 0.0
    %646 = vmatpush1.msra.mxu0 0.0
    %647 = vmatprep.subr.mxu0 0.0
    %648 = vmatpush1.msra.mxu0 0.0
    %649 = vmatprep.subr.mxu0 0.0
    %650 = vmatpush1.msra.mxu0 0.0
    %651 = vmatprep.subr.mxu0 0.0
    %652 = vmatpush1.msra.mxu0 0.0
    %653 = vmatprep.subr.mxu0 0.0
    %654 = vmatpush1.msra.mxu0 0.0
    %655 = vmatprep.subr.mxu0 0.0
    %656 = vmatpush1.msra.mxu0 0.0
    %657 = vmatprep.subr.mxu0 0.0
    %658 = vmatpush1.msra.mxu0 0.0
    %659 = vmatprep.subr.mxu0 0.0
    %660 = vmatpush1.msra.mxu0 0.0
    %661 = vmatprep.subr.mxu0 0.0
    %662 = vmatpush1.msra.mxu0 0.0
    %663 = vmatprep.subr.mxu0 0.0
    %664 = vmatpush1.msra.mxu0 0.0
    %665 = vmatprep.subr.mxu0 0.0
    %666 = vmatpush1.msra.mxu0 0.0
    %667 = vmatprep.subr.mxu0 0.0
    %668 = vmatpush1.msra.mxu0 0.0
    %669 = vmatprep.subr.mxu0 0.0
    %670 = vmatpush1.msra.mxu0 0.0
    %671 = vmatprep.subr.mxu0 0.0
    %672 = vmatpush1.msra.mxu0 0.0
    %673 = vmatprep.subr.mxu0 0.0
    %674 = vmatpush1.msra.mxu0 0.0
    %675 = vmatprep.subr.mxu0 0.0
    %676 = vmatpush1.msra.mxu0 0.0
    %677 = vmatprep.subr.mxu0 0.0
    %678 = vmatpush1.msra.mxu0 0.0
    %679 = vmatprep.subr.mxu0 0.0
    %680 = vmatpush1.msra.mxu0 0.0
    %681 = vmatprep.subr.mxu0 0.0
    %682 = vmatpush1.msra.mxu0 0.0
    %683 = vmatprep.subr.mxu0 0.0
    %684 = vmatpush1.msra.mxu0 0.0
    %685 = vmatprep.subr.mxu0 0.0
    %686 = vmatpush1.msra.mxu0 0.0
    %687 = vmatprep.subr.mxu0 0.0
    %688 = vmatpush1.msra.mxu0 0.0
    %689 = vmatprep.subr.mxu0 0.0
    %690 = vmatpush1.msra.mxu0 0.0
    %691 = vmatprep.subr.mxu0 0.0
    %692 = vmatpush1.msra.mxu0 0.0
    %693 = vmatprep.subr.mxu0 0.0
    %694 = vmatpush1.msra.mxu0 0.0
    %695 = vmatprep.subr.mxu0 0.0
    %696 = vmatpush1.msra.mxu0 0.0
    %697 = vmatprep.mubr.f32.mxu0 0.0
    %698 = vmatmul.mubr.f32.gmra.mrb[0].mxu0 %v631
    %v699 = vpop.f32.mrb[0].mxu0
    %v700 = vadd.f32 0.0, %v699
    %v701 = vpop.f32.mrb[0].mxu0
    %702 = vdwg.mxu0
    %703 = vrot.lane.b32.xlu0 %v185, 64
    %v704 = vpop.permute.xlu0 %703
    %v707 = vsel %vm190, %v548, 0
    %709 = vmatprep.subr.mxu0 0.0
    %710 = vmatpush1.msra.mxu0 %v704
    %711 = vmatprep.subr.mxu0 0.0
    %712 = vmatpush1.msra.mxu0 0.0
    %713 = vmatprep.subr.mxu0 0.0
    %714 = vmatpush1.msra.mxu0 0.0
    %715 = vmatprep.subr.mxu0 0.0
    %716 = vmatpush1.msra.mxu0 0.0
    %717 = vmatprep.subr.mxu0 0.0
    %718 = vmatpush1.msra.mxu0 0.0
    %719 = vmatprep.subr.mxu0 0.0
    %720 = vmatpush1.msra.mxu0 0.0
    %721 = vmatprep.subr.mxu0 0.0
    %722 = vmatpush1.msra.mxu0 0.0
    %723 = vmatprep.subr.mxu0 0.0
    %724 = vmatpush1.msra.mxu0 0.0
    %725 = vmatprep.subr.mxu0 0.0
    %726 = vmatpush1.msra.mxu0 0.0
    %727 = vmatprep.subr.mxu0 0.0
    %728 = vmatpush1.msra.mxu0 0.0
    %729 = vmatprep.subr.mxu0 0.0
    %730 = vmatpush1.msra.mxu0 0.0
    %731 = vmatprep.subr.mxu0 0.0
    %732 = vmatpush1.msra.mxu0 0.0
    %733 = vmatprep.subr.mxu0 0.0
    %734 = vmatpush1.msra.mxu0 0.0
    %735 = vmatprep.subr.mxu0 0.0
    %736 = vmatpush1.msra.mxu0 0.0
    %737 = vmatprep.subr.mxu0 0.0
    %738 = vmatpush1.msra.mxu0 0.0
    %739 = vmatprep.subr.mxu0 0.0
    %740 = vmatpush1.msra.mxu0 0.0
    %741 = vmatprep.subr.mxu0 0.0
    %742 = vmatpush1.msra.mxu0 0.0
    %743 = vmatprep.subr.mxu0 0.0
    %744 = vmatpush1.msra.mxu0 0.0
    %745 = vmatprep.subr.mxu0 0.0
    %746 = vmatpush1.msra.mxu0 0.0
    %747 = vmatprep.subr.mxu0 0.0
    %748 = vmatpush1.msra.mxu0 0.0
    %749 = vmatprep.subr.mxu0 0.0
    %750 = vmatpush1.msra.mxu0 0.0
    %751 = vmatprep.subr.mxu0 0.0
    %752 = vmatpush1.msra.mxu0 0.0
    %753 = vmatprep.subr.mxu0 0.0
    %754 = vmatpush1.msra.mxu0 0.0
    %755 = vmatprep.subr.mxu0 0.0
    %756 = vmatpush1.msra.mxu0 0.0
    %757 = vmatprep.subr.mxu0 0.0
    %758 = vmatpush1.msra.mxu0 0.0
    %759 = vmatprep.subr.mxu0 0.0
    %760 = vmatpush1.msra.mxu0 0.0
    %761 = vmatprep.subr.mxu0 0.0
    %762 = vmatpush1.msra.mxu0 0.0
    %763 = vmatprep.subr.mxu0 0.0
    %764 = vmatpush1.msra.mxu0 0.0
    %765 = vmatprep.subr.mxu0 0.0
    %766 = vmatpush1.msra.mxu0 0.0
    %767 = vmatprep.subr.mxu0 0.0
    %768 = vmatpush1.msra.mxu0 0.0
    %769 = vmatprep.subr.mxu0 0.0
    %770 = vmatpush1.msra.mxu0 0.0
    %771 = vmatprep.subr.mxu0 0.0
    %772 = vmatpush1.msra.mxu0 0.0
    %773 = vmatprep.mubr.f32.mxu0 0.0
    %774 = vmatmul.mubr.f32.gmra.mrb[0].mxu0 %v707
    %v775 = vpop.f32.mrb[0].mxu0
    %v776 = vadd.f32 0.0, %v775
    %v777 = vpop.f32.mrb[0].mxu0
    %778 = vdwg.mxu0
    %779 = vrot.lane.b32.xlu0 %v187, 64
    %v780 = vpop.permute.xlu0 %779
    %v783 = vsel %vm190, %v550, 0
    %785 = vmatprep.subr.mxu0 0.0
    %786 = vmatpush1.msra.mxu0 %v780
    %787 = vmatprep.subr.mxu0 0.0
    %788 = vmatpush1.msra.mxu0 0.0
    %789 = vmatprep.subr.mxu0 0.0
    %790 = vmatpush1.msra.mxu0 0.0
    %791 = vmatprep.subr.mxu0 0.0
    %792 = vmatpush1.msra.mxu0 0.0
    %793 = vmatprep.subr.mxu0 0.0
    %794 = vmatpush1.msra.mxu0 0.0
    %795 = vmatprep.subr.mxu0 0.0
    %796 = vmatpush1.msra.mxu0 0.0
    %797 = vmatprep.subr.mxu0 0.0
    %798 = vmatpush1.msra.mxu0 0.0
    %799 = vmatprep.subr.mxu0 0.0
    %800 = vmatpush1.msra.mxu0 0.0
    %801 = vmatprep.subr.mxu0 0.0
    %802 = vmatpush1.msra.mxu0 0.0
    %803 = vmatprep.subr.mxu0 0.0
    %804 = vmatpush1.msra.mxu0 0.0
    %805 = vmatprep.subr.mxu0 0.0
    %806 = vmatpush1.msra.mxu0 0.0
    %807 = vmatprep.subr.mxu0 0.0
    %808 = vmatpush1.msra.mxu0 0.0
    %809 = vmatprep.subr.mxu0 0.0
    %810 = vmatpush1.msra.mxu0 0.0
    %811 = vmatprep.subr.mxu0 0.0
    %812 = vmatpush1.msra.mxu0 0.0
    %813 = vmatprep.subr.mxu0 0.0
    %814 = vmatpush1.msra.mxu0 0.0
    %815 = vmatprep.subr.mxu0 0.0
    %816 = vmatpush1.msra.mxu0 0.0
    %817 = vmatprep.subr.mxu0 0.0
    %818 = vmatpush1.msra.mxu0 0.0
    %819 = vmatprep.subr.mxu0 0.0
    %820 = vmatpush1.msra.mxu0 0.0
    %821 = vmatprep.subr.mxu0 0.0
    %822 = vmatpush1.msra.mxu0 0.0
    %823 = vmatprep.subr.mxu0 0.0
    %824 = vmatpush1.msra.mxu0 0.0
    %825 = vmatprep.subr.mxu0 0.0
    %826 = vmatpush1.msra.mxu0 0.0
    %827 = vmatprep.subr.mxu0 0.0
    %828 = vmatpush1.msra.mxu0 0.0
    %829 = vmatprep.subr.mxu0 0.0
    %830 = vmatpush1.msra.mxu0 0.0
    %831 = vmatprep.subr.mxu0 0.0
    %832 = vmatpush1.msra.mxu0 0.0
    %833 = vmatprep.subr.mxu0 0.0
    %834 = vmatpush1.msra.mxu0 0.0
    %835 = vmatprep.subr.mxu0 0.0
    %836 = vmatpush1.msra.mxu0 0.0
    %837 = vmatprep.subr.mxu0 0.0
    %838 = vmatpush1.msra.mxu0 0.0
    %839 = vmatprep.subr.mxu0 0.0
    %840 = vmatpush1.msra.mxu0 0.0
    %841 = vmatprep.subr.mxu0 0.0
    %842 = vmatpush1.msra.mxu0 0.0
    %843 = vmatprep.subr.mxu0 0.0
    %844 = vmatpush1.msra.mxu0 0.0
    %845 = vmatprep.subr.mxu0 0.0
    %846 = vmatpush1.msra.mxu0 0.0
    %847 = vmatprep.subr.mxu0 0.0
    %848 = vmatpush1.msra.mxu0 0.0
    %849 = vmatprep.mubr.f32.mxu0 0.0
    %850 = vmatmul.mubr.f32.gmra.mrb[0].mxu0 %v783
    %v851 = vpop.f32.mrb[0].mxu0
    %v852 = vadd.f32 0.0, %v851
    %v853 = vpop.f32.mrb[0].mxu0
    %854 = vdwg.mxu0
    %v856 = vsel %vm190, %v624, 0
    %858 = vmatprep.subr.mxu0 0.0
    %859 = vmatpush1.msra.mxu0 %v177
    %860 = vmatprep.subr.mxu0 0.0
    %861 = vmatpush1.msra.mxu0 0.0
    %862 = vmatprep.subr.mxu0 0.0
    %863 = vmatpush1.msra.mxu0 0.0
    %864 = vmatprep.subr.mxu0 0.0
    %865 = vmatpush1.msra.mxu0 0.0
    %866 = vmatprep.subr.mxu0 0.0
    %867 = vmatpush1.msra.mxu0 0.0
    %868 = vmatprep.subr.mxu0 0.0
    %869 = vmatpush1.msra.mxu0 0.0
    %870 = vmatprep.subr.mxu0 0.0
    %871 = vmatpush1.msra.mxu0 0.0
    %872 = vmatprep.subr.mxu0 0.0
    %873 = vmatpush1.msra.mxu0 0.0
    %874 = vmatprep.subr.mxu0 0.0
    %875 = vmatpush1.msra.mxu0 0.0
    %876 = vmatprep.subr.mxu0 0.0
    %877 = vmatpush1.msra.mxu0 0.0
    %878 = vmatprep.subr.mxu0 0.0
    %879 = vmatpush1.msra.mxu0 0.0
    %880 = vmatprep.subr.mxu0 0.0
    %881 = vmatpush1.msra.mxu0 0.0
    %882 = vmatprep.subr.mxu0 0.0
    %883 = vmatpush1.msra.mxu0 0.0
    %884 = vmatprep.subr.mxu0 0.0
    %885 = vmatpush1.msra.mxu0 0.0
    %886 = vmatprep.subr.mxu0 0.0
    %887 = vmatpush1.msra.mxu0 0.0
    %888 = vmatprep.subr.mxu0 0.0
    %889 = vmatpush1.msra.mxu0 0.0
    %890 = vmatprep.subr.mxu0 0.0
    %891 = vmatpush1.msra.mxu0 0.0
    %892 = vmatprep.subr.mxu0 0.0
    %893 = vmatpush1.msra.mxu0 0.0
    %894 = vmatprep.subr.mxu0 0.0
    %895 = vmatpush1.msra.mxu0 0.0
    %896 = vmatprep.subr.mxu0 0.0
    %897 = vmatpush1.msra.mxu0 0.0
    %898 = vmatprep.subr.mxu0 0.0
    %899 = vmatpush1.msra.mxu0 0.0
    %900 = vmatprep.subr.mxu0 0.0
    %901 = vmatpush1.msra.mxu0 0.0
    %902 = vmatprep.subr.mxu0 0.0
    %903 = vmatpush1.msra.mxu0 0.0
    %904 = vmatprep.subr.mxu0 0.0
    %905 = vmatpush1.msra.mxu0 0.0
    %906 = vmatprep.subr.mxu0 0.0
    %907 = vmatpush1.msra.mxu0 0.0
    %908 = vmatprep.subr.mxu0 0.0
    %909 = vmatpush1.msra.mxu0 0.0
    %910 = vmatprep.subr.mxu0 0.0
    %911 = vmatpush1.msra.mxu0 0.0
    %912 = vmatprep.subr.mxu0 0.0
    %913 = vmatpush1.msra.mxu0 0.0
    %914 = vmatprep.subr.mxu0 0.0
    %915 = vmatpush1.msra.mxu0 0.0
    %916 = vmatprep.subr.mxu0 0.0
    %917 = vmatpush1.msra.mxu0 0.0
    %918 = vmatprep.subr.mxu0 0.0
    %919 = vmatpush1.msra.mxu0 0.0
    %920 = vmatprep.subr.mxu0 0.0
    %921 = vmatpush1.msra.mxu0 0.0
    %922 = vmatprep.mubr.f32.mxu0 0.0
    %923 = vmatmul.mubr.f32.gmra.mrb[0].mxu0 %v856
    %v924 = vpop.f32.mrb[0].mxu0
    %v925 = vadd.f32 0.0, %v924
    %v926 = vpop.f32.mrb[0].mxu0
    %927 = vdwg.mxu0
    %v929 = vsel %vm190, %v700, 0
    %931 = vmatprep.subr.mxu0 0.0
    %932 = vmatpush1.msra.mxu0 %v178
    %933 = vmatprep.subr.mxu0 0.0
    %934 = vmatpush1.msra.mxu0 0.0
    %935 = vmatprep.subr.mxu0 0.0
    %936 = vmatpush1.msra.mxu0 0.0
    %937 = vmatprep.subr.mxu0 0.0
    %938 = vmatpush1.msra.mxu0 0.0
    %939 = vmatprep.subr.mxu0 0.0
    %940 = vmatpush1.msra.mxu0 0.0
    %941 = vmatprep.subr.mxu0 0.0
    %942 = vmatpush1.msra.mxu0 0.0
    %943 = vmatprep.subr.mxu0 0.0
    %944 = vmatpush1.msra.mxu0 0.0
    %945 = vmatprep.subr.mxu0 0.0
    %946 = vmatpush1.msra.mxu0 0.0
    %947 = vmatprep.subr.mxu0 0.0
    %948 = vmatpush1.msra.mxu0 0.0
    %949 = vmatprep.subr.mxu0 0.0
    %950 = vmatpush1.msra.mxu0 0.0
    %951 = vmatprep.subr.mxu0 0.0
    %952 = vmatpush1.msra.mxu0 0.0
    %953 = vmatprep.subr.mxu0 0.0
    %954 = vmatpush1.msra.mxu0 0.0
    %955 = vmatprep.subr.mxu0 0.0
    %956 = vmatpush1.msra.mxu0 0.0
    %957 = vmatprep.subr.mxu0 0.0
    %958 = vmatpush1.msra.mxu0 0.0
    %959 = vmatprep.subr.mxu0 0.0
    %960 = vmatpush1.msra.mxu0 0.0
    %961 = vmatprep.subr.mxu0 0.0
    %962 = vmatpush1.msra.mxu0 0.0
    %963 = vmatprep.subr.mxu0 0.0
    %964 = vmatpush1.msra.mxu0 0.0
    %965 = vmatprep.subr.mxu0 0.0
    %966 = vmatpush1.msra.mxu0 0.0
    %967 = vmatprep.subr.mxu0 0.0
    %968 = vmatpush1.msra.mxu0 0.0
    %969 = vmatprep.subr.mxu0 0.0
    %970 = vmatpush1.msra.mxu0 0.0
    %971 = vmatprep.subr.mxu0 0.0
    %972 = vmatpush1.msra.mxu0 0.0
    %973 = vmatprep.subr.mxu0 0.0
    %974 = vmatpush1.msra.mxu0 0.0
    %975 = vmatprep.subr.mxu0 0.0
    %976 = vmatpush1.msra.mxu0 0.0
    %977 = vmatprep.subr.mxu0 0.0
    %978 = vmatpush1.msra.mxu0 0.0
    %979 = vmatprep.subr.mxu0 0.0
    %980 = vmatpush1.msra.mxu0 0.0
    %981 = vmatprep.subr.mxu0 0.0
    %982 = vmatpush1.msra.mxu0 0.0
    %983 = vmatprep.subr.mxu0 0.0
    %984 = vmatpush1.msra.mxu0 0.0
    %985 = vmatprep.subr.mxu0 0.0
    %986 = vmatpush1.msra.mxu0 0.0
    %987 = vmatprep.subr.mxu0 0.0
    %988 = vmatpush1.msra.mxu0 0.0
    %989 = vmatprep.subr.mxu0 0.0
    %990 = vmatpush1.msra.mxu0 0.0
    %991 = vmatprep.subr.mxu0 0.0
    %992 = vmatpush1.msra.mxu0 0.0
    %993 = vmatprep.subr.mxu0 0.0
    %994 = vmatpush1.msra.mxu0 0.0
    %995 = vmatprep.mubr.f32.mxu0 0.0
    %996 = vmatmul.mubr.f32.gmra.mrb[0].mxu0 %v929
    %v997 = vpop.f32.mrb[0].mxu0
    %v998 = vadd.f32 0.0, %v997
    %v999 = vpop.f32.mrb[0].mxu0
    %1000 = vdwg.mxu0
    %v1002 = vsel %vm190, %v776, 0
    %1004 = vmatprep.subr.mxu0 0.0
    %1005 = vmatpush1.msra.mxu0 %v179
    %1006 = vmatprep.subr.mxu0 0.0
    %1007 = vmatpush1.msra.mxu0 0.0
    %1008 = vmatprep.subr.mxu0 0.0
    %1009 = vmatpush1.msra.mxu0 0.0
    %1010 = vmatprep.subr.mxu0 0.0
    %1011 = vmatpush1.msra.mxu0 0.0
    %1012 = vmatprep.subr.mxu0 0.0
    %1013 = vmatpush1.msra.mxu0 0.0
    %1014 = vmatprep.subr.mxu0 0.0
    %1015 = vmatpush1.msra.mxu0 0.0
    %1016 = vmatprep.subr.mxu0 0.0
    %1017 = vmatpush1.msra.mxu0 0.0
    %1018 = vmatprep.subr.mxu0 0.0
    %1019 = vmatpush1.msra.mxu0 0.0
    %1020 = vmatprep.subr.mxu0 0.0
    %1021 = vmatpush1.msra.mxu0 0.0
    %1022 = vmatprep.subr.mxu0 0.0
    %1023 = vmatpush1.msra.mxu0 0.0
    %1024 = vmatprep.subr.mxu0 0.0
    %1025 = vmatpush1.msra.mxu0 0.0
    %1026 = vmatprep.subr.mxu0 0.0
    %1027 = vmatpush1.msra.mxu0 0.0
    %1028 = vmatprep.subr.mxu0 0.0
    %1029 = vmatpush1.msra.mxu0 0.0
    %1030 = vmatprep.subr.mxu0 0.0
    %1031 = vmatpush1.msra.mxu0 0.0
    %1032 = vmatprep.subr.mxu0 0.0
    %1033 = vmatpush1.msra.mxu0 0.0
    %1034 = vmatprep.subr.mxu0 0.0
    %1035 = vmatpush1.msra.mxu0 0.0
    %1036 = vmatprep.subr.mxu0 0.0
    %1037 = vmatpush1.msra.mxu0 0.0
    %1038 = vmatprep.subr.mxu0 0.0
    %1039 = vmatpush1.msra.mxu0 0.0
    %1040 = vmatprep.subr.mxu0 0.0
    %1041 = vmatpush1.msra.mxu0 0.0
    %1042 = vmatprep.subr.mxu0 0.0
    %1043 = vmatpush1.msra.mxu0 0.0
    %1044 = vmatprep.subr.mxu0 0.0
    %1045 = vmatpush1.msra.mxu0 0.0
    %1046 = vmatprep.subr.mxu0 0.0
    %1047 = vmatpush1.msra.mxu0 0.0
    %1048 = vmatprep.subr.mxu0 0.0
    %1049 = vmatpush1.msra.mxu0 0.0
    %1050 = vmatprep.subr.mxu0 0.0
    %1051 = vmatpush1.msra.mxu0 0.0
    %1052 = vmatprep.subr.mxu0 0.0
    %1053 = vmatpush1.msra.mxu0 0.0
    %1054 = vmatprep.subr.mxu0 0.0
    %1055 = vmatpush1.msra.mxu0 0.0
    %1056 = vmatprep.subr.mxu0 0.0
    %1057 = vmatpush1.msra.mxu0 0.0
    %1058 = vmatprep.subr.mxu0 0.0
    %1059 = vmatpush1.msra.mxu0 0.0
    %1060 = vmatprep.subr.mxu0 0.0
    %1061 = vmatpush1.msra.mxu0 0.0
    %1062 = vmatprep.subr.mxu0 0.0
    %1063 = vmatpush1.msra.mxu0 0.0
    %1064 = vmatprep.subr.mxu0 0.0
    %1065 = vmatpush1.msra.mxu0 0.0
    %1066 = vmatprep.subr.mxu0 0.0
    %1067 = vmatpush1.msra.mxu0 0.0
    %1068 = vmatprep.mubr.f32.mxu0 0.0
    %1069 = vmatmul.mubr.f32.gmra.mrb[0].mxu0 %v1002
    %v1070 = vpop.f32.mrb[0].mxu0
    %v1071 = vadd.f32 0.0, %v1070
    %v1072 = vpop.f32.mrb[0].mxu0
    %1073 = vdwg.mxu0
    %v1075 = vsel %vm190, %v852, 0
    %1077 = vmatprep.subr.mxu0 0.0
    %1078 = vmatpush1.msra.mxu0 %v180
    %1079 = vmatprep.subr.mxu0 0.0
    %1080 = vmatpush1.msra.mxu0 0.0
    %1081 = vmatprep.subr.mxu0 0.0
    %1082 = vmatpush1.msra.mxu0 0.0
    %1083 = vmatprep.subr.mxu0 0.0
    %1084 = vmatpush1.msra.mxu0 0.0
    %1085 = vmatprep.subr.mxu0 0.0
    %1086 = vmatpush1.msra.mxu0 0.0
    %1087 = vmatprep.subr.mxu0 0.0
    %1088 = vmatpush1.msra.mxu0 0.0
    %1089 = vmatprep.subr.mxu0 0.0
    %1090 = vmatpush1.msra.mxu0 0.0
    %1091 = vmatprep.subr.mxu0 0.0
    %1092 = vmatpush1.msra.mxu0 0.0
    %1093 = vmatprep.subr.mxu0 0.0
    %1094 = vmatpush1.msra.mxu0 0.0
    %1095 = vmatprep.subr.mxu0 0.0
    %1096 = vmatpush1.msra.mxu0 0.0
    %1097 = vmatprep.subr.mxu0 0.0
    %1098 = vmatpush1.msra.mxu0 0.0
    %1099 = vmatprep.subr.mxu0 0.0
    %1100 = vmatpush1.msra.mxu0 0.0
    %1101 = vmatprep.subr.mxu0 0.0
    %1102 = vmatpush1.msra.mxu0 0.0
    %1103 = vmatprep.subr.mxu0 0.0
    %1104 = vmatpush1.msra.mxu0 0.0
    %1105 = vmatprep.subr.mxu0 0.0
    %1106 = vmatpush1.msra.mxu0 0.0
    %1107 = vmatprep.subr.mxu0 0.0
    %1108 = vmatpush1.msra.mxu0 0.0
    %1109 = vmatprep.subr.mxu0 0.0
    %1110 = vmatpush1.msra.mxu0 0.0
    %1111 = vmatprep.subr.mxu0 0.0
    %1112 = vmatpush1.msra.mxu0 0.0
    %1113 = vmatprep.subr.mxu0 0.0
    %1114 = vmatpush1.msra.mxu0 0.0
    %1115 = vmatprep.subr.mxu0 0.0
    %1116 = vmatpush1.msra.mxu0 0.0
    %1117 = vmatprep.subr.mxu0 0.0
    %1118 = vmatpush1.msra.mxu0 0.0
    %1119 = vmatprep.subr.mxu0 0.0
    %1120 = vmatpush1.msra.mxu0 0.0
    %1121 = vmatprep.subr.mxu0 0.0
    %1122 = vmatpush1.msra.mxu0 0.0
    %1123 = vmatprep.subr.mxu0 0.0
    %1124 = vmatpush1.msra.mxu0 0.0
    %1125 = vmatprep.subr.mxu0 0.0
    %1126 = vmatpush1.msra.mxu0 0.0
    %1127 = vmatprep.subr.mxu0 0.0
    %1128 = vmatpush1.msra.mxu0 0.0
    %1129 = vmatprep.subr.mxu0 0.0
    %1130 = vmatpush1.msra.mxu0 0.0
    %1131 = vmatprep.subr.mxu0 0.0
    %1132 = vmatpush1.msra.mxu0 0.0
    %1133 = vmatprep.subr.mxu0 0.0
    %1134 = vmatpush1.msra.mxu0 0.0
    %1135 = vmatprep.subr.mxu0 0.0
    %1136 = vmatpush1.msra.mxu0 0.0
    %1137 = vmatprep.subr.mxu0 0.0
    %1138 = vmatpush1.msra.mxu0 0.0
    %1139 = vmatprep.subr.mxu0 0.0
    %1140 = vmatpush1.msra.mxu0 0.0
    %1141 = vmatprep.mubr.f32.mxu0 0.0
    %1142 = vmatmul.mubr.f32.gmra.mrb[0].mxu0 %v1075
    %v1143 = vpop.f32.mrb[0].mxu0
    %v1144 = vadd.f32 0.0, %v1143
    %v1145 = vpop.f32.mrb[0].mxu0
    %1146 = vdwg.mxu0
    %v1147 = vadd.f32 %v925, %v998
    %v1148 = vadd.f32 %v1147, %v1071
    %v1149 = vadd.f32 %v1148, %v1144
    %1151 = vrot.lane.b32.xlu0 %v174, 120
    %v1152 = vpop.permute.xlu0 %1151
    %1153 = vrot.lane.b32.xlu0 %v174, 112
    %v1154 = vpop.permute.xlu0 %1153
    %1155 = vrot.lane.b32.xlu0 %v174, 104
    %v1156 = vpop.permute.xlu0 %1155
    %1157 = vrot.lane.b32.xlu0 %v174, 96
    %v1158 = vpop.permute.xlu0 %1157
    %v1159 = vsel %vm190, %v174, 0
    %v1161 = vsel %vm190, %v1158, 0
    %1163 = vmatprep.subr.mxu0 0.0
    %1164 = vmatpush1.xpose.msra.mxu0 %v1161
    %1165 = vmatprep.subr.mxu0 0.0
    %1166 = vmatpush1.xpose.msra.mxu0 0.0
    %1167 = vmatprep.subr.mxu0 0.0
    %1168 = vmatpush1.xpose.msra.mxu0 0.0
    %1169 = vmatprep.subr.mxu0 0.0
    %1170 = vmatpush1.xpose.msra.mxu0 0.0
    %1171 = vmatprep.subr.mxu0 0.0
    %1172 = vmatpush1.xpose.msra.mxu0 0.0
    %1173 = vmatprep.subr.mxu0 0.0
    %1174 = vmatpush1.xpose.msra.mxu0 0.0
    %1175 = vmatprep.subr.mxu0 0.0
    %1176 = vmatpush1.xpose.msra.mxu0 0.0
    %1177 = vmatprep.subr.mxu0 0.0
    %1178 = vmatpush1.xpose.msra.mxu0 0.0
    %1179 = vmatprep.subr.mxu0 0.0
    %1180 = vmatpush1.xpose.msra.mxu0 0.0
    %1181 = vmatprep.subr.mxu0 0.0
    %1182 = vmatpush1.xpose.msra.mxu0 0.0
    %1183 = vmatprep.subr.mxu0 0.0
    %1184 = vmatpush1.xpose.msra.mxu0 0.0
    %1185 = vmatprep.subr.mxu0 0.0
    %1186 = vmatpush1.xpose.msra.mxu0 0.0
    %1187 = vmatprep.subr.mxu0 0.0
    %1188 = vmatpush1.xpose.msra.mxu0 0.0
    %1189 = vmatprep.subr.mxu0 0.0
    %1190 = vmatpush1.xpose.msra.mxu0 0.0
    %1191 = vmatprep.subr.mxu0 0.0
    %1192 = vmatpush1.xpose.msra.mxu0 0.0
    %1193 = vmatprep.subr.mxu0 0.0
    %1194 = vmatpush1.xpose.msra.mxu0 0.0
    %1195 = vmatprep.subr.mxu0 0.0
    %1196 = vmatpush1.xpose.msra.mxu0 0.0
    %1197 = vmatprep.subr.mxu0 0.0
    %1198 = vmatpush1.xpose.msra.mxu0 0.0
    %1199 = vmatprep.subr.mxu0 0.0
    %1200 = vmatpush1.xpose.msra.mxu0 0.0
    %1201 = vmatprep.subr.mxu0 0.0
    %1202 = vmatpush1.xpose.msra.mxu0 0.0
    %1203 = vmatprep.subr.mxu0 0.0
    %1204 = vmatpush1.xpose.msra.mxu0 0.0
    %1205 = vmatprep.subr.mxu0 0.0
    %1206 = vmatpush1.xpose.msra.mxu0 0.0
    %1207 = vmatprep.subr.mxu0 0.0
    %1208 = vmatpush1.xpose.msra.mxu0 0.0
    %1209 = vmatprep.subr.mxu0 0.0
    %1210 = vmatpush1.xpose.msra.mxu0 0.0
    %1211 = vmatprep.subr.mxu0 0.0
    %1212 = vmatpush1.xpose.msra.mxu0 0.0
    %1213 = vmatprep.subr.mxu0 0.0
    %1214 = vmatpush1.xpose.msra.mxu0 0.0
    %1215 = vmatprep.subr.mxu0 0.0
    %1216 = vmatpush1.xpose.msra.mxu0 0.0
    %1217 = vmatprep.subr.mxu0 0.0
    %1218 = vmatpush1.xpose.msra.mxu0 0.0
    %1219 = vmatprep.subr.mxu0 0.0
    %1220 = vmatpush1.xpose.msra.mxu0 0.0
    %1221 = vmatprep.subr.mxu0 0.0
    %1222 = vmatpush1.xpose.msra.mxu0 0.0
    %1223 = vmatprep.subr.mxu0 0.0
    %1224 = vmatpush1.xpose.msra.mxu0 0.0
    %1225 = vmatprep.subr.mxu0 0.0
    %1226 = vmatpush1.xpose.msra.mxu0 0.0
    %1227 = vmatprep.mubr.f32.mxu0 0.0
    %1228 = vmatmul.mubr.f32.gmra.mrb[0].mxu0 %v1159
    %v1229 = vpop.f32.mrb[0].mxu0
    %v1230 = vadd.f32 0.0, %v1229
    %v1231 = vpop.f32.mrb[0].mxu0
    %1232 = vdwg.mxu0
    %1233 = vrot.lane.b32.xlu0 %v1152, 96
    %v1234 = vpop.permute.xlu0 %1233
    %v1235 = vsel %vm190, %v1152, 0
    %v1237 = vsel %vm190, %v1234, 0
    %1239 = vmatprep.subr.mxu0 0.0
    %1240 = vmatpush1.xpose.msra.mxu0 %v1237
    %1241 = vmatprep.subr.mxu0 0.0
    %1242 = vmatpush1.xpose.msra.mxu0 0.0
    %1243 = vmatprep.subr.mxu0 0.0
    %1244 = vmatpush1.xpose.msra.mxu0 0.0
    %1245 = vmatprep.subr.mxu0 0.0
    %1246 = vmatpush1.xpose.msra.mxu0 0.0
    %1247 = vmatprep.subr.mxu0 0.0
    %1248 = vmatpush1.xpose.msra.mxu0 0.0
    %1249 = vmatprep.subr.mxu0 0.0
    %1250 = vmatpush1.xpose.msra.mxu0 0.0
    %1251 = vmatprep.subr.mxu0 0.0
    %1252 = vmatpush1.xpose.msra.mxu0 0.0
    %1253 = vmatprep.subr.mxu0 0.0
    %1254 = vmatpush1.xpose.msra.mxu0 0.0
    %1255 = vmatprep.subr.mxu0 0.0
    %1256 = vmatpush1.xpose.msra.mxu0 0.0
    %1257 = vmatprep.subr.mxu0 0.0
    %1258 = vmatpush1.xpose.msra.mxu0 0.0
    %1259 = vmatprep.subr.mxu0 0.0
    %1260 = vmatpush1.xpose.msra.mxu0 0.0
    %1261 = vmatprep.subr.mxu0 0.0
    %1262 = vmatpush1.xpose.msra.mxu0 0.0
    %1263 = vmatprep.subr.mxu0 0.0
    %1264 = vmatpush1.xpose.msra.mxu0 0.0
    %1265 = vmatprep.subr.mxu0 0.0
    %1266 = vmatpush1.xpose.msra.mxu0 0.0
    %1267 = vmatprep.subr.mxu0 0.0
    %1268 = vmatpush1.xpose.msra.mxu0 0.0
    %1269 = vmatprep.subr.mxu0 0.0
    %1270 = vmatpush1.xpose.msra.mxu0 0.0
    %1271 = vmatprep.subr.mxu0 0.0
    %1272 = vmatpush1.xpose.msra.mxu0 0.0
    %1273 = vmatprep.subr.mxu0 0.0
    %1274 = vmatpush1.xpose.msra.mxu0 0.0
    %1275 = vmatprep.subr.mxu0 0.0
    %1276 = vmatpush1.xpose.msra.mxu0 0.0
    %1277 = vmatprep.subr.mxu0 0.0
    %1278 = vmatpush1.xpose.msra.mxu0 0.0
    %1279 = vmatprep.subr.mxu0 0.0
    %1280 = vmatpush1.xpose.msra.mxu0 0.0
    %1281 = vmatprep.subr.mxu0 0.0
    %1282 = vmatpush1.xpose.msra.mxu0 0.0
    %1283 = vmatprep.subr.mxu0 0.0
    %1284 = vmatpush1.xpose.msra.mxu0 0.0
    %1285 = vmatprep.subr.mxu0 0.0
    %1286 = vmatpush1.xpose.msra.mxu0 0.0
    %1287 = vmatprep.subr.mxu0 0.0
    %1288 = vmatpush1.xpose.msra.mxu0 0.0
    %1289 = vmatprep.subr.mxu0 0.0
    %1290 = vmatpush1.xpose.msra.mxu0 0.0
    %1291 = vmatprep.subr.mxu0 0.0
    %1292 = vmatpush1.xpose.msra.mxu0 0.0
    %1293 = vmatprep.subr.mxu0 0.0
    %1294 = vmatpush1.xpose.msra.mxu0 0.0
    %1295 = vmatprep.subr.mxu0 0.0
    %1296 = vmatpush1.xpose.msra.mxu0 0.0
    %1297 = vmatprep.subr.mxu0 0.0
    %1298 = vmatpush1.xpose.msra.mxu0 0.0
    %1299 = vmatprep.subr.mxu0 0.0
    %1300 = vmatpush1.xpose.msra.mxu0 0.0
    %1301 = vmatprep.subr.mxu0 0.0
    %1302 = vmatpush1.xpose.msra.mxu0 0.0
    %1303 = vmatprep.mubr.f32.mxu0 0.0
    %1304 = vmatmul.mubr.f32.gmra.mrb[0].mxu0 %v1235
    %v1305 = vpop.f32.mrb[0].mxu0
    %v1306 = vadd.f32 0.0, %v1305
    %v1307 = vpop.f32.mrb[0].mxu0
    %1308 = vdwg.mxu0
    %1309 = vrot.lane.b32.xlu0 %v1154, 96
    %v1310 = vpop.permute.xlu0 %1309
    %v1311 = vsel %vm190, %v1154, 0
    %v1313 = vsel %vm190, %v1310, 0
    %1315 = vmatprep.subr.mxu0 0.0
    %1316 = vmatpush1.xpose.msra.mxu0 %v1313
    %1317 = vmatprep.subr.mxu0 0.0
    %1318 = vmatpush1.xpose.msra.mxu0 0.0
    %1319 = vmatprep.subr.mxu0 0.0
    %1320 = vmatpush1.xpose.msra.mxu0 0.0
    %1321 = vmatprep.subr.mxu0 0.0
    %1322 = vmatpush1.xpose.msra.mxu0 0.0
    %1323 = vmatprep.subr.mxu0 0.0
    %1324 = vmatpush1.xpose.msra.mxu0 0.0
    %1325 = vmatprep.subr.mxu0 0.0
    %1326 = vmatpush1.xpose.msra.mxu0 0.0
    %1327 = vmatprep.subr.mxu0 0.0
    %1328 = vmatpush1.xpose.msra.mxu0 0.0
    %1329 = vmatprep.subr.mxu0 0.0
    %1330 = vmatpush1.xpose.msra.mxu0 0.0
    %1331 = vmatprep.subr.mxu0 0.0
    %1332 = vmatpush1.xpose.msra.mxu0 0.0
    %1333 = vmatprep.subr.mxu0 0.0
    %1334 = vmatpush1.xpose.msra.mxu0 0.0
    %1335 = vmatprep.subr.mxu0 0.0
    %1336 = vmatpush1.xpose.msra.mxu0 0.0
    %1337 = vmatprep.subr.mxu0 0.0
    %1338 = vmatpush1.xpose.msra.mxu0 0.0
    %1339 = vmatprep.subr.mxu0 0.0
    %1340 = vmatpush1.xpose.msra.mxu0 0.0
    %1341 = vmatprep.subr.mxu0 0.0
    %1342 = vmatpush1.xpose.msra.mxu0 0.0
    %1343 = vmatprep.subr.mxu0 0.0
    %1344 = vmatpush1.xpose.msra.mxu0 0.0
    %1345 = vmatprep.subr.mxu0 0.0
    %1346 = vmatpush1.xpose.msra.mxu0 0.0
    %1347 = vmatprep.subr.mxu0 0.0
    %1348 = vmatpush1.xpose.msra.mxu0 0.0
    %1349 = vmatprep.subr.mxu0 0.0
    %1350 = vmatpush1.xpose.msra.mxu0 0.0
    %1351 = vmatprep.subr.mxu0 0.0
    %1352 = vmatpush1.xpose.msra.mxu0 0.0
    %1353 = vmatprep.subr.mxu0 0.0
    %1354 = vmatpush1.xpose.msra.mxu0 0.0
    %1355 = vmatprep.subr.mxu0 0.0
    %1356 = vmatpush1.xpose.msra.mxu0 0.0
    %1357 = vmatprep.subr.mxu0 0.0
    %1358 = vmatpush1.xpose.msra.mxu0 0.0
    %1359 = vmatprep.subr.mxu0 0.0
    %1360 = vmatpush1.xpose.msra.mxu0 0.0
    %1361 = vmatprep.subr.mxu0 0.0
    %1362 = vmatpush1.xpose.msra.mxu0 0.0
    %1363 = vmatprep.subr.mxu0 0.0
    %1364 = vmatpush1.xpose.msra.mxu0 0.0
    %1365 = vmatprep.subr.mxu0 0.0
    %1366 = vmatpush1.xpose.msra.mxu0 0.0
    %1367 = vmatprep.subr.mxu0 0.0
    %1368 = vmatpush1.xpose.msra.mxu0 0.0
    %1369 = vmatprep.subr.mxu0 0.0
    %1370 = vmatpush1.xpose.msra.mxu0 0.0
    %1371 = vmatprep.subr.mxu0 0.0
    %1372 = vmatpush1.xpose.msra.mxu0 0.0
    %1373 = vmatprep.subr.mxu0 0.0
    %1374 = vmatpush1.xpose.msra.mxu0 0.0
    %1375 = vmatprep.subr.mxu0 0.0
    %1376 = vmatpush1.xpose.msra.mxu0 0.0
    %1377 = vmatprep.subr.mxu0 0.0
    %1378 = vmatpush1.xpose.msra.mxu0 0.0
    %1379 = vmatprep.mubr.f32.mxu0 0.0
    %1380 = vmatmul.mubr.f32.gmra.mrb[0].mxu0 %v1311
    %v1381 = vpop.f32.mrb[0].mxu0
    %v1382 = vadd.f32 0.0, %v1381
    %v1383 = vpop.f32.mrb[0].mxu0
    %1384 = vdwg.mxu0
    %1385 = vrot.lane.b32.xlu0 %v1156, 96
    %v1386 = vpop.permute.xlu0 %1385
    %v1387 = vsel %vm190, %v1156, 0
    %v1389 = vsel %vm190, %v1386, 0
    %1391 = vmatprep.subr.mxu0 0.0
    %1392 = vmatpush1.xpose.msra.mxu0 %v1389
    %1393 = vmatprep.subr.mxu0 0.0
    %1394 = vmatpush1.xpose.msra.mxu0 0.0
    %1395 = vmatprep.subr.mxu0 0.0
    %1396 = vmatpush1.xpose.msra.mxu0 0.0
    %1397 = vmatprep.subr.mxu0 0.0
    %1398 = vmatpush1.xpose.msra.mxu0 0.0
    %1399 = vmatprep.subr.mxu0 0.0
    %1400 = vmatpush1.xpose.msra.mxu0 0.0
    %1401 = vmatprep.subr.mxu0 0.0
    %1402 = vmatpush1.xpose.msra.mxu0 0.0
    %1403 = vmatprep.subr.mxu0 0.0
    %1404 = vmatpush1.xpose.msra.mxu0 0.0
    %1405 = vmatprep.subr.mxu0 0.0
    %1406 = vmatpush1.xpose.msra.mxu0 0.0
    %1407 = vmatprep.subr.mxu0 0.0
    %1408 = vmatpush1.xpose.msra.mxu0 0.0
    %1409 = vmatprep.subr.mxu0 0.0
    %1410 = vmatpush1.xpose.msra.mxu0 0.0
    %1411 = vmatprep.subr.mxu0 0.0
    %1412 = vmatpush1.xpose.msra.mxu0 0.0
    %1413 = vmatprep.subr.mxu0 0.0
    %1414 = vmatpush1.xpose.msra.mxu0 0.0
    %1415 = vmatprep.subr.mxu0 0.0
    %1416 = vmatpush1.xpose.msra.mxu0 0.0
    %1417 = vmatprep.subr.mxu0 0.0
    %1418 = vmatpush1.xpose.msra.mxu0 0.0
    %1419 = vmatprep.subr.mxu0 0.0
    %1420 = vmatpush1.xpose.msra.mxu0 0.0
    %1421 = vmatprep.subr.mxu0 0.0
    %1422 = vmatpush1.xpose.msra.mxu0 0.0
    %1423 = vmatprep.subr.mxu0 0.0
    %1424 = vmatpush1.xpose.msra.mxu0 0.0
    %1425 = vmatprep.subr.mxu0 0.0
    %1426 = vmatpush1.xpose.msra.mxu0 0.0
    %1427 = vmatprep.subr.mxu0 0.0
    %1428 = vmatpush1.xpose.msra.mxu0 0.0
    %1429 = vmatprep.subr.mxu0 0.0
    %1430 = vmatpush1.xpose.msra.mxu0 0.0
    %1431 = vmatprep.subr.mxu0 0.0
    %1432 = vmatpush1.xpose.msra.mxu0 0.0
    %1433 = vmatprep.subr.mxu0 0.0
    %1434 = vmatpush1.xpose.msra.mxu0 0.0
    %1435 = vmatprep.subr.mxu0 0.0
    %1436 = vmatpush1.xpose.msra.mxu0 0.0
    %1437 = vmatprep.subr.mxu0 0.0
    %1438 = vmatpush1.xpose.msra.mxu0 0.0
    %1439 = vmatprep.subr.mxu0 0.0
    %1440 = vmatpush1.xpose.msra.mxu0 0.0
    %1441 = vmatprep.subr.mxu0 0.0
    %1442 = vmatpush1.xpose.msra.mxu0 0.0
    %1443 = vmatprep.subr.mxu0 0.0
    %1444 = vmatpush1.xpose.msra.mxu0 0.0
    %1445 = vmatprep.subr.mxu0 0.0
    %1446 = vmatpush1.xpose.msra.mxu0 0.0
    %1447 = vmatprep.subr.mxu0 0.0
    %1448 = vmatpush1.xpose.msra.mxu0 0.0
    %1449 = vmatprep.subr.mxu0 0.0
    %1450 = vmatpush1.xpose.msra.mxu0 0.0
    %1451 = vmatprep.subr.mxu0 0.0
    %1452 = vmatpush1.xpose.msra.mxu0 0.0
    %1453 = vmatprep.subr.mxu0 0.0
    %1454 = vmatpush1.xpose.msra.mxu0 0.0
    %1455 = vmatprep.mubr.f32.mxu0 0.0
    %1456 = vmatmul.mubr.f32.gmra.mrb[0].mxu0 %v1387
    %v1457 = vpop.f32.mrb[0].mxu0
    %v1458 = vadd.f32 0.0, %v1457
    %v1459 = vpop.f32.mrb[0].mxu0
    %1460 = vdwg.mxu0
    %v1461 = vmul.f32 %v1230, 0.35355338
    %v1462 = vmul.f32 %v1306, 0.35355338
    %v1463 = vmul.f32 %v1382, 0.35355338
    %v1464 = vmul.f32 %v1458, 0.35355338
    %v1466 = vlaneseq
    %v1467 = vshrl.u32 %v1466, 7
    %v1468 = vsub.s32 0, %v1467
    %v1469 = vrot.slane %v79, %v1468
    %v1471 = vadd.f32 %v1461, %v1469
    %v1472 = vadd.f32 %v1462, %v1469
    %v1473 = vadd.f32 %v1463, %v1469
    %v1474 = vadd.f32 %v1464, %v1469
    %v1475 = vsel %vm190, %v1471, -inf
    %1476 = vmax.xlane.f32.xlu0 %v1475
    %v1477 = vpop.xlane.xlu0 %1476
    %v1478 = vsel %vm190, %v1472, -inf
    %1479 = vmax.xlane.f32.xlu0 %v1478
    %v1480 = vpop.xlane.xlu0 %1479
    %v1481 = vsel %vm190, %v1473, -inf
    %1482 = vmax.xlane.f32.xlu0 %v1481
    %v1483 = vpop.xlane.xlu0 %1482
    %v1484 = vsel %vm190, %v1474, -inf
    %1485 = vmax.xlane.f32.xlu0 %v1484
    %v1486 = vpop.xlane.xlu0 %1485
    %v1487 = vsub.f32 %v1471, %v1477
    %v1488 = vsub.f32 %v1472, %v1480
    %v1489 = vsub.f32 %v1473, %v1483
    %v1490 = vsub.f32 %v1474, %v1486
    %v1491 = vmul.f32 %v1487, 1.442695
    %v1492 = vpow.pop %v1491
    %v1493 = vmul.f32 %v1488, 1.442695
    %v1494 = vpow.pop %v1493
    %v1495 = vmul.f32 %v1489, 1.442695
    %v1496 = vpow.pop %v1495
    %v1497 = vmul.f32 %v1490, 1.442695
    %v1498 = vpow.pop %v1497
    %v1499 = vsel %vm190, %v1492, 0.0
    %1500 = vadd.xlane.f32.xlu0 %v1499
    %v1501 = vpop.xlane.xlu0 %1500
    %v1502 = vsel %vm190, %v1494, 0.0
    %1503 = vadd.xlane.f32.xlu0 %v1502
    %v1504 = vpop.xlane.xlu0 %1503
    %v1505 = vsel %vm190, %v1496, 0.0
    %1506 = vadd.xlane.f32.xlu0 %v1505
    %v1507 = vpop.xlane.xlu0 %1506
    %v1508 = vsel %vm190, %v1498, 0.0
    %1509 = vadd.xlane.f32.xlu0 %v1508
    %v1510 = vpop.xlane.xlu0 %1509
    %v1511 = vrcp.pop %v1501
    %v1512 = vmul.f32 %v1492, %v1511
    %v1513 = vrcp.pop %v1504
    %v1514 = vmul.f32 %v1494, %v1513
    %v1515 = vrcp.pop %v1507
    %v1516 = vmul.f32 %v1496, %v1515
    %v1517 = vrcp.pop %v1510
    %v1518 = vmul.f32 %v1498, %v1517
    %1519 = vrot.lane.b32.xlu0 %v174, 64
    %v1520 = vpop.permute.xlu0 %1519
    %v1523 = vsel %vm190, %v1512, 0
    %1525 = vmatprep.subr.mxu0 0.0
    %1526 = vmatpush1.msra.mxu0 %v1520
    %1527 = vmatprep.subr.mxu0 0.0
    %1528 = vmatpush1.msra.mxu0 0.0
    %1529 = vmatprep.subr.mxu0 0.0
    %1530 = vmatpush1.msra.mxu0 0.0
    %1531 = vmatprep.subr.mxu0 0.0
    %1532 = vmatpush1.msra.mxu0 0.0
    %1533 = vmatprep.subr.mxu0 0.0
    %1534 = vmatpush1.msra.mxu0 0.0
    %1535 = vmatprep.subr.mxu0 0.0
    %1536 = vmatpush1.msra.mxu0 0.0
    %1537 = vmatprep.subr.mxu0 0.0
    %1538 = vmatpush1.msra.mxu0 0.0
    %1539 = vmatprep.subr.mxu0 0.0
    %1540 = vmatpush1.msra.mxu0 0.0
    %1541 = vmatprep.subr.mxu0 0.0
    %1542 = vmatpush1.msra.mxu0 0.0
    %1543 = vmatprep.subr.mxu0 0.0
    %1544 = vmatpush1.msra.mxu0 0.0
    %1545 = vmatprep.subr.mxu0 0.0
    %1546 = vmatpush1.msra.mxu0 0.0
    %1547 = vmatprep.subr.mxu0 0.0
    %1548 = vmatpush1.msra.mxu0 0.0
    %1549 = vmatprep.subr.mxu0 0.0
    %1550 = vmatpush1.msra.mxu0 0.0
    %1551 = vmatprep.subr.mxu0 0.0
    %1552 = vmatpush1.msra.mxu0 0.0
    %1553 = vmatprep.subr.mxu0 0.0
    %1554 = vmatpush1.msra.mxu0 0.0
    %1555 = vmatprep.subr.mxu0 0.0
    %1556 = vmatpush1.msra.mxu0 0.0
    %1557 = vmatprep.subr.mxu0 0.0
    %1558 = vmatpush1.msra.mxu0 0.0
    %1559 = vmatprep.subr.mxu0 0.0
    %1560 = vmatpush1.msra.mxu0 0.0
    %1561 = vmatprep.subr.mxu0 0.0
    %1562 = vmatpush1.msra.mxu0 0.0
    %1563 = vmatprep.subr.mxu0 0.0
    %1564 = vmatpush1.msra.mxu0 0.0
    %1565 = vmatprep.subr.mxu0 0.0
    %1566 = vmatpush1.msra.mxu0 0.0
    %1567 = vmatprep.subr.mxu0 0.0
    %1568 = vmatpush1.msra.mxu0 0.0
    %1569 = vmatprep.subr.mxu0 0.0
    %1570 = vmatpush1.msra.mxu0 0.0
    %1571 = vmatprep.subr.mxu0 0.0
    %1572 = vmatpush1.msra.mxu0 0.0
    %1573 = vmatprep.subr.mxu0 0.0
    %1574 = vmatpush1.msra.mxu0 0.0
    %1575 = vmatprep.subr.mxu0 0.0
    %1576 = vmatpush1.msra.mxu0 0.0
    %1577 = vmatprep.subr.mxu0 0.0
    %1578 = vmatpush1.msra.mxu0 0.0
    %1579 = vmatprep.subr.mxu0 0.0
    %1580 = vmatpush1.msra.mxu0 0.0
    %1581 = vmatprep.subr.mxu0 0.0
    %1582 = vmatpush1.msra.mxu0 0.0
    %1583 = vmatprep.subr.mxu0 0.0
    %1584 = vmatpush1.msra.mxu0 0.0
    %1585 = vmatprep.subr.mxu0 0.0
    %1586 = vmatpush1.msra.mxu0 0.0
    %1587 = vmatprep.subr.mxu0 0.0
    %1588 = vmatpush1.msra.mxu0 0.0
    %1589 = vmatprep.mubr.f32.mxu0 0.0
    %1590 = vmatmul.mubr.f32.gmra.mrb[0].mxu0 %v1523
    %v1591 = vpop.f32.mrb[0].mxu0
    %v1592 = vadd.f32 0.0, %v1591
    %v1593 = vpop.f32.mrb[0].mxu0
    %1594 = vdwg.mxu0
    %1595 = vrot.lane.b32.xlu0 %v1152, 64
    %v1596 = vpop.permute.xlu0 %1595
    %v1599 = vsel %vm190, %v1514, 0
    %1601 = vmatprep.subr.mxu0 0.0
    %1602 = vmatpush1.msra.mxu0 %v1596
    %1603 = vmatprep.subr.mxu0 0.0
    %1604 = vmatpush1.msra.mxu0 0.0
    %1605 = vmatprep.subr.mxu0 0.0
    %1606 = vmatpush1.msra.mxu0 0.0
    %1607 = vmatprep.subr.mxu0 0.0
    %1608 = vmatpush1.msra.mxu0 0.0
    %1609 = vmatprep.subr.mxu0 0.0
    %1610 = vmatpush1.msra.mxu0 0.0
    %1611 = vmatprep.subr.mxu0 0.0
    %1612 = vmatpush1.msra.mxu0 0.0
    %1613 = vmatprep.subr.mxu0 0.0
    %1614 = vmatpush1.msra.mxu0 0.0
    %1615 = vmatprep.subr.mxu0 0.0
    %1616 = vmatpush1.msra.mxu0 0.0
    %1617 = vmatprep.subr.mxu0 0.0
    %1618 = vmatpush1.msra.mxu0 0.0
    %1619 = vmatprep.subr.mxu0 0.0
    %1620 = vmatpush1.msra.mxu0 0.0
    %1621 = vmatprep.subr.mxu0 0.0
    %1622 = vmatpush1.msra.mxu0 0.0
    %1623 = vmatprep.subr.mxu0 0.0
    %1624 = vmatpush1.msra.mxu0 0.0
    %1625 = vmatprep.subr.mxu0 0.0
    %1626 = vmatpush1.msra.mxu0 0.0
    %1627 = vmatprep.subr.mxu0 0.0
    %1628 = vmatpush1.msra.mxu0 0.0
    %1629 = vmatprep.subr.mxu0 0.0
    %1630 = vmatpush1.msra.mxu0 0.0
    %1631 = vmatprep.subr.mxu0 0.0
    %1632 = vmatpush1.msra.mxu0 0.0
    %1633 = vmatprep.subr.mxu0 0.0
    %1634 = vmatpush1.msra.mxu0 0.0
    %1635 = vmatprep.subr.mxu0 0.0
    %1636 = vmatpush1.msra.mxu0 0.0
    %1637 = vmatprep.subr.mxu0 0.0
    %1638 = vmatpush1.msra.mxu0 0.0
    %1639 = vmatprep.subr.mxu0 0.0
    %1640 = vmatpush1.msra.mxu0 0.0
    %1641 = vmatprep.subr.mxu0 0.0
    %1642 = vmatpush1.msra.mxu0 0.0
    %1643 = vmatprep.subr.mxu0 0.0
    %1644 = vmatpush1.msra.mxu0 0.0
    %1645 = vmatprep.subr.mxu0 0.0
    %1646 = vmatpush1.msra.mxu0 0.0
    %1647 = vmatprep.subr.mxu0 0.0
    %1648 = vmatpush1.msra.mxu0 0.0
    %1649 = vmatprep.subr.mxu0 0.0
    %1650 = vmatpush1.msra.mxu0 0.0
    %1651 = vmatprep.subr.mxu0 0.0
    %1652 = vmatpush1.msra.mxu0 0.0
    %1653 = vmatprep.subr.mxu0 0.0
    %1654 = vmatpush1.msra.mxu0 0.0
    %1655 = vmatprep.subr.mxu0 0.0
    %1656 = vmatpush1.msra.mxu0 0.0
    %1657 = vmatprep.subr.mxu0 0.0
    %1658 = vmatpush1.msra.mxu0 0.0
    %1659 = vmatprep.subr.mxu0 0.0
    %1660 = vmatpush1.msra.mxu0 0.0
    %1661 = vmatprep.subr.mxu0 0.0
    %1662 = vmatpush1.msra.mxu0 0.0
    %1663 = vmatprep.subr.mxu0 0.0
    %1664 = vmatpush1.msra.mxu0 0.0
    %1665 = vmatprep.mubr.f32.mxu0 0.0
    %1666 = vmatmul.mubr.f32.gmra.mrb[0].mxu0 %v1599
    %v1667 = vpop.f32.mrb[0].mxu0
    %v1668 = vadd.f32 0.0, %v1667
    %v1669 = vpop.f32.mrb[0].mxu0
    %1670 = vdwg.mxu0
    %1671 = vrot.lane.b32.xlu0 %v1154, 64
    %v1672 = vpop.permute.xlu0 %1671
    %v1675 = vsel %vm190, %v1516, 0
    %1677 = vmatprep.subr.mxu0 0.0
    %1678 = vmatpush1.msra.mxu0 %v1672
    %1679 = vmatprep.subr.mxu0 0.0
    %1680 = vmatpush1.msra.mxu0 0.0
    %1681 = vmatprep.subr.mxu0 0.0
    %1682 = vmatpush1.msra.mxu0 0.0
    %1683 = vmatprep.subr.mxu0 0.0
    %1684 = vmatpush1.msra.mxu0 0.0
    %1685 = vmatprep.subr.mxu0 0.0
    %1686 = vmatpush1.msra.mxu0 0.0
    %1687 = vmatprep.subr.mxu0 0.0
    %1688 = vmatpush1.msra.mxu0 0.0
    %1689 = vmatprep.subr.mxu0 0.0
    %1690 = vmatpush1.msra.mxu0 0.0
    %1691 = vmatprep.subr.mxu0 0.0
    %1692 = vmatpush1.msra.mxu0 0.0
    %1693 = vmatprep.subr.mxu0 0.0
    %1694 = vmatpush1.msra.mxu0 0.0
    %1695 = vmatprep.subr.mxu0 0.0
    %1696 = vmatpush1.msra.mxu0 0.0
    %1697 = vmatprep.subr.mxu0 0.0
    %1698 = vmatpush1.msra.mxu0 0.0
    %1699 = vmatprep.subr.mxu0 0.0
    %1700 = vmatpush1.msra.mxu0 0.0
    %1701 = vmatprep.subr.mxu0 0.0
    %1702 = vmatpush1.msra.mxu0 0.0
    %1703 = vmatprep.subr.mxu0 0.0
    %1704 = vmatpush1.msra.mxu0 0.0
    %1705 = vmatprep.subr.mxu0 0.0
    %1706 = vmatpush1.msra.mxu0 0.0
    %1707 = vmatprep.subr.mxu0 0.0
    %1708 = vmatpush1.msra.mxu0 0.0
    %1709 = vmatprep.subr.mxu0 0.0
    %1710 = vmatpush1.msra.mxu0 0.0
    %1711 = vmatprep.subr.mxu0 0.0
    %1712 = vmatpush1.msra.mxu0 0.0
    %1713 = vmatprep.subr.mxu0 0.0
    %1714 = vmatpush1.msra.mxu0 0.0
    %1715 = vmatprep.subr.mxu0 0.0
    %1716 = vmatpush1.msra.mxu0 0.0
    %1717 = vmatprep.subr.mxu0 0.0
    %1718 = vmatpush1.msra.mxu0 0.0
    %1719 = vmatprep.subr.mxu0 0.0
    %1720 = vmatpush1.msra.mxu0 0.0
    %1721 = vmatprep.subr.mxu0 0.0
    %1722 = vmatpush1.msra.mxu0 0.0
    %1723 = vmatprep.subr.mxu0 0.0
    %1724 = vmatpush1.msra.mxu0 0.0
    %1725 = vmatprep.subr.mxu0 0.0
    %1726 = vmatpush1.msra.mxu0 0.0
    %1727 = vmatprep.subr.mxu0 0.0
    %1728 = vmatpush1.msra.mxu0 0.0
    %1729 = vmatprep.subr.mxu0 0.0
    %1730 = vmatpush1.msra.mxu0 0.0
    %1731 = vmatprep.subr.mxu0 0.0
    %1732 = vmatpush1.msra.mxu0 0.0
    %1733 = vmatprep.subr.mxu0 0.0
    %1734 = vmatpush1.msra.mxu0 0.0
    %1735 = vmatprep.subr.mxu0 0.0
    %1736 = vmatpush1.msra.mxu0 0.0
    %1737 = vmatprep.subr.mxu0 0.0
    %1738 = vmatpush1.msra.mxu0 0.0
    %1739 = vmatprep.subr.mxu0 0.0
    %1740 = vmatpush1.msra.mxu0 0.0
    %1741 = vmatprep.mubr.f32.mxu0 0.0
    %1742 = vmatmul.mubr.f32.gmra.mrb[0].mxu0 %v1675
    %v1743 = vpop.f32.mrb[0].mxu0
    %v1744 = vadd.f32 0.0, %v1743
    %v1745 = vpop.f32.mrb[0].mxu0
    %1746 = vdwg.mxu0
    %1747 = vrot.lane.b32.xlu0 %v1156, 64
    %v1748 = vpop.permute.xlu0 %1747
    %v1751 = vsel %vm190, %v1518, 0
    %1753 = vmatprep.subr.mxu0 0.0
    %1754 = vmatpush1.msra.mxu0 %v1748
    %1755 = vmatprep.subr.mxu0 0.0
    %1756 = vmatpush1.msra.mxu0 0.0
    %1757 = vmatprep.subr.mxu0 0.0
    %1758 = vmatpush1.msra.mxu0 0.0
    %1759 = vmatprep.subr.mxu0 0.0
    %1760 = vmatpush1.msra.mxu0 0.0
    %1761 = vmatprep.subr.mxu0 0.0
    %1762 = vmatpush1.msra.mxu0 0.0
    %1763 = vmatprep.subr.mxu0 0.0
    %1764 = vmatpush1.msra.mxu0 0.0
    %1765 = vmatprep.subr.mxu0 0.0
    %1766 = vmatpush1.msra.mxu0 0.0
    %1767 = vmatprep.subr.mxu0 0.0
    %1768 = vmatpush1.msra.mxu0 0.0
    %1769 = vmatprep.subr.mxu0 0.0
    %1770 = vmatpush1.msra.mxu0 0.0
    %1771 = vmatprep.subr.mxu0 0.0
    %1772 = vmatpush1.msra.mxu0 0.0
    %1773 = vmatprep.subr.mxu0 0.0
    %1774 = vmatpush1.msra.mxu0 0.0
    %1775 = vmatprep.subr.mxu0 0.0
    %1776 = vmatpush1.msra.mxu0 0.0
    %1777 = vmatprep.subr.mxu0 0.0
    %1778 = vmatpush1.msra.mxu0 0.0
    %1779 = vmatprep.subr.mxu0 0.0
    %1780 = vmatpush1.msra.mxu0 0.0
    %1781 = vmatprep.subr.mxu0 0.0
    %1782 = vmatpush1.msra.mxu0 0.0
    %1783 = vmatprep.subr.mxu0 0.0
    %1784 = vmatpush1.msra.mxu0 0.0
    %1785 = vmatprep.subr.mxu0 0.0
    %1786 = vmatpush1.msra.mxu0 0.0
    %1787 = vmatprep.subr.mxu0 0.0
    %1788 = vmatpush1.msra.mxu0 0.0
    %1789 = vmatprep.subr.mxu0 0.0
    %1790 = vmatpush1.msra.mxu0 0.0
    %1791 = vmatprep.subr.mxu0 0.0
    %1792 = vmatpush1.msra.mxu0 0.0
    %1793 = vmatprep.subr.mxu0 0.0
    %1794 = vmatpush1.msra.mxu0 0.0
    %1795 = vmatprep.subr.mxu0 0.0
    %1796 = vmatpush1.msra.mxu0 0.0
    %1797 = vmatprep.subr.mxu0 0.0
    %1798 = vmatpush1.msra.mxu0 0.0
    %1799 = vmatprep.subr.mxu0 0.0
    %1800 = vmatpush1.msra.mxu0 0.0
    %1801 = vmatprep.subr.mxu0 0.0
    %1802 = vmatpush1.msra.mxu0 0.0
    %1803 = vmatprep.subr.mxu0 0.0
    %1804 = vmatpush1.msra.mxu0 0.0
    %1805 = vmatprep.subr.mxu0 0.0
    %1806 = vmatpush1.msra.mxu0 0.0
    %1807 = vmatprep.subr.mxu0 0.0
    %1808 = vmatpush1.msra.mxu0 0.0
    %1809 = vmatprep.subr.mxu0 0.0
    %1810 = vmatpush1.msra.mxu0 0.0
    %1811 = vmatprep.subr.mxu0 0.0
    %1812 = vmatpush1.msra.mxu0 0.0
    %1813 = vmatprep.subr.mxu0 0.0
    %1814 = vmatpush1.msra.mxu0 0.0
    %1815 = vmatprep.subr.mxu0 0.0
    %1816 = vmatpush1.msra.mxu0 0.0
    %1817 = vmatprep.mubr.f32.mxu0 0.0
    %1818 = vmatmul.mubr.f32.gmra.mrb[0].mxu0 %v1751
    %v1819 = vpop.f32.mrb[0].mxu0
    %v1820 = vadd.f32 0.0, %v1819
    %v1821 = vpop.f32.mrb[0].mxu0
    %1822 = vdwg.mxu0
    %v1824 = vsel %vm190, %v1592, 0
    %1826 = vmatprep.subr.mxu0 0.0
    %1827 = vmatpush1.msra.mxu0 %v177
    %1828 = vmatprep.subr.mxu0 0.0
    %1829 = vmatpush1.msra.mxu0 0.0
    %1830 = vmatprep.subr.mxu0 0.0
    %1831 = vmatpush1.msra.mxu0 0.0
    %1832 = vmatprep.subr.mxu0 0.0
    %1833 = vmatpush1.msra.mxu0 0.0
    %1834 = vmatprep.subr.mxu0 0.0
    %1835 = vmatpush1.msra.mxu0 0.0
    %1836 = vmatprep.subr.mxu0 0.0
    %1837 = vmatpush1.msra.mxu0 0.0
    %1838 = vmatprep.subr.mxu0 0.0
    %1839 = vmatpush1.msra.mxu0 0.0
    %1840 = vmatprep.subr.mxu0 0.0
    %1841 = vmatpush1.msra.mxu0 0.0
    %1842 = vmatprep.subr.mxu0 0.0
    %1843 = vmatpush1.msra.mxu0 0.0
    %1844 = vmatprep.subr.mxu0 0.0
    %1845 = vmatpush1.msra.mxu0 0.0
    %1846 = vmatprep.subr.mxu0 0.0
    %1847 = vmatpush1.msra.mxu0 0.0
    %1848 = vmatprep.subr.mxu0 0.0
    %1849 = vmatpush1.msra.mxu0 0.0
    %1850 = vmatprep.subr.mxu0 0.0
    %1851 = vmatpush1.msra.mxu0 0.0
    %1852 = vmatprep.subr.mxu0 0.0
    %1853 = vmatpush1.msra.mxu0 0.0
    %1854 = vmatprep.subr.mxu0 0.0
    %1855 = vmatpush1.msra.mxu0 0.0
    %1856 = vmatprep.subr.mxu0 0.0
    %1857 = vmatpush1.msra.mxu0 0.0
    %1858 = vmatprep.subr.mxu0 0.0
    %1859 = vmatpush1.msra.mxu0 0.0
    %1860 = vmatprep.subr.mxu0 0.0
    %1861 = vmatpush1.msra.mxu0 0.0
    %1862 = vmatprep.subr.mxu0 0.0
    %1863 = vmatpush1.msra.mxu0 0.0
    %1864 = vmatprep.subr.mxu0 0.0
    %1865 = vmatpush1.msra.mxu0 0.0
    %1866 = vmatprep.subr.mxu0 0.0
    %1867 = vmatpush1.msra.mxu0 0.0
    %1868 = vmatprep.subr.mxu0 0.0
    %1869 = vmatpush1.msra.mxu0 0.0
    %1870 = vmatprep.subr.mxu0 0.0
    %1871 = vmatpush1.msra.mxu0 0.0
    %1872 = vmatprep.subr.mxu0 0.0
    %1873 = vmatpush1.msra.mxu0 0.0
    %1874 = vmatprep.subr.mxu0 0.0
    %1875 = vmatpush1.msra.mxu0 0.0
    %1876 = vmatprep.subr.mxu0 0.0
    %1877 = vmatpush1.msra.mxu0 0.0
    %1878 = vmatprep.subr.mxu0 0.0
    %1879 = vmatpush1.msra.mxu0 0.0
    %1880 = vmatprep.subr.mxu0 0.0
    %1881 = vmatpush1.msra.mxu0 0.0
    %1882 = vmatprep.subr.mxu0 0.0
    %1883 = vmatpush1.msra.mxu0 0.0
    %1884 = vmatprep.subr.mxu0 0.0
    %1885 = vmatpush1.msra.mxu0 0.0
    %1886 = vmatprep.subr.mxu0 0.0
    %1887 = vmatpush1.msra.mxu0 0.0
    %1888 = vmatprep.subr.mxu0 0.0
    %1889 = vmatpush1.msra.mxu0 0.0
    %1890 = vmatprep.mubr.f32.mxu0 0.0
    %1891 = vmatmul.mubr.f32.gmra.mrb[0].mxu0 %v1824
    %v1892 = vpop.f32.mrb[0].mxu0
    %v1893 = vadd.f32 0.0, %v1892
    %v1894 = vpop.f32.mrb[0].mxu0
    %1895 = vdwg.mxu0
    %v1897 = vsel %vm190, %v1668, 0
    %1899 = vmatprep.subr.mxu0 0.0
    %1900 = vmatpush1.msra.mxu0 %v178
    %1901 = vmatprep.subr.mxu0 0.0
    %1902 = vmatpush1.msra.mxu0 0.0
    %1903 = vmatprep.subr.mxu0 0.0
    %1904 = vmatpush1.msra.mxu0 0.0
    %1905 = vmatprep.subr.mxu0 0.0
    %1906 = vmatpush1.msra.mxu0 0.0
    %1907 = vmatprep.subr.mxu0 0.0
    %1908 = vmatpush1.msra.mxu0 0.0
    %1909 = vmatprep.subr.mxu0 0.0
    %1910 = vmatpush1.msra.mxu0 0.0
    %1911 = vmatprep.subr.mxu0 0.0
    %1912 = vmatpush1.msra.mxu0 0.0
    %1913 = vmatprep.subr.mxu0 0.0
    %1914 = vmatpush1.msra.mxu0 0.0
    %1915 = vmatprep.subr.mxu0 0.0
    %1916 = vmatpush1.msra.mxu0 0.0
    %1917 = vmatprep.subr.mxu0 0.0
    %1918 = vmatpush1.msra.mxu0 0.0
    %1919 = vmatprep.subr.mxu0 0.0
    %1920 = vmatpush1.msra.mxu0 0.0
    %1921 = vmatprep.subr.mxu0 0.0
    %1922 = vmatpush1.msra.mxu0 0.0
    %1923 = vmatprep.subr.mxu0 0.0
    %1924 = vmatpush1.msra.mxu0 0.0
    %1925 = vmatprep.subr.mxu0 0.0
    %1926 = vmatpush1.msra.mxu0 0.0
    %1927 = vmatprep.subr.mxu0 0.0
    %1928 = vmatpush1.msra.mxu0 0.0
    %1929 = vmatprep.subr.mxu0 0.0
    %1930 = vmatpush1.msra.mxu0 0.0
    %1931 = vmatprep.subr.mxu0 0.0
    %1932 = vmatpush1.msra.mxu0 0.0
    %1933 = vmatprep.subr.mxu0 0.0
    %1934 = vmatpush1.msra.mxu0 0.0
    %1935 = vmatprep.subr.mxu0 0.0
    %1936 = vmatpush1.msra.mxu0 0.0
    %1937 = vmatprep.subr.mxu0 0.0
    %1938 = vmatpush1.msra.mxu0 0.0
    %1939 = vmatprep.subr.mxu0 0.0
    %1940 = vmatpush1.msra.mxu0 0.0
    %1941 = vmatprep.subr.mxu0 0.0
    %1942 = vmatpush1.msra.mxu0 0.0
    %1943 = vmatprep.subr.mxu0 0.0
    %1944 = vmatpush1.msra.mxu0 0.0
    %1945 = vmatprep.subr.mxu0 0.0
    %1946 = vmatpush1.msra.mxu0 0.0
    %1947 = vmatprep.subr.mxu0 0.0
    %1948 = vmatpush1.msra.mxu0 0.0
    %1949 = vmatprep.subr.mxu0 0.0
    %1950 = vmatpush1.msra.mxu0 0.0
    %1951 = vmatprep.subr.mxu0 0.0
    %1952 = vmatpush1.msra.mxu0 0.0
    %1953 = vmatprep.subr.mxu0 0.0
    %1954 = vmatpush1.msra.mxu0 0.0
    %1955 = vmatprep.subr.mxu0 0.0
    %1956 = vmatpush1.msra.mxu0 0.0
    %1957 = vmatprep.subr.mxu0 0.0
    %1958 = vmatpush1.msra.mxu0 0.0
    %1959 = vmatprep.subr.mxu0 0.0
    %1960 = vmatpush1.msra.mxu0 0.0
    %1961 = vmatprep.subr.mxu0 0.0
    %1962 = vmatpush1.msra.mxu0 0.0
    %1963 = vmatprep.mubr.f32.mxu0 0.0
    %1964 = vmatmul.mubr.f32.gmra.mrb[0].mxu0 %v1897
    %v1965 = vpop.f32.mrb[0].mxu0
    %v1966 = vadd.f32 0.0, %v1965
    %v1967 = vpop.f32.mrb[0].mxu0
    %1968 = vdwg.mxu0
    %v1970 = vsel %vm190, %v1744, 0
    %1972 = vmatprep.subr.mxu0 0.0
    %1973 = vmatpush1.msra.mxu0 %v179
    %1974 = vmatprep.subr.mxu0 0.0
    %1975 = vmatpush1.msra.mxu0 0.0
    %1976 = vmatprep.subr.mxu0 0.0
    %1977 = vmatpush1.msra.mxu0 0.0
    %1978 = vmatprep.subr.mxu0 0.0
    %1979 = vmatpush1.msra.mxu0 0.0
    %1980 = vmatprep.subr.mxu0 0.0
    %1981 = vmatpush1.msra.mxu0 0.0
    %1982 = vmatprep.subr.mxu0 0.0
    %1983 = vmatpush1.msra.mxu0 0.0
    %1984 = vmatprep.subr.mxu0 0.0
    %1985 = vmatpush1.msra.mxu0 0.0
    %1986 = vmatprep.subr.mxu0 0.0
    %1987 = vmatpush1.msra.mxu0 0.0
    %1988 = vmatprep.subr.mxu0 0.0
    %1989 = vmatpush1.msra.mxu0 0.0
    %1990 = vmatprep.subr.mxu0 0.0
    %1991 = vmatpush1.msra.mxu0 0.0
    %1992 = vmatprep.subr.mxu0 0.0
    %1993 = vmatpush1.msra.mxu0 0.0
    %1994 = vmatprep.subr.mxu0 0.0
    %1995 = vmatpush1.msra.mxu0 0.0
    %1996 = vmatprep.subr.mxu0 0.0
    %1997 = vmatpush1.msra.mxu0 0.0
    %1998 = vmatprep.subr.mxu0 0.0
    %1999 = vmatpush1.msra.mxu0 0.0
    %2000 = vmatprep.subr.mxu0 0.0
    %2001 = vmatpush1.msra.mxu0 0.0
    %2002 = vmatprep.subr.mxu0 0.0
    %2003 = vmatpush1.msra.mxu0 0.0
    %2004 = vmatprep.subr.mxu0 0.0
    %2005 = vmatpush1.msra.mxu0 0.0
    %2006 = vmatprep.subr.mxu0 0.0
    %2007 = vmatpush1.msra.mxu0 0.0
    %2008 = vmatprep.subr.mxu0 0.0
    %2009 = vmatpush1.msra.mxu0 0.0
    %2010 = vmatprep.subr.mxu0 0.0
    %2011 = vmatpush1.msra.mxu0 0.0
    %2012 = vmatprep.subr.mxu0 0.0
    %2013 = vmatpush1.msra.mxu0 0.0
    %2014 = vmatprep.subr.mxu0 0.0
    %2015 = vmatpush1.msra.mxu0 0.0
    %2016 = vmatprep.subr.mxu0 0.0
    %2017 = vmatpush1.msra.mxu0 0.0
    %2018 = vmatprep.subr.mxu0 0.0
    %2019 = vmatpush1.msra.mxu0 0.0
    %2020 = vmatprep.subr.mxu0 0.0
    %2021 = vmatpush1.msra.mxu0 0.0
    %2022 = vmatprep.subr.mxu0 0.0
    %2023 = vmatpush1.msra.mxu0 0.0
    %2024 = vmatprep.subr.mxu0 0.0
    %2025 = vmatpush1.msra.mxu0 0.0
    %2026 = vmatprep.subr.mxu0 0.0
    %2027 = vmatpush1.msra.mxu0 0.0
    %2028 = vmatprep.subr.mxu0 0.0
    %2029 = vmatpush1.msra.mxu0 0.0
    %2030 = vmatprep.subr.mxu0 0.0
    %2031 = vmatpush1.msra.mxu0 0.0
    %2032 = vmatprep.subr.mxu0 0.0
    %2033 = vmatpush1.msra.mxu0 0.0
    %2034 = vmatprep.subr.mxu0 0.0
    %2035 = vmatpush1.msra.mxu0 0.0
    %2036 = vmatprep.mubr.f32.mxu0 0.0
    %2037 = vmatmul.mubr.f32.gmra.mrb[0].mxu0 %v1970
    %v2038 = vpop.f32.mrb[0].mxu0
    %v2039 = vadd.f32 0.0, %v2038
    %v2040 = vpop.f32.mrb[0].mxu0
    %2041 = vdwg.mxu0
    %v2043 = vsel %vm190, %v1820, 0
    %2045 = vmatprep.subr.mxu0 0.0
    %2046 = vmatpush1.msra.mxu0 %v180
    %2047 = vmatprep.subr.mxu0 0.0
    %2048 = vmatpush1.msra.mxu0 0.0
    %2049 = vmatprep.subr.mxu0 0.0
    %2050 = vmatpush1.msra.mxu0 0.0
    %2051 = vmatprep.subr.mxu0 0.0
    %2052 = vmatpush1.msra.mxu0 0.0
    %2053 = vmatprep.subr.mxu0 0.0
    %2054 = vmatpush1.msra.mxu0 0.0
    %2055 = vmatprep.subr.mxu0 0.0
    %2056 = vmatpush1.msra.mxu0 0.0
    %2057 = vmatprep.subr.mxu0 0.0
    %2058 = vmatpush1.msra.mxu0 0.0
    %2059 = vmatprep.subr.mxu0 0.0
    %2060 = vmatpush1.msra.mxu0 0.0
    %2061 = vmatprep.subr.mxu0 0.0
    %2062 = vmatpush1.msra.mxu0 0.0
    %2063 = vmatprep.subr.mxu0 0.0
    %2064 = vmatpush1.msra.mxu0 0.0
    %2065 = vmatprep.subr.mxu0 0.0
    %2066 = vmatpush1.msra.mxu0 0.0
    %2067 = vmatprep.subr.mxu0 0.0
    %2068 = vmatpush1.msra.mxu0 0.0
    %2069 = vmatprep.subr.mxu0 0.0
    %2070 = vmatpush1.msra.mxu0 0.0
    %2071 = vmatprep.subr.mxu0 0.0
    %2072 = vmatpush1.msra.mxu0 0.0
    %2073 = vmatprep.subr.mxu0 0.0
    %2074 = vmatpush1.msra.mxu0 0.0
    %2075 = vmatprep.subr.mxu0 0.0
    %2076 = vmatpush1.msra.mxu0 0.0
    %2077 = vmatprep.subr.mxu0 0.0
    %2078 = vmatpush1.msra.mxu0 0.0
    %2079 = vmatprep.subr.mxu0 0.0
    %2080 = vmatpush1.msra.mxu0 0.0
    %2081 = vmatprep.subr.mxu0 0.0
    %2082 = vmatpush1.msra.mxu0 0.0
    %2083 = vmatprep.subr.mxu0 0.0
    %2084 = vmatpush1.msra.mxu0 0.0
    %2085 = vmatprep.subr.mxu0 0.0
    %2086 = vmatpush1.msra.mxu0 0.0
    %2087 = vmatprep.subr.mxu0 0.0
    %2088 = vmatpush1.msra.mxu0 0.0
    %2089 = vmatprep.subr.mxu0 0.0
    %2090 = vmatpush1.msra.mxu0 0.0
    %2091 = vmatprep.subr.mxu0 0.0
    %2092 = vmatpush1.msra.mxu0 0.0
    %2093 = vmatprep.subr.mxu0 0.0
    %2094 = vmatpush1.msra.mxu0 0.0
    %2095 = vmatprep.subr.mxu0 0.0
    %2096 = vmatpush1.msra.mxu0 0.0
    %2097 = vmatprep.subr.mxu0 0.0
    %2098 = vmatpush1.msra.mxu0 0.0
    %2099 = vmatprep.subr.mxu0 0.0
    %2100 = vmatpush1.msra.mxu0 0.0
    %2101 = vmatprep.subr.mxu0 0.0
    %2102 = vmatpush1.msra.mxu0 0.0
    %2103 = vmatprep.subr.mxu0 0.0
    %2104 = vmatpush1.msra.mxu0 0.0
    %2105 = vmatprep.subr.mxu0 0.0
    %2106 = vmatpush1.msra.mxu0 0.0
    %2107 = vmatprep.subr.mxu0 0.0
    %2108 = vmatpush1.msra.mxu0 0.0
    %2109 = vmatprep.mubr.f32.mxu0 0.0
    %2110 = vmatmul.mubr.f32.gmra.mrb[0].mxu0 %v2043
    %v2111 = vpop.f32.mrb[0].mxu0
    %v2112 = vadd.f32 0.0, %v2111
    %v2113 = vpop.f32.mrb[0].mxu0
    %2114 = vdwg.mxu0
    %v2115 = vadd.f32 %v1893, %v1966
    %v2116 = vadd.f32 %v2115, %v2039
    %v2117 = vadd.f32 %v2116, %v2112
    %v2118 = vlaneseq
    %v2119 = vshrl.u32 %v2118, 7
    %v2120 = vsub.s32 0, %v2119
    %v2121 = vrot.slane %v81, %v2120
    %v2122 = vadd.f32 %v1149, %v2121
    %v2123 = vadd.f32 %v2117, %v2121
    %v2124 = vadd.f32 %v72, %v2122
    %v2125 = vadd.f32 %v73, %v2123
    %v2126 = vsel %vm34, %v2124, 0.0
    %2127 = vadd.xlane.f32.xlu0 %v2126
    %v2128 = vpop.xlane.xlu0 %2127
    %v2129 = vsel %vm34, %v2125, 0.0
    %2130 = vadd.xlane.f32.xlu0 %v2129
    %v2131 = vpop.xlane.xlu0 %2130
    %v2132 = vmul.f32 %v2128, %v41
    %v2133 = vmul.f32 %v2131, %v41
    %v2134 = vsub.f32 %v2124, %v2132
    %v2135 = vsub.f32 %v2125, %v2133
    %v2136 = vmul.f32 %v2134, %v2134
    %v2137 = vmul.f32 %v2135, %v2135
    %v2138 = vsel %vm34, %v2136, 0.0
    %2139 = vadd.xlane.f32.xlu0 %v2138
    %v2140 = vpop.xlane.xlu0 %2139
    %v2141 = vsel %vm34, %v2137, 0.0
    %2142 = vadd.xlane.f32.xlu0 %v2141
    %v2143 = vpop.xlane.xlu0 %2142
    %v2144 = vmul.f32 %v2140, %v41
    %v2145 = vmul.f32 %v2143, %v41
    %v2146 = vadd.f32 %v2144, 1e-12
    %v2147 = vadd.f32 %v2145, 1e-12
    %v2148 = vrsqrt.pop %v2146
    %v2149 = vrsqrt.pop %v2147
    %v2150 = vmul.f32 %v2134, %v2148
    %v2151 = vmul.f32 %v2135, %v2149
    %v2152 = vlaneseq
    %v2153 = vshrl.u32 %v2152, 7
    %v2154 = vsub.s32 0, %v2153
    %v2155 = vrot.slane %v82, %v2154
    %v2156 = vmul.f32 %v2150, %v2155
    %v2157 = vmul.f32 %v2151, %v2155
    %v2158 = vlaneseq
    %v2159 = vshrl.u32 %v2158, 7
    %v2160 = vsub.s32 0, %v2159
    %v2161 = vrot.slane %v83, %v2160
    %v2162 = vadd.f32 %v2156, %v2161
    %v2163 = vadd.f32 %v2157, %v2161
    %v2164 = vld [vmem:[%s5] sm:$0xff]
    %v2165 = vld [vmem:[%s5 + $0x8] sm:$0xff]
    %v2166 = vld [vmem:[%s5 + $0x10] sm:$0xff]
    %v2167 = vld [vmem:[%s5 + $0x18] sm:$0xff]
    %v2168 = vlaneseq
    %v2169 = vshrl.u32 %v2168, 7
    %v2170 = vsub.s32 0, %v2169
    %v2171 = vrot.slane %v84, %v2170
    %v2173 = vsel %vm34, %v2162, 0
    %v2176 = vsel %vm34, %v2163, 0
    %2178 = vmatprep.subr.mxu0 0.0
    %2179 = vmatpush1.msra.mxu0 %v2164
    %2180 = vmatprep.subr.mxu0 0.0
    %2181 = vmatpush1.msra.mxu0 %v2165
    %2182 = vmatprep.subr.mxu0 0.0
    %2183 = vmatpush1.msra.mxu0 %v2166
    %2184 = vmatprep.subr.mxu0 0.0
    %2185 = vmatpush1.msra.mxu0 %v2167
    %2186 = vmatprep.subr.mxu0 0.0
    %2187 = vmatpush1.msra.mxu0 0.0
    %2188 = vmatprep.subr.mxu0 0.0
    %2189 = vmatpush1.msra.mxu0 0.0
    %2190 = vmatprep.subr.mxu0 0.0
    %2191 = vmatpush1.msra.mxu0 0.0
    %2192 = vmatprep.subr.mxu0 0.0
    %2193 = vmatpush1.msra.mxu0 0.0
    %2194 = vmatprep.subr.mxu0 0.0
    %2195 = vmatpush1.msra.mxu0 0.0
    %2196 = vmatprep.subr.mxu0 0.0
    %2197 = vmatpush1.msra.mxu0 0.0
    %2198 = vmatprep.subr.mxu0 0.0
    %2199 = vmatpush1.msra.mxu0 0.0
    %2200 = vmatprep.subr.mxu0 0.0
    %2201 = vmatpush1.msra.mxu0 0.0
    %2202 = vmatprep.subr.mxu0 0.0
    %2203 = vmatpush1.msra.mxu0 0.0
    %2204 = vmatprep.subr.mxu0 0.0
    %2205 = vmatpush1.msra.mxu0 0.0
    %2206 = vmatprep.subr.mxu0 0.0
    %2207 = vmatpush1.msra.mxu0 0.0
    %2208 = vmatprep.subr.mxu0 0.0
    %2209 = vmatpush1.msra.mxu0 0.0
    %2210 = vmatprep.subr.mxu0 0.0
    %2211 = vmatpush1.msra.mxu0 0.0
    %2212 = vmatprep.subr.mxu0 0.0
    %2213 = vmatpush1.msra.mxu0 0.0
    %2214 = vmatprep.subr.mxu0 0.0
    %2215 = vmatpush1.msra.mxu0 0.0
    %2216 = vmatprep.subr.mxu0 0.0
    %2217 = vmatpush1.msra.mxu0 0.0
    %2218 = vmatprep.subr.mxu0 0.0
    %2219 = vmatpush1.msra.mxu0 0.0
    %2220 = vmatprep.subr.mxu0 0.0
    %2221 = vmatpush1.msra.mxu0 0.0
    %2222 = vmatprep.subr.mxu0 0.0
    %2223 = vmatpush1.msra.mxu0 0.0
    %2224 = vmatprep.subr.mxu0 0.0
    %2225 = vmatpush1.msra.mxu0 0.0
    %2226 = vmatprep.subr.mxu0 0.0
    %2227 = vmatpush1.msra.mxu0 0.0
    %2228 = vmatprep.subr.mxu0 0.0
    %2229 = vmatpush1.msra.mxu0 0.0
    %2230 = vmatprep.subr.mxu0 0.0
    %2231 = vmatpush1.msra.mxu0 0.0
    %2232 = vmatprep.subr.mxu0 0.0
    %2233 = vmatpush1.msra.mxu0 0.0
    %2234 = vmatprep.subr.mxu0 0.0
    %2235 = vmatpush1.msra.mxu0 0.0
    %2236 = vmatprep.subr.mxu0 0.0
    %2237 = vmatpush1.msra.mxu0 0.0
    %2238 = vmatprep.subr.mxu0 0.0
    %2239 = vmatpush1.msra.mxu0 0.0
    %2240 = vmatprep.subr.mxu0 0.0
    %2241 = vmatpush1.msra.mxu0 0.0
    %2242 = vmatprep.mubr.f32.mxu0 0.0
    %2243 = vmatmul.mubr.f32.gmra.mrb[0].mxu0 %v2173
    %v2244 = vpop.f32.mrb[0].mxu0
    %v2245 = vadd.f32 %v2171, %v2244
    %v2246 = vpop.f32.mrb[0].mxu0
    %2247 = vmatprep.mubr.f32.mxu0 0.0
    %2248 = vmatmul.mubr.f32.gmra.mrb[0].mxu0 %v2176
    %v2249 = vpop.f32.mrb[0].mxu0
    %v2250 = vadd.f32 %v2171, %v2249
    %v2251 = vpop.f32.mrb[0].mxu0
    %2252 = vdwg.mxu0
    %v2253 = vmul.f32 %v2245, 0.5
    %v2254 = vmul.f32 %v2250, 0.5
    %v2255 = vmul.f32 %v2245, 0.70710677
    %v2256 = vmul.f32 %v2250, 0.70710677
    %vm2257 = vcmp.ge.f32.partialorder %v2255, 0.0
    %vm2258 = vcmp.ge.f32.partialorder %v2256, 0.0
    %v2259 = vsel %vm2257, 1.0, -1.0
    %v2260 = vsel %vm2258, 1.0, -1.0
    %v2261 = vand.u32 2147483647, %v2255
    %v2262 = vand.u32 2147483647, %v2256
    %v2263 = vmul.f32 %v2261, 0.3275911
    %v2264 = vmul.f32 %v2262, 0.3275911
    %v2265 = vadd.f32 %v2263, 1.0
    %v2266 = vadd.f32 %v2264, 1.0
    %v2267 = vrcp.pop %v2265
    %v2268 = vmul.f32 1.0, %v2267
    %v2269 = vrcp.pop %v2266
    %v2270 = vmul.f32 1.0, %v2269
    %v2271 = vmul.f32 %v2268, 1.0614054
    %v2272 = vmul.f32 %v2270, 1.0614054
    %v2273 = vadd.f32 %v2271, -1.4531521
    %v2274 = vadd.f32 %v2272, -1.4531521
    %v2275 = vmul.f32 %v2273, %v2268
    %v2276 = vmul.f32 %v2274, %v2270
    %v2277 = vadd.f32 %v2275, 1.4214138
    %v2278 = vadd.f32 %v2276, 1.4214138
    %v2279 = vmul.f32 %v2277, %v2268
    %v2280 = vmul.f32 %v2278, %v2270
    %v2281 = vadd.f32 %v2279, -0.28449672
    %v2282 = vadd.f32 %v2280, -0.28449672
    %v2283 = vmul.f32 %v2281, %v2268
    %v2284 = vmul.f32 %v2282, %v2270
    %v2285 = vadd.f32 %v2283, 0.2548296
    %v2286 = vadd.f32 %v2284, 0.2548296
    %v2287 = vmul.f32 %v2285, %v2268
    %v2288 = vmul.f32 %v2286, %v2270
    %v2289 = vsub.f32 0.0, %v2261
    %v2290 = vsub.f32 0.0, %v2262
    %v2291 = vmul.f32 %v2289, %v2261
    %v2292 = vmul.f32 %v2290, %v2262
    %v2293 = vmul.f32 %v2291, 1.442695
    %v2294 = vpow.pop %v2293
    %v2295 = vmul.f32 %v2292, 1.442695
    %v2296 = vpow.pop %v2295
    %v2297 = vmul.f32 %v2287, %v2294
    %v2298 = vmul.f32 %v2288, %v2296
    %v2299 = vsub.f32 1.0, %v2297
    %v2300 = vsub.f32 1.0, %v2298
    %v2301 = vmul.f32 %v2259, %v2299
    %v2302 = vmul.f32 %v2260, %v2300
    %v2303 = vadd.f32 %v2301, 1.0
    %v2304 = vadd.f32 %v2302, 1.0
    %v2305 = vmul.f32 %v2253, %v2303
    %v2306 = vmul.f32 %v2254, %v2304
    %v2307 = vld [vmem:[%s6] sm:$0xff]
    %v2308 = vld [vmem:[%s6 + $0x8] sm:$0xff]
    %v2309 = vld [vmem:[%s6 + $0x10] sm:$0xff]
    %v2310 = vld [vmem:[%s6 + $0x18] sm:$0xff]
    %v2311 = vld [vmem:[%s6 + $0x20] sm:$0xff]
    %v2312 = vld [vmem:[%s6 + $0x28] sm:$0xff]
    %v2313 = vld [vmem:[%s6 + $0x30] sm:$0xff]
    %v2314 = vld [vmem:[%s6 + $0x38] sm:$0xff]
    %v2315 = vlaneseq
    %v2316 = vshrl.u32 %v2315, 7
    %v2317 = vsub.s32 0, %v2316
    %v2318 = vrot.slane %v85, %v2317
    %vm2319 = vcmask 523264
    %v2321 = vsel %vm2319, %v2305, 0
    %v2324 = vsel %vm2319, %v2306, 0
    %2326 = vmatprep.subr.mxu0 0.0
    %2327 = vmatpush1.msra.mxu0 %v2307
    %2328 = vmatprep.subr.mxu0 0.0
    %2329 = vmatpush1.msra.mxu0 %v2308
    %2330 = vmatprep.subr.mxu0 0.0
    %2331 = vmatpush1.msra.mxu0 %v2309
    %2332 = vmatprep.subr.mxu0 0.0
    %2333 = vmatpush1.msra.mxu0 %v2310
    %2334 = vmatprep.subr.mxu0 0.0
    %2335 = vmatpush1.msra.mxu0 %v2311
    %2336 = vmatprep.subr.mxu0 0.0
    %2337 = vmatpush1.msra.mxu0 %v2312
    %2338 = vmatprep.subr.mxu0 0.0
    %2339 = vmatpush1.msra.mxu0 %v2313
    %2340 = vmatprep.subr.mxu0 0.0
    %2341 = vmatpush1.msra.mxu0 %v2314
    %2342 = vmatprep.subr.mxu0 0.0
    %2343 = vmatpush1.msra.mxu0 0.0
    %2344 = vmatprep.subr.mxu0 0.0
    %2345 = vmatpush1.msra.mxu0 0.0
    %2346 = vmatprep.subr.mxu0 0.0
    %2347 = vmatpush1.msra.mxu0 0.0
    %2348 = vmatprep.subr.mxu0 0.0
    %2349 = vmatpush1.msra.mxu0 0.0
    %2350 = vmatprep.subr.mxu0 0.0
    %2351 = vmatpush1.msra.mxu0 0.0
    %2352 = vmatprep.subr.mxu0 0.0
    %2353 = vmatpush1.msra.mxu0 0.0
    %2354 = vmatprep.subr.mxu0 0.0
    %2355 = vmatpush1.msra.mxu0 0.0
    %2356 = vmatprep.subr.mxu0 0.0
    %2357 = vmatpush1.msra.mxu0 0.0
    %2358 = vmatprep.subr.mxu0 0.0
    %2359 = vmatpush1.msra.mxu0 0.0
    %2360 = vmatprep.subr.mxu0 0.0
    %2361 = vmatpush1.msra.mxu0 0.0
    %2362 = vmatprep.subr.mxu0 0.0
    %2363 = vmatpush1.msra.mxu0 0.0
    %2364 = vmatprep.subr.mxu0 0.0
    %2365 = vmatpush1.msra.mxu0 0.0
    %2366 = vmatprep.subr.mxu0 0.0
    %2367 = vmatpush1.msra.mxu0 0.0
    %2368 = vmatprep.subr.mxu0 0.0
    %2369 = vmatpush1.msra.mxu0 0.0
    %2370 = vmatprep.subr.mxu0 0.0
    %2371 = vmatpush1.msra.mxu0 0.0
    %2372 = vmatprep.subr.mxu0 0.0
    %2373 = vmatpush1.msra.mxu0 0.0
    %2374 = vmatprep.subr.mxu0 0.0
    %2375 = vmatpush1.msra.mxu0 0.0
    %2376 = vmatprep.subr.mxu0 0.0
    %2377 = vmatpush1.msra.mxu0 0.0
    %2378 = vmatprep.subr.mxu0 0.0
    %2379 = vmatpush1.msra.mxu0 0.0
    %2380 = vmatprep.subr.mxu0 0.0
    %2381 = vmatpush1.msra.mxu0 0.0
    %2382 = vmatprep.subr.mxu0 0.0
    %2383 = vmatpush1.msra.mxu0 0.0
    %2384 = vmatprep.subr.mxu0 0.0
    %2385 = vmatpush1.msra.mxu0 0.0
    %2386 = vmatprep.subr.mxu0 0.0
    %2387 = vmatpush1.msra.mxu0 0.0
    %2388 = vmatprep.subr.mxu0 0.0
    %2389 = vmatpush1.msra.mxu0 0.0
    %2390 = vmatprep.mubr.f32.mxu0 0.0
    %2391 = vmatmul.mubr.f32.gmra.mrb[0].mxu0 %v2321
    %v2392 = vpop.f32.mrb[0].mxu0
    %v2393 = vadd.f32 %v2318, %v2392
    %v2394 = vpop.f32.mrb[0].mxu0
    %2395 = vmatprep.mubr.f32.mxu0 0.0
    %2396 = vmatmul.mubr.f32.gmra.mrb[0].mxu0 %v2324
    %v2397 = vpop.f32.mrb[0].mxu0
    %v2398 = vadd.f32 %v2318, %v2397
    %v2399 = vpop.f32.mrb[0].mxu0
    %2400 = vdwg.mxu0
    %v2401 = vadd.f32 %v2162, %v2393
    %v2402 = vadd.f32 %v2163, %v2398
    %v2403 = vsel %vm34, %v2401, 0.0
    %2404 = vadd.xlane.f32.xlu0 %v2403
    %v2405 = vpop.xlane.xlu0 %2404
    %v2406 = vsel %vm34, %v2402, 0.0
    %2407 = vadd.xlane.f32.xlu0 %v2406
    %v2408 = vpop.xlane.xlu0 %2407
    %v2409 = vmul.f32 %v2405, %v41
    %v2410 = vmul.f32 %v2408, %v41
    %v2411 = vsub.f32 %v2401, %v2409
    %v2412 = vsub.f32 %v2402, %v2410
    %v2413 = vmul.f32 %v2411, %v2411
    %v2414 = vmul.f32 %v2412, %v2412
    %v2415 = vsel %vm34, %v2413, 0.0
    %2416 = vadd.xlane.f32.xlu0 %v2415
    %v2417 = vpop.xlane.xlu0 %2416
    %v2418 = vsel %vm34, %v2414, 0.0
    %2419 = vadd.xlane.f32.xlu0 %v2418
    %v2420 = vpop.xlane.xlu0 %2419
    %v2421 = vmul.f32 %v2417, %v41
    %v2422 = vmul.f32 %v2420, %v41
    %v2423 = vadd.f32 %v2421, 1e-12
    %v2424 = vadd.f32 %v2422, 1e-12
    %v2425 = vrsqrt.pop %v2423
    %v2426 = vrsqrt.pop %v2424
    %v2427 = vmul.f32 %v2411, %v2425
    %v2428 = vmul.f32 %v2412, %v2426
    %v2429 = vlaneseq
    %v2430 = vshrl.u32 %v2429, 7
    %v2431 = vsub.s32 0, %v2430
    %v2432 = vrot.slane %v86, %v2431
    %v2433 = vmul.f32 %v2427, %v2432
    %v2434 = vmul.f32 %v2428, %v2432
    %v2435 = vlaneseq
    %v2436 = vshrl.u32 %v2435, 7
    %v2437 = vsub.s32 0, %v2436
    %v2438 = vrot.slane %v87, %v2437
    %v2439 = vadd.f32 %v2433, %v2438
    %v2440 = vadd.f32 %v2434, %v2438
    %v2441 = vld [vmem:[%s2 + $0xa] sm:$0x1]
    %v2442 = vld [vmem:[%s2 + $0xb] sm:$0x1]
    %v2443 = vld [vmem:[%s2 + $0xc] sm:$0x1]
    %v2444 = vld [vmem:[%s2 + $0xd] sm:$0x1]
    %v2445 = vld [vmem:[%s2 + $0xe] sm:$0x1]
    %v2446 = vld [vmem:[%s2 + $0xf] sm:$0x1]
    %v2447 = vld [vmem:[%s2 + $0x10] sm:$0x1]
    %v2448 = vld [vmem:[%s2 + $0x11] sm:$0x1]
    %s2449 = scalar_lea.vmem %s3, 32
    %v2450 = vld [vmem:[%s2449] sm:$0xff]
    %v2451 = vld [vmem:[%s2449 + $0x8] sm:$0xff]
    %v2452 = vld [vmem:[%s2449 + $0x10] sm:$0xff]
    %v2453 = vld [vmem:[%s2449 + $0x18] sm:$0xff]
    %v2454 = vlaneseq
    %v2455 = vshrl.u32 %v2454, 7
    %v2456 = vsub.s32 0, %v2455
    %v2457 = vrot.slane %v2441, %v2456
    %v2459 = vsel %vm34, %v2439, 0
    %v2462 = vsel %vm34, %v2440, 0
    %2464 = vmatprep.subr.mxu0 0.0
    %2465 = vmatpush1.msra.mxu0 %v2450
    %2466 = vmatprep.subr.mxu0 0.0
    %2467 = vmatpush1.msra.mxu0 %v2451
    %2468 = vmatprep.subr.mxu0 0.0
    %2469 = vmatpush1.msra.mxu0 %v2452
    %2470 = vmatprep.subr.mxu0 0.0
    %2471 = vmatpush1.msra.mxu0 %v2453
    %2472 = vmatprep.subr.mxu0 0.0
    %2473 = vmatpush1.msra.mxu0 0.0
    %2474 = vmatprep.subr.mxu0 0.0
    %2475 = vmatpush1.msra.mxu0 0.0
    %2476 = vmatprep.subr.mxu0 0.0
    %2477 = vmatpush1.msra.mxu0 0.0
    %2478 = vmatprep.subr.mxu0 0.0
    %2479 = vmatpush1.msra.mxu0 0.0
    %2480 = vmatprep.subr.mxu0 0.0
    %2481 = vmatpush1.msra.mxu0 0.0
    %2482 = vmatprep.subr.mxu0 0.0
    %2483 = vmatpush1.msra.mxu0 0.0
    %2484 = vmatprep.subr.mxu0 0.0
    %2485 = vmatpush1.msra.mxu0 0.0
    %2486 = vmatprep.subr.mxu0 0.0
    %2487 = vmatpush1.msra.mxu0 0.0
    %2488 = vmatprep.subr.mxu0 0.0
    %2489 = vmatpush1.msra.mxu0 0.0
    %2490 = vmatprep.subr.mxu0 0.0
    %2491 = vmatpush1.msra.mxu0 0.0
    %2492 = vmatprep.subr.mxu0 0.0
    %2493 = vmatpush1.msra.mxu0 0.0
    %2494 = vmatprep.subr.mxu0 0.0
    %2495 = vmatpush1.msra.mxu0 0.0
    %2496 = vmatprep.subr.mxu0 0.0
    %2497 = vmatpush1.msra.mxu0 0.0
    %2498 = vmatprep.subr.mxu0 0.0
    %2499 = vmatpush1.msra.mxu0 0.0
    %2500 = vmatprep.subr.mxu0 0.0
    %2501 = vmatpush1.msra.mxu0 0.0
    %2502 = vmatprep.subr.mxu0 0.0
    %2503 = vmatpush1.msra.mxu0 0.0
    %2504 = vmatprep.subr.mxu0 0.0
    %2505 = vmatpush1.msra.mxu0 0.0
    %2506 = vmatprep.subr.mxu0 0.0
    %2507 = vmatpush1.msra.mxu0 0.0
    %2508 = vmatprep.subr.mxu0 0.0
    %2509 = vmatpush1.msra.mxu0 0.0
    %2510 = vmatprep.subr.mxu0 0.0
    %2511 = vmatpush1.msra.mxu0 0.0
    %2512 = vmatprep.subr.mxu0 0.0
    %2513 = vmatpush1.msra.mxu0 0.0
    %2514 = vmatprep.subr.mxu0 0.0
    %2515 = vmatpush1.msra.mxu0 0.0
    %2516 = vmatprep.subr.mxu0 0.0
    %2517 = vmatpush1.msra.mxu0 0.0
    %2518 = vmatprep.subr.mxu0 0.0
    %2519 = vmatpush1.msra.mxu0 0.0
    %2520 = vmatprep.subr.mxu0 0.0
    %2521 = vmatpush1.msra.mxu0 0.0
    %2522 = vmatprep.subr.mxu0 0.0
    %2523 = vmatpush1.msra.mxu0 0.0
    %2524 = vmatprep.subr.mxu0 0.0
    %2525 = vmatpush1.msra.mxu0 0.0
    %2526 = vmatprep.subr.mxu0 0.0
    %2527 = vmatpush1.msra.mxu0 0.0
    %2528 = vmatprep.mubr.f32.mxu0 0.0
    %2529 = vmatmul.mubr.f32.gmra.mrb[0].mxu0 %v2459
    %v2530 = vpop.f32.mrb[0].mxu0
    %v2531 = vadd.f32 %v2457, %v2530
    %v2532 = vpop.f32.mrb[0].mxu0
    %2533 = vmatprep.mubr.f32.mxu0 0.0
    %2534 = vmatmul.mubr.f32.gmra.mrb[0].mxu0 %v2462
    %v2535 = vpop.f32.mrb[0].mxu0
    %v2536 = vadd.f32 %v2457, %v2535
    %v2537 = vpop.f32.mrb[0].mxu0
    %2538 = vdwg.mxu0
    %s2539 = scalar_lea.vmem %s4, 32
    %v2540 = vld [vmem:[%s2539] sm:$0xff]
    %v2541 = vld [vmem:[%s2539 + $0x8] sm:$0xff]
    %v2542 = vld [vmem:[%s2539 + $0x10] sm:$0xff]
    %v2543 = vld [vmem:[%s2539 + $0x18] sm:$0xff]
    %2545 = vrot.lane.b32.xlu0 %v2531, 120
    %v2546 = vpop.permute.xlu0 %2545
    %2547 = vrot.lane.b32.xlu0 %v2531, 112
    %v2548 = vpop.permute.xlu0 %2547
    %2549 = vrot.lane.b32.xlu0 %v2531, 104
    %v2550 = vpop.permute.xlu0 %2549
    %2551 = vrot.lane.b32.xlu0 %v2531, 96
    %v2552 = vpop.permute.xlu0 %2551
    %v2553 = vsel %vm190, %v2531, 0
    %v2555 = vsel %vm190, %v2552, 0
    %2557 = vmatprep.subr.mxu0 0.0
    %2558 = vmatpush1.xpose.msra.mxu0 %v2555
    %2559 = vmatprep.subr.mxu0 0.0
    %2560 = vmatpush1.xpose.msra.mxu0 0.0
    %2561 = vmatprep.subr.mxu0 0.0
    %2562 = vmatpush1.xpose.msra.mxu0 0.0
    %2563 = vmatprep.subr.mxu0 0.0
    %2564 = vmatpush1.xpose.msra.mxu0 0.0
    %2565 = vmatprep.subr.mxu0 0.0
    %2566 = vmatpush1.xpose.msra.mxu0 0.0
    %2567 = vmatprep.subr.mxu0 0.0
    %2568 = vmatpush1.xpose.msra.mxu0 0.0
    %2569 = vmatprep.subr.mxu0 0.0
    %2570 = vmatpush1.xpose.msra.mxu0 0.0
    %2571 = vmatprep.subr.mxu0 0.0
    %2572 = vmatpush1.xpose.msra.mxu0 0.0
    %2573 = vmatprep.subr.mxu0 0.0
    %2574 = vmatpush1.xpose.msra.mxu0 0.0
    %2575 = vmatprep.subr.mxu0 0.0
    %2576 = vmatpush1.xpose.msra.mxu0 0.0
    %2577 = vmatprep.subr.mxu0 0.0
    %2578 = vmatpush1.xpose.msra.mxu0 0.0
    %2579 = vmatprep.subr.mxu0 0.0
    %2580 = vmatpush1.xpose.msra.mxu0 0.0
    %2581 = vmatprep.subr.mxu0 0.0
    %2582 = vmatpush1.xpose.msra.mxu0 0.0
    %2583 = vmatprep.subr.mxu0 0.0
    %2584 = vmatpush1.xpose.msra.mxu0 0.0
    %2585 = vmatprep.subr.mxu0 0.0
    %2586 = vmatpush1.xpose.msra.mxu0 0.0
    %2587 = vmatprep.subr.mxu0 0.0
    %2588 = vmatpush1.xpose.msra.mxu0 0.0
    %2589 = vmatprep.subr.mxu0 0.0
    %2590 = vmatpush1.xpose.msra.mxu0 0.0
    %2591 = vmatprep.subr.mxu0 0.0
    %2592 = vmatpush1.xpose.msra.mxu0 0.0
    %2593 = vmatprep.subr.mxu0 0.0
    %2594 = vmatpush1.xpose.msra.mxu0 0.0
    %2595 = vmatprep.subr.mxu0 0.0
    %2596 = vmatpush1.xpose.msra.mxu0 0.0
    %2597 = vmatprep.subr.mxu0 0.0
    %2598 = vmatpush1.xpose.msra.mxu0 0.0
    %2599 = vmatprep.subr.mxu0 0.0
    %2600 = vmatpush1.xpose.msra.mxu0 0.0
    %2601 = vmatprep.subr.mxu0 0.0
    %2602 = vmatpush1.xpose.msra.mxu0 0.0
    %2603 = vmatprep.subr.mxu0 0.0
    %2604 = vmatpush1.xpose.msra.mxu0 0.0
    %2605 = vmatprep.subr.mxu0 0.0
    %2606 = vmatpush1.xpose.msra.mxu0 0.0
    %2607 = vmatprep.subr.mxu0 0.0
    %2608 = vmatpush1.xpose.msra.mxu0 0.0
    %2609 = vmatprep.subr.mxu0 0.0
    %2610 = vmatpush1.xpose.msra.mxu0 0.0
    %2611 = vmatprep.subr.mxu0 0.0
    %2612 = vmatpush1.xpose.msra.mxu0 0.0
    %2613 = vmatprep.subr.mxu0 0.0
    %2614 = vmatpush1.xpose.msra.mxu0 0.0
    %2615 = vmatprep.subr.mxu0 0.0
    %2616 = vmatpush1.xpose.msra.mxu0 0.0
    %2617 = vmatprep.subr.mxu0 0.0
    %2618 = vmatpush1.xpose.msra.mxu0 0.0
    %2619 = vmatprep.subr.mxu0 0.0
    %2620 = vmatpush1.xpose.msra.mxu0 0.0
    %2621 = vmatprep.mubr.f32.mxu0 0.0
    %2622 = vmatmul.mubr.f32.gmra.mrb[0].mxu0 %v2553
    %v2623 = vpop.f32.mrb[0].mxu0
    %v2624 = vadd.f32 0.0, %v2623
    %v2625 = vpop.f32.mrb[0].mxu0
    %2626 = vdwg.mxu0
    %2627 = vrot.lane.b32.xlu0 %v2546, 96
    %v2628 = vpop.permute.xlu0 %2627
    %v2629 = vsel %vm190, %v2546, 0
    %v2631 = vsel %vm190, %v2628, 0
    %2633 = vmatprep.subr.mxu0 0.0
    %2634 = vmatpush1.xpose.msra.mxu0 %v2631
    %2635 = vmatprep.subr.mxu0 0.0
    %2636 = vmatpush1.xpose.msra.mxu0 0.0
    %2637 = vmatprep.subr.mxu0 0.0
    %2638 = vmatpush1.xpose.msra.mxu0 0.0
    %2639 = vmatprep.subr.mxu0 0.0
    %2640 = vmatpush1.xpose.msra.mxu0 0.0
    %2641 = vmatprep.subr.mxu0 0.0
    %2642 = vmatpush1.xpose.msra.mxu0 0.0
    %2643 = vmatprep.subr.mxu0 0.0
    %2644 = vmatpush1.xpose.msra.mxu0 0.0
    %2645 = vmatprep.subr.mxu0 0.0
    %2646 = vmatpush1.xpose.msra.mxu0 0.0
    %2647 = vmatprep.subr.mxu0 0.0
    %2648 = vmatpush1.xpose.msra.mxu0 0.0
    %2649 = vmatprep.subr.mxu0 0.0
    %2650 = vmatpush1.xpose.msra.mxu0 0.0
    %2651 = vmatprep.subr.mxu0 0.0
    %2652 = vmatpush1.xpose.msra.mxu0 0.0
    %2653 = vmatprep.subr.mxu0 0.0
    %2654 = vmatpush1.xpose.msra.mxu0 0.0
    %2655 = vmatprep.subr.mxu0 0.0
    %2656 = vmatpush1.xpose.msra.mxu0 0.0
    %2657 = vmatprep.subr.mxu0 0.0
    %2658 = vmatpush1.xpose.msra.mxu0 0.0
    %2659 = vmatprep.subr.mxu0 0.0
    %2660 = vmatpush1.xpose.msra.mxu0 0.0
    %2661 = vmatprep.subr.mxu0 0.0
    %2662 = vmatpush1.xpose.msra.mxu0 0.0
    %2663 = vmatprep.subr.mxu0 0.0
    %2664 = vmatpush1.xpose.msra.mxu0 0.0
    %2665 = vmatprep.subr.mxu0 0.0
    %2666 = vmatpush1.xpose.msra.mxu0 0.0
    %2667 = vmatprep.subr.mxu0 0.0
    %2668 = vmatpush1.xpose.msra.mxu0 0.0
    %2669 = vmatprep.subr.mxu0 0.0
    %2670 = vmatpush1.xpose.msra.mxu0 0.0
    %2671 = vmatprep.subr.mxu0 0.0
    %2672 = vmatpush1.xpose.msra.mxu0 0.0
    %2673 = vmatprep.subr.mxu0 0.0
    %2674 = vmatpush1.xpose.msra.mxu0 0.0
    %2675 = vmatprep.subr.mxu0 0.0
    %2676 = vmatpush1.xpose.msra.mxu0 0.0
    %2677 = vmatprep.subr.mxu0 0.0
    %2678 = vmatpush1.xpose.msra.mxu0 0.0
    %2679 = vmatprep.subr.mxu0 0.0
    %2680 = vmatpush1.xpose.msra.mxu0 0.0
    %2681 = vmatprep.subr.mxu0 0.0
    %2682 = vmatpush1.xpose.msra.mxu0 0.0
    %2683 = vmatprep.subr.mxu0 0.0
    %2684 = vmatpush1.xpose.msra.mxu0 0.0
    %2685 = vmatprep.subr.mxu0 0.0
    %2686 = vmatpush1.xpose.msra.mxu0 0.0
    %2687 = vmatprep.subr.mxu0 0.0
    %2688 = vmatpush1.xpose.msra.mxu0 0.0
    %2689 = vmatprep.subr.mxu0 0.0
    %2690 = vmatpush1.xpose.msra.mxu0 0.0
    %2691 = vmatprep.subr.mxu0 0.0
    %2692 = vmatpush1.xpose.msra.mxu0 0.0
    %2693 = vmatprep.subr.mxu0 0.0
    %2694 = vmatpush1.xpose.msra.mxu0 0.0
    %2695 = vmatprep.subr.mxu0 0.0
    %2696 = vmatpush1.xpose.msra.mxu0 0.0
    %2697 = vmatprep.mubr.f32.mxu0 0.0
    %2698 = vmatmul.mubr.f32.gmra.mrb[0].mxu0 %v2629
    %v2699 = vpop.f32.mrb[0].mxu0
    %v2700 = vadd.f32 0.0, %v2699
    %v2701 = vpop.f32.mrb[0].mxu0
    %2702 = vdwg.mxu0
    %2703 = vrot.lane.b32.xlu0 %v2548, 96
    %v2704 = vpop.permute.xlu0 %2703
    %v2705 = vsel %vm190, %v2548, 0
    %v2707 = vsel %vm190, %v2704, 0
    %2709 = vmatprep.subr.mxu0 0.0
    %2710 = vmatpush1.xpose.msra.mxu0 %v2707
    %2711 = vmatprep.subr.mxu0 0.0
    %2712 = vmatpush1.xpose.msra.mxu0 0.0
    %2713 = vmatprep.subr.mxu0 0.0
    %2714 = vmatpush1.xpose.msra.mxu0 0.0
    %2715 = vmatprep.subr.mxu0 0.0
    %2716 = vmatpush1.xpose.msra.mxu0 0.0
    %2717 = vmatprep.subr.mxu0 0.0
    %2718 = vmatpush1.xpose.msra.mxu0 0.0
    %2719 = vmatprep.subr.mxu0 0.0
    %2720 = vmatpush1.xpose.msra.mxu0 0.0
    %2721 = vmatprep.subr.mxu0 0.0
    %2722 = vmatpush1.xpose.msra.mxu0 0.0
    %2723 = vmatprep.subr.mxu0 0.0
    %2724 = vmatpush1.xpose.msra.mxu0 0.0
    %2725 = vmatprep.subr.mxu0 0.0
    %2726 = vmatpush1.xpose.msra.mxu0 0.0
    %2727 = vmatprep.subr.mxu0 0.0
    %2728 = vmatpush1.xpose.msra.mxu0 0.0
    %2729 = vmatprep.subr.mxu0 0.0
    %2730 = vmatpush1.xpose.msra.mxu0 0.0
    %2731 = vmatprep.subr.mxu0 0.0
    %2732 = vmatpush1.xpose.msra.mxu0 0.0
    %2733 = vmatprep.subr.mxu0 0.0
    %2734 = vmatpush1.xpose.msra.mxu0 0.0
    %2735 = vmatprep.subr.mxu0 0.0
    %2736 = vmatpush1.xpose.msra.mxu0 0.0
    %2737 = vmatprep.subr.mxu0 0.0
    %2738 = vmatpush1.xpose.msra.mxu0 0.0
    %2739 = vmatprep.subr.mxu0 0.0
    %2740 = vmatpush1.xpose.msra.mxu0 0.0
    %2741 = vmatprep.subr.mxu0 0.0
    %2742 = vmatpush1.xpose.msra.mxu0 0.0
    %2743 = vmatprep.subr.mxu0 0.0
    %2744 = vmatpush1.xpose.msra.mxu0 0.0
    %2745 = vmatprep.subr.mxu0 0.0
    %2746 = vmatpush1.xpose.msra.mxu0 0.0
    %2747 = vmatprep.subr.mxu0 0.0
    %2748 = vmatpush1.xpose.msra.mxu0 0.0
    %2749 = vmatprep.subr.mxu0 0.0
    %2750 = vmatpush1.xpose.msra.mxu0 0.0
    %2751 = vmatprep.subr.mxu0 0.0
    %2752 = vmatpush1.xpose.msra.mxu0 0.0
    %2753 = vmatprep.subr.mxu0 0.0
    %2754 = vmatpush1.xpose.msra.mxu0 0.0
    %2755 = vmatprep.subr.mxu0 0.0
    %2756 = vmatpush1.xpose.msra.mxu0 0.0
    %2757 = vmatprep.subr.mxu0 0.0
    %2758 = vmatpush1.xpose.msra.mxu0 0.0
    %2759 = vmatprep.subr.mxu0 0.0
    %2760 = vmatpush1.xpose.msra.mxu0 0.0
    %2761 = vmatprep.subr.mxu0 0.0
    %2762 = vmatpush1.xpose.msra.mxu0 0.0
    %2763 = vmatprep.subr.mxu0 0.0
    %2764 = vmatpush1.xpose.msra.mxu0 0.0
    %2765 = vmatprep.subr.mxu0 0.0
    %2766 = vmatpush1.xpose.msra.mxu0 0.0
    %2767 = vmatprep.subr.mxu0 0.0
    %2768 = vmatpush1.xpose.msra.mxu0 0.0
    %2769 = vmatprep.subr.mxu0 0.0
    %2770 = vmatpush1.xpose.msra.mxu0 0.0
    %2771 = vmatprep.subr.mxu0 0.0
    %2772 = vmatpush1.xpose.msra.mxu0 0.0
    %2773 = vmatprep.mubr.f32.mxu0 0.0
    %2774 = vmatmul.mubr.f32.gmra.mrb[0].mxu0 %v2705
    %v2775 = vpop.f32.mrb[0].mxu0
    %v2776 = vadd.f32 0.0, %v2775
    %v2777 = vpop.f32.mrb[0].mxu0
    %2778 = vdwg.mxu0
    %2779 = vrot.lane.b32.xlu0 %v2550, 96
    %v2780 = vpop.permute.xlu0 %2779
    %v2781 = vsel %vm190, %v2550, 0
    %v2783 = vsel %vm190, %v2780, 0
    %2785 = vmatprep.subr.mxu0 0.0
    %2786 = vmatpush1.xpose.msra.mxu0 %v2783
    %2787 = vmatprep.subr.mxu0 0.0
    %2788 = vmatpush1.xpose.msra.mxu0 0.0
    %2789 = vmatprep.subr.mxu0 0.0
    %2790 = vmatpush1.xpose.msra.mxu0 0.0
    %2791 = vmatprep.subr.mxu0 0.0
    %2792 = vmatpush1.xpose.msra.mxu0 0.0
    %2793 = vmatprep.subr.mxu0 0.0
    %2794 = vmatpush1.xpose.msra.mxu0 0.0
    %2795 = vmatprep.subr.mxu0 0.0
    %2796 = vmatpush1.xpose.msra.mxu0 0.0
    %2797 = vmatprep.subr.mxu0 0.0
    %2798 = vmatpush1.xpose.msra.mxu0 0.0
    %2799 = vmatprep.subr.mxu0 0.0
    %2800 = vmatpush1.xpose.msra.mxu0 0.0
    %2801 = vmatprep.subr.mxu0 0.0
    %2802 = vmatpush1.xpose.msra.mxu0 0.0
    %2803 = vmatprep.subr.mxu0 0.0
    %2804 = vmatpush1.xpose.msra.mxu0 0.0
    %2805 = vmatprep.subr.mxu0 0.0
    %2806 = vmatpush1.xpose.msra.mxu0 0.0
    %2807 = vmatprep.subr.mxu0 0.0
    %2808 = vmatpush1.xpose.msra.mxu0 0.0
    %2809 = vmatprep.subr.mxu0 0.0
    %2810 = vmatpush1.xpose.msra.mxu0 0.0
    %2811 = vmatprep.subr.mxu0 0.0
    %2812 = vmatpush1.xpose.msra.mxu0 0.0
    %2813 = vmatprep.subr.mxu0 0.0
    %2814 = vmatpush1.xpose.msra.mxu0 0.0
    %2815 = vmatprep.subr.mxu0 0.0
    %2816 = vmatpush1.xpose.msra.mxu0 0.0
    %2817 = vmatprep.subr.mxu0 0.0
    %2818 = vmatpush1.xpose.msra.mxu0 0.0
    %2819 = vmatprep.subr.mxu0 0.0
    %2820 = vmatpush1.xpose.msra.mxu0 0.0
    %2821 = vmatprep.subr.mxu0 0.0
    %2822 = vmatpush1.xpose.msra.mxu0 0.0
    %2823 = vmatprep.subr.mxu0 0.0
    %2824 = vmatpush1.xpose.msra.mxu0 0.0
    %2825 = vmatprep.subr.mxu0 0.0
    %2826 = vmatpush1.xpose.msra.mxu0 0.0
    %2827 = vmatprep.subr.mxu0 0.0
    %2828 = vmatpush1.xpose.msra.mxu0 0.0
    %2829 = vmatprep.subr.mxu0 0.0
    %2830 = vmatpush1.xpose.msra.mxu0 0.0
    %2831 = vmatprep.subr.mxu0 0.0
    %2832 = vmatpush1.xpose.msra.mxu0 0.0
    %2833 = vmatprep.subr.mxu0 0.0
    %2834 = vmatpush1.xpose.msra.mxu0 0.0
    %2835 = vmatprep.subr.mxu0 0.0
    %2836 = vmatpush1.xpose.msra.mxu0 0.0
    %2837 = vmatprep.subr.mxu0 0.0
    %2838 = vmatpush1.xpose.msra.mxu0 0.0
    %2839 = vmatprep.subr.mxu0 0.0
    %2840 = vmatpush1.xpose.msra.mxu0 0.0
    %2841 = vmatprep.subr.mxu0 0.0
    %2842 = vmatpush1.xpose.msra.mxu0 0.0
    %2843 = vmatprep.subr.mxu0 0.0
    %2844 = vmatpush1.xpose.msra.mxu0 0.0
    %2845 = vmatprep.subr.mxu0 0.0
    %2846 = vmatpush1.xpose.msra.mxu0 0.0
    %2847 = vmatprep.subr.mxu0 0.0
    %2848 = vmatpush1.xpose.msra.mxu0 0.0
    %2849 = vmatprep.mubr.f32.mxu0 0.0
    %2850 = vmatmul.mubr.f32.gmra.mrb[0].mxu0 %v2781
    %v2851 = vpop.f32.mrb[0].mxu0
    %v2852 = vadd.f32 0.0, %v2851
    %v2853 = vpop.f32.mrb[0].mxu0
    %2854 = vdwg.mxu0
    %v2855 = vmul.f32 %v2624, 0.35355338
    %v2856 = vmul.f32 %v2700, 0.35355338
    %v2857 = vmul.f32 %v2776, 0.35355338
    %v2858 = vmul.f32 %v2852, 0.35355338
    %v2859 = vadd.f32 %v2855, %v501
    %v2860 = vadd.f32 %v2856, %v501
    %v2861 = vadd.f32 %v2857, %v501
    %v2862 = vadd.f32 %v2858, %v501
    %v2863 = vsel %vm190, %v2859, -inf
    %2864 = vmax.xlane.f32.xlu0 %v2863
    %v2865 = vpop.xlane.xlu0 %2864
    %v2866 = vsel %vm190, %v2860, -inf
    %2867 = vmax.xlane.f32.xlu0 %v2866
    %v2868 = vpop.xlane.xlu0 %2867
    %v2869 = vsel %vm190, %v2861, -inf
    %2870 = vmax.xlane.f32.xlu0 %v2869
    %v2871 = vpop.xlane.xlu0 %2870
    %v2872 = vsel %vm190, %v2862, -inf
    %2873 = vmax.xlane.f32.xlu0 %v2872
    %v2874 = vpop.xlane.xlu0 %2873
    %v2875 = vsub.f32 %v2859, %v2865
    %v2876 = vsub.f32 %v2860, %v2868
    %v2877 = vsub.f32 %v2861, %v2871
    %v2878 = vsub.f32 %v2862, %v2874
    %v2879 = vmul.f32 %v2875, 1.442695
    %v2880 = vpow.pop %v2879
    %v2881 = vmul.f32 %v2876, 1.442695
    %v2882 = vpow.pop %v2881
    %v2883 = vmul.f32 %v2877, 1.442695
    %v2884 = vpow.pop %v2883
    %v2885 = vmul.f32 %v2878, 1.442695
    %v2886 = vpow.pop %v2885
    %v2887 = vsel %vm190, %v2880, 0.0
    %2888 = vadd.xlane.f32.xlu0 %v2887
    %v2889 = vpop.xlane.xlu0 %2888
    %v2890 = vsel %vm190, %v2882, 0.0
    %2891 = vadd.xlane.f32.xlu0 %v2890
    %v2892 = vpop.xlane.xlu0 %2891
    %v2893 = vsel %vm190, %v2884, 0.0
    %2894 = vadd.xlane.f32.xlu0 %v2893
    %v2895 = vpop.xlane.xlu0 %2894
    %v2896 = vsel %vm190, %v2886, 0.0
    %2897 = vadd.xlane.f32.xlu0 %v2896
    %v2898 = vpop.xlane.xlu0 %2897
    %v2899 = vrcp.pop %v2889
    %v2900 = vmul.f32 %v2880, %v2899
    %v2901 = vrcp.pop %v2892
    %v2902 = vmul.f32 %v2882, %v2901
    %v2903 = vrcp.pop %v2895
    %v2904 = vmul.f32 %v2884, %v2903
    %v2905 = vrcp.pop %v2898
    %v2906 = vmul.f32 %v2886, %v2905
    %2907 = vrot.lane.b32.xlu0 %v2531, 64
    %v2908 = vpop.permute.xlu0 %2907
    %v2911 = vsel %vm190, %v2900, 0
    %2913 = vmatprep.subr.mxu0 0.0
    %2914 = vmatpush1.msra.mxu0 %v2908
    %2915 = vmatprep.subr.mxu0 0.0
    %2916 = vmatpush1.msra.mxu0 0.0
    %2917 = vmatprep.subr.mxu0 0.0
    %2918 = vmatpush1.msra.mxu0 0.0
    %2919 = vmatprep.subr.mxu0 0.0
    %2920 = vmatpush1.msra.mxu0 0.0
    %2921 = vmatprep.subr.mxu0 0.0
    %2922 = vmatpush1.msra.mxu0 0.0
    %2923 = vmatprep.subr.mxu0 0.0
    %2924 = vmatpush1.msra.mxu0 0.0
    %2925 = vmatprep.subr.mxu0 0.0
    %2926 = vmatpush1.msra.mxu0 0.0
    %2927 = vmatprep.subr.mxu0 0.0
    %2928 = vmatpush1.msra.mxu0 0.0
    %2929 = vmatprep.subr.mxu0 0.0
    %2930 = vmatpush1.msra.mxu0 0.0
    %2931 = vmatprep.subr.mxu0 0.0
    %2932 = vmatpush1.msra.mxu0 0.0
    %2933 = vmatprep.subr.mxu0 0.0
    %2934 = vmatpush1.msra.mxu0 0.0
    %2935 = vmatprep.subr.mxu0 0.0
    %2936 = vmatpush1.msra.mxu0 0.0
    %2937 = vmatprep.subr.mxu0 0.0
    %2938 = vmatpush1.msra.mxu0 0.0
    %2939 = vmatprep.subr.mxu0 0.0
    %2940 = vmatpush1.msra.mxu0 0.0
    %2941 = vmatprep.subr.mxu0 0.0
    %2942 = vmatpush1.msra.mxu0 0.0
    %2943 = vmatprep.subr.mxu0 0.0
    %2944 = vmatpush1.msra.mxu0 0.0
    %2945 = vmatprep.subr.mxu0 0.0
    %2946 = vmatpush1.msra.mxu0 0.0
    %2947 = vmatprep.subr.mxu0 0.0
    %2948 = vmatpush1.msra.mxu0 0.0
    %2949 = vmatprep.subr.mxu0 0.0
    %2950 = vmatpush1.msra.mxu0 0.0
    %2951 = vmatprep.subr.mxu0 0.0
    %2952 = vmatpush1.msra.mxu0 0.0
    %2953 = vmatprep.subr.mxu0 0.0
    %2954 = vmatpush1.msra.mxu0 0.0
    %2955 = vmatprep.subr.mxu0 0.0
    %2956 = vmatpush1.msra.mxu0 0.0
    %2957 = vmatprep.subr.mxu0 0.0
    %2958 = vmatpush1.msra.mxu0 0.0
    %2959 = vmatprep.subr.mxu0 0.0
    %2960 = vmatpush1.msra.mxu0 0.0
    %2961 = vmatprep.subr.mxu0 0.0
    %2962 = vmatpush1.msra.mxu0 0.0
    %2963 = vmatprep.subr.mxu0 0.0
    %2964 = vmatpush1.msra.mxu0 0.0
    %2965 = vmatprep.subr.mxu0 0.0
    %2966 = vmatpush1.msra.mxu0 0.0
    %2967 = vmatprep.subr.mxu0 0.0
    %2968 = vmatpush1.msra.mxu0 0.0
    %2969 = vmatprep.subr.mxu0 0.0
    %2970 = vmatpush1.msra.mxu0 0.0
    %2971 = vmatprep.subr.mxu0 0.0
    %2972 = vmatpush1.msra.mxu0 0.0
    %2973 = vmatprep.subr.mxu0 0.0
    %2974 = vmatpush1.msra.mxu0 0.0
    %2975 = vmatprep.subr.mxu0 0.0
    %2976 = vmatpush1.msra.mxu0 0.0
    %2977 = vmatprep.mubr.f32.mxu0 0.0
    %2978 = vmatmul.mubr.f32.gmra.mrb[0].mxu0 %v2911
    %v2979 = vpop.f32.mrb[0].mxu0
    %v2980 = vadd.f32 0.0, %v2979
    %v2981 = vpop.f32.mrb[0].mxu0
    %2982 = vdwg.mxu0
    %2983 = vrot.lane.b32.xlu0 %v2546, 64
    %v2984 = vpop.permute.xlu0 %2983
    %v2987 = vsel %vm190, %v2902, 0
    %2989 = vmatprep.subr.mxu0 0.0
    %2990 = vmatpush1.msra.mxu0 %v2984
    %2991 = vmatprep.subr.mxu0 0.0
    %2992 = vmatpush1.msra.mxu0 0.0
    %2993 = vmatprep.subr.mxu0 0.0
    %2994 = vmatpush1.msra.mxu0 0.0
    %2995 = vmatprep.subr.mxu0 0.0
    %2996 = vmatpush1.msra.mxu0 0.0
    %2997 = vmatprep.subr.mxu0 0.0
    %2998 = vmatpush1.msra.mxu0 0.0
    %2999 = vmatprep.subr.mxu0 0.0
    %3000 = vmatpush1.msra.mxu0 0.0
    %3001 = vmatprep.subr.mxu0 0.0
    %3002 = vmatpush1.msra.mxu0 0.0
    %3003 = vmatprep.subr.mxu0 0.0
    %3004 = vmatpush1.msra.mxu0 0.0
    %3005 = vmatprep.subr.mxu0 0.0
    %3006 = vmatpush1.msra.mxu0 0.0
    %3007 = vmatprep.subr.mxu0 0.0
    %3008 = vmatpush1.msra.mxu0 0.0
    %3009 = vmatprep.subr.mxu0 0.0
    %3010 = vmatpush1.msra.mxu0 0.0
    %3011 = vmatprep.subr.mxu0 0.0
    %3012 = vmatpush1.msra.mxu0 0.0
    %3013 = vmatprep.subr.mxu0 0.0
    %3014 = vmatpush1.msra.mxu0 0.0
    %3015 = vmatprep.subr.mxu0 0.0
    %3016 = vmatpush1.msra.mxu0 0.0
    %3017 = vmatprep.subr.mxu0 0.0
    %3018 = vmatpush1.msra.mxu0 0.0
    %3019 = vmatprep.subr.mxu0 0.0
    %3020 = vmatpush1.msra.mxu0 0.0
    %3021 = vmatprep.subr.mxu0 0.0
    %3022 = vmatpush1.msra.mxu0 0.0
    %3023 = vmatprep.subr.mxu0 0.0
    %3024 = vmatpush1.msra.mxu0 0.0
    %3025 = vmatprep.subr.mxu0 0.0
    %3026 = vmatpush1.msra.mxu0 0.0
    %3027 = vmatprep.subr.mxu0 0.0
    %3028 = vmatpush1.msra.mxu0 0.0
    %3029 = vmatprep.subr.mxu0 0.0
    %3030 = vmatpush1.msra.mxu0 0.0
    %3031 = vmatprep.subr.mxu0 0.0
    %3032 = vmatpush1.msra.mxu0 0.0
    %3033 = vmatprep.subr.mxu0 0.0
    %3034 = vmatpush1.msra.mxu0 0.0
    %3035 = vmatprep.subr.mxu0 0.0
    %3036 = vmatpush1.msra.mxu0 0.0
    %3037 = vmatprep.subr.mxu0 0.0
    %3038 = vmatpush1.msra.mxu0 0.0
    %3039 = vmatprep.subr.mxu0 0.0
    %3040 = vmatpush1.msra.mxu0 0.0
    %3041 = vmatprep.subr.mxu0 0.0
    %3042 = vmatpush1.msra.mxu0 0.0
    %3043 = vmatprep.subr.mxu0 0.0
    %3044 = vmatpush1.msra.mxu0 0.0
    %3045 = vmatprep.subr.mxu0 0.0
    %3046 = vmatpush1.msra.mxu0 0.0
    %3047 = vmatprep.subr.mxu0 0.0
    %3048 = vmatpush1.msra.mxu0 0.0
    %3049 = vmatprep.subr.mxu0 0.0
    %3050 = vmatpush1.msra.mxu0 0.0
    %3051 = vmatprep.subr.mxu0 0.0
    %3052 = vmatpush1.msra.mxu0 0.0
    %3053 = vmatprep.mubr.f32.mxu0 0.0
    %3054 = vmatmul.mubr.f32.gmra.mrb[0].mxu0 %v2987
    %v3055 = vpop.f32.mrb[0].mxu0
    %v3056 = vadd.f32 0.0, %v3055
    %v3057 = vpop.f32.mrb[0].mxu0
    %3058 = vdwg.mxu0
    %3059 = vrot.lane.b32.xlu0 %v2548, 64
    %v3060 = vpop.permute.xlu0 %3059
    %v3063 = vsel %vm190, %v2904, 0
    %3065 = vmatprep.subr.mxu0 0.0
    %3066 = vmatpush1.msra.mxu0 %v3060
    %3067 = vmatprep.subr.mxu0 0.0
    %3068 = vmatpush1.msra.mxu0 0.0
    %3069 = vmatprep.subr.mxu0 0.0
    %3070 = vmatpush1.msra.mxu0 0.0
    %3071 = vmatprep.subr.mxu0 0.0
    %3072 = vmatpush1.msra.mxu0 0.0
    %3073 = vmatprep.subr.mxu0 0.0
    %3074 = vmatpush1.msra.mxu0 0.0
    %3075 = vmatprep.subr.mxu0 0.0
    %3076 = vmatpush1.msra.mxu0 0.0
    %3077 = vmatprep.subr.mxu0 0.0
    %3078 = vmatpush1.msra.mxu0 0.0
    %3079 = vmatprep.subr.mxu0 0.0
    %3080 = vmatpush1.msra.mxu0 0.0
    %3081 = vmatprep.subr.mxu0 0.0
    %3082 = vmatpush1.msra.mxu0 0.0
    %3083 = vmatprep.subr.mxu0 0.0
    %3084 = vmatpush1.msra.mxu0 0.0
    %3085 = vmatprep.subr.mxu0 0.0
    %3086 = vmatpush1.msra.mxu0 0.0
    %3087 = vmatprep.subr.mxu0 0.0
    %3088 = vmatpush1.msra.mxu0 0.0
    %3089 = vmatprep.subr.mxu0 0.0
    %3090 = vmatpush1.msra.mxu0 0.0
    %3091 = vmatprep.subr.mxu0 0.0
    %3092 = vmatpush1.msra.mxu0 0.0
    %3093 = vmatprep.subr.mxu0 0.0
    %3094 = vmatpush1.msra.mxu0 0.0
    %3095 = vmatprep.subr.mxu0 0.0
    %3096 = vmatpush1.msra.mxu0 0.0
    %3097 = vmatprep.subr.mxu0 0.0
    %3098 = vmatpush1.msra.mxu0 0.0
    %3099 = vmatprep.subr.mxu0 0.0
    %3100 = vmatpush1.msra.mxu0 0.0
    %3101 = vmatprep.subr.mxu0 0.0
    %3102 = vmatpush1.msra.mxu0 0.0
    %3103 = vmatprep.subr.mxu0 0.0
    %3104 = vmatpush1.msra.mxu0 0.0
    %3105 = vmatprep.subr.mxu0 0.0
    %3106 = vmatpush1.msra.mxu0 0.0
    %3107 = vmatprep.subr.mxu0 0.0
    %3108 = vmatpush1.msra.mxu0 0.0
    %3109 = vmatprep.subr.mxu0 0.0
    %3110 = vmatpush1.msra.mxu0 0.0
    %3111 = vmatprep.subr.mxu0 0.0
    %3112 = vmatpush1.msra.mxu0 0.0
    %3113 = vmatprep.subr.mxu0 0.0
    %3114 = vmatpush1.msra.mxu0 0.0
    %3115 = vmatprep.subr.mxu0 0.0
    %3116 = vmatpush1.msra.mxu0 0.0
    %3117 = vmatprep.subr.mxu0 0.0
    %3118 = vmatpush1.msra.mxu0 0.0
    %3119 = vmatprep.subr.mxu0 0.0
    %3120 = vmatpush1.msra.mxu0 0.0
    %3121 = vmatprep.subr.mxu0 0.0
    %3122 = vmatpush1.msra.mxu0 0.0
    %3123 = vmatprep.subr.mxu0 0.0
    %3124 = vmatpush1.msra.mxu0 0.0
    %3125 = vmatprep.subr.mxu0 0.0
    %3126 = vmatpush1.msra.mxu0 0.0
    %3127 = vmatprep.subr.mxu0 0.0
    %3128 = vmatpush1.msra.mxu0 0.0
    %3129 = vmatprep.mubr.f32.mxu0 0.0
    %3130 = vmatmul.mubr.f32.gmra.mrb[0].mxu0 %v3063
    %v3131 = vpop.f32.mrb[0].mxu0
    %v3132 = vadd.f32 0.0, %v3131
    %v3133 = vpop.f32.mrb[0].mxu0
    %3134 = vdwg.mxu0
    %3135 = vrot.lane.b32.xlu0 %v2550, 64
    %v3136 = vpop.permute.xlu0 %3135
    %v3139 = vsel %vm190, %v2906, 0
    %3141 = vmatprep.subr.mxu0 0.0
    %3142 = vmatpush1.msra.mxu0 %v3136
    %3143 = vmatprep.subr.mxu0 0.0
    %3144 = vmatpush1.msra.mxu0 0.0
    %3145 = vmatprep.subr.mxu0 0.0
    %3146 = vmatpush1.msra.mxu0 0.0
    %3147 = vmatprep.subr.mxu0 0.0
    %3148 = vmatpush1.msra.mxu0 0.0
    %3149 = vmatprep.subr.mxu0 0.0
    %3150 = vmatpush1.msra.mxu0 0.0
    %3151 = vmatprep.subr.mxu0 0.0
    %3152 = vmatpush1.msra.mxu0 0.0
    %3153 = vmatprep.subr.mxu0 0.0
    %3154 = vmatpush1.msra.mxu0 0.0
    %3155 = vmatprep.subr.mxu0 0.0
    %3156 = vmatpush1.msra.mxu0 0.0
    %3157 = vmatprep.subr.mxu0 0.0
    %3158 = vmatpush1.msra.mxu0 0.0
    %3159 = vmatprep.subr.mxu0 0.0
    %3160 = vmatpush1.msra.mxu0 0.0
    %3161 = vmatprep.subr.mxu0 0.0
    %3162 = vmatpush1.msra.mxu0 0.0
    %3163 = vmatprep.subr.mxu0 0.0
    %3164 = vmatpush1.msra.mxu0 0.0
    %3165 = vmatprep.subr.mxu0 0.0
    %3166 = vmatpush1.msra.mxu0 0.0
    %3167 = vmatprep.subr.mxu0 0.0
    %3168 = vmatpush1.msra.mxu0 0.0
    %3169 = vmatprep.subr.mxu0 0.0
    %3170 = vmatpush1.msra.mxu0 0.0
    %3171 = vmatprep.subr.mxu0 0.0
    %3172 = vmatpush1.msra.mxu0 0.0
    %3173 = vmatprep.subr.mxu0 0.0
    %3174 = vmatpush1.msra.mxu0 0.0
    %3175 = vmatprep.subr.mxu0 0.0
    %3176 = vmatpush1.msra.mxu0 0.0
    %3177 = vmatprep.subr.mxu0 0.0
    %3178 = vmatpush1.msra.mxu0 0.0
    %3179 = vmatprep.subr.mxu0 0.0
    %3180 = vmatpush1.msra.mxu0 0.0
    %3181 = vmatprep.subr.mxu0 0.0
    %3182 = vmatpush1.msra.mxu0 0.0
    %3183 = vmatprep.subr.mxu0 0.0
    %3184 = vmatpush1.msra.mxu0 0.0
    %3185 = vmatprep.subr.mxu0 0.0
    %3186 = vmatpush1.msra.mxu0 0.0
    %3187 = vmatprep.subr.mxu0 0.0
    %3188 = vmatpush1.msra.mxu0 0.0
    %3189 = vmatprep.subr.mxu0 0.0
    %3190 = vmatpush1.msra.mxu0 0.0
    %3191 = vmatprep.subr.mxu0 0.0
    %3192 = vmatpush1.msra.mxu0 0.0
    %3193 = vmatprep.subr.mxu0 0.0
    %3194 = vmatpush1.msra.mxu0 0.0
    %3195 = vmatprep.subr.mxu0 0.0
    %3196 = vmatpush1.msra.mxu0 0.0
    %3197 = vmatprep.subr.mxu0 0.0
    %3198 = vmatpush1.msra.mxu0 0.0
    %3199 = vmatprep.subr.mxu0 0.0
    %3200 = vmatpush1.msra.mxu0 0.0
    %3201 = vmatprep.subr.mxu0 0.0
    %3202 = vmatpush1.msra.mxu0 0.0
    %3203 = vmatprep.subr.mxu0 0.0
    %3204 = vmatpush1.msra.mxu0 0.0
    %3205 = vmatprep.mubr.f32.mxu0 0.0
    %3206 = vmatmul.mubr.f32.gmra.mrb[0].mxu0 %v3139
    %v3207 = vpop.f32.mrb[0].mxu0
    %v3208 = vadd.f32 0.0, %v3207
    %v3209 = vpop.f32.mrb[0].mxu0
    %3210 = vdwg.mxu0
    %v3212 = vsel %vm190, %v2980, 0
    %3214 = vmatprep.subr.mxu0 0.0
    %3215 = vmatpush1.msra.mxu0 %v2540
    %3216 = vmatprep.subr.mxu0 0.0
    %3217 = vmatpush1.msra.mxu0 0.0
    %3218 = vmatprep.subr.mxu0 0.0
    %3219 = vmatpush1.msra.mxu0 0.0
    %3220 = vmatprep.subr.mxu0 0.0
    %3221 = vmatpush1.msra.mxu0 0.0
    %3222 = vmatprep.subr.mxu0 0.0
    %3223 = vmatpush1.msra.mxu0 0.0
    %3224 = vmatprep.subr.mxu0 0.0
    %3225 = vmatpush1.msra.mxu0 0.0
    %3226 = vmatprep.subr.mxu0 0.0
    %3227 = vmatpush1.msra.mxu0 0.0
    %3228 = vmatprep.subr.mxu0 0.0
    %3229 = vmatpush1.msra.mxu0 0.0
    %3230 = vmatprep.subr.mxu0 0.0
    %3231 = vmatpush1.msra.mxu0 0.0
    %3232 = vmatprep.subr.mxu0 0.0
    %3233 = vmatpush1.msra.mxu0 0.0
    %3234 = vmatprep.subr.mxu0 0.0
    %3235 = vmatpush1.msra.mxu0 0.0
    %3236 = vmatprep.subr.mxu0 0.0
    %3237 = vmatpush1.msra.mxu0 0.0
    %3238 = vmatprep.subr.mxu0 0.0
    %3239 = vmatpush1.msra.mxu0 0.0
    %3240 = vmatprep.subr.mxu0 0.0
    %3241 = vmatpush1.msra.mxu0 0.0
    %3242 = vmatprep.subr.mxu0 0.0
    %3243 = vmatpush1.msra.mxu0 0.0
    %3244 = vmatprep.subr.mxu0 0.0
    %3245 = vmatpush1.msra.mxu0 0.0
    %3246 = vmatprep.subr.mxu0 0.0
    %3247 = vmatpush1.msra.mxu0 0.0
    %3248 = vmatprep.subr.mxu0 0.0
    %3249 = vmatpush1.msra.mxu0 0.0
    %3250 = vmatprep.subr.mxu0 0.0
    %3251 = vmatpush1.msra.mxu0 0.0
    %3252 = vmatprep.subr.mxu0 0.0
    %3253 = vmatpush1.msra.mxu0 0.0
    %3254 = vmatprep.subr.mxu0 0.0
    %3255 = vmatpush1.msra.mxu0 0.0
    %3256 = vmatprep.subr.mxu0 0.0
    %3257 = vmatpush1.msra.mxu0 0.0
    %3258 = vmatprep.subr.mxu0 0.0
    %3259 = vmatpush1.msra.mxu0 0.0
    %3260 = vmatprep.subr.mxu0 0.0
    %3261 = vmatpush1.msra.mxu0 0.0
    %3262 = vmatprep.subr.mxu0 0.0
    %3263 = vmatpush1.msra.mxu0 0.0
    %3264 = vmatprep.subr.mxu0 0.0
    %3265 = vmatpush1.msra.mxu0 0.0
    %3266 = vmatprep.subr.mxu0 0.0
    %3267 = vmatpush1.msra.mxu0 0.0
    %3268 = vmatprep.subr.mxu0 0.0
    %3269 = vmatpush1.msra.mxu0 0.0
    %3270 = vmatprep.subr.mxu0 0.0
    %3271 = vmatpush1.msra.mxu0 0.0
    %3272 = vmatprep.subr.mxu0 0.0
    %3273 = vmatpush1.msra.mxu0 0.0
    %3274 = vmatprep.subr.mxu0 0.0
    %3275 = vmatpush1.msra.mxu0 0.0
    %3276 = vmatprep.subr.mxu0 0.0
    %3277 = vmatpush1.msra.mxu0 0.0
    %3278 = vmatprep.mubr.f32.mxu0 0.0
    %3279 = vmatmul.mubr.f32.gmra.mrb[0].mxu0 %v3212
    %v3280 = vpop.f32.mrb[0].mxu0
    %v3281 = vadd.f32 0.0, %v3280
    %v3282 = vpop.f32.mrb[0].mxu0
    %3283 = vdwg.mxu0
    %v3285 = vsel %vm190, %v3056, 0
    %3287 = vmatprep.subr.mxu0 0.0
    %3288 = vmatpush1.msra.mxu0 %v2541
    %3289 = vmatprep.subr.mxu0 0.0
    %3290 = vmatpush1.msra.mxu0 0.0
    %3291 = vmatprep.subr.mxu0 0.0
    %3292 = vmatpush1.msra.mxu0 0.0
    %3293 = vmatprep.subr.mxu0 0.0
    %3294 = vmatpush1.msra.mxu0 0.0
    %3295 = vmatprep.subr.mxu0 0.0
    %3296 = vmatpush1.msra.mxu0 0.0
    %3297 = vmatprep.subr.mxu0 0.0
    %3298 = vmatpush1.msra.mxu0 0.0
    %3299 = vmatprep.subr.mxu0 0.0
    %3300 = vmatpush1.msra.mxu0 0.0
    %3301 = vmatprep.subr.mxu0 0.0
    %3302 = vmatpush1.msra.mxu0 0.0
    %3303 = vmatprep.subr.mxu0 0.0
    %3304 = vmatpush1.msra.mxu0 0.0
    %3305 = vmatprep.subr.mxu0 0.0
    %3306 = vmatpush1.msra.mxu0 0.0
    %3307 = vmatprep.subr.mxu0 0.0
    %3308 = vmatpush1.msra.mxu0 0.0
    %3309 = vmatprep.subr.mxu0 0.0
    %3310 = vmatpush1.msra.mxu0 0.0
    %3311 = vmatprep.subr.mxu0 0.0
    %3312 = vmatpush1.msra.mxu0 0.0
    %3313 = vmatprep.subr.mxu0 0.0
    %3314 = vmatpush1.msra.mxu0 0.0
    %3315 = vmatprep.subr.mxu0 0.0
    %3316 = vmatpush1.msra.mxu0 0.0
    %3317 = vmatprep.subr.mxu0 0.0
    %3318 = vmatpush1.msra.mxu0 0.0
    %3319 = vmatprep.subr.mxu0 0.0
    %3320 = vmatpush1.msra.mxu0 0.0
    %3321 = vmatprep.subr.mxu0 0.0
    %3322 = vmatpush1.msra.mxu0 0.0
    %3323 = vmatprep.subr.mxu0 0.0
    %3324 = vmatpush1.msra.mxu0 0.0
    %3325 = vmatprep.subr.mxu0 0.0
    %3326 = vmatpush1.msra.mxu0 0.0
    %3327 = vmatprep.subr.mxu0 0.0
    %3328 = vmatpush1.msra.mxu0 0.0
    %3329 = vmatprep.subr.mxu0 0.0
    %3330 = vmatpush1.msra.mxu0 0.0
    %3331 = vmatprep.subr.mxu0 0.0
    %3332 = vmatpush1.msra.mxu0 0.0
    %3333 = vmatprep.subr.mxu0 0.0
    %3334 = vmatpush1.msra.mxu0 0.0
    %3335 = vmatprep.subr.mxu0 0.0
    %3336 = vmatpush1.msra.mxu0 0.0
    %3337 = vmatprep.subr.mxu0 0.0
    %3338 = vmatpush1.msra.mxu0 0.0
    %3339 = vmatprep.subr.mxu0 0.0
    %3340 = vmatpush1.msra.mxu0 0.0
    %3341 = vmatprep.subr.mxu0 0.0
    %3342 = vmatpush1.msra.mxu0 0.0
    %3343 = vmatprep.subr.mxu0 0.0
    %3344 = vmatpush1.msra.mxu0 0.0
    %3345 = vmatprep.subr.mxu0 0.0
    %3346 = vmatpush1.msra.mxu0 0.0
    %3347 = vmatprep.subr.mxu0 0.0
    %3348 = vmatpush1.msra.mxu0 0.0
    %3349 = vmatprep.subr.mxu0 0.0
    %3350 = vmatpush1.msra.mxu0 0.0
    %3351 = vmatprep.mubr.f32.mxu0 0.0
    %3352 = vmatmul.mubr.f32.gmra.mrb[0].mxu0 %v3285
    %v3353 = vpop.f32.mrb[0].mxu0
    %v3354 = vadd.f32 0.0, %v3353
    %v3355 = vpop.f32.mrb[0].mxu0
    %3356 = vdwg.mxu0
    %v3358 = vsel %vm190, %v3132, 0
    %3360 = vmatprep.subr.mxu0 0.0
    %3361 = vmatpush1.msra.mxu0 %v2542
    %3362 = vmatprep.subr.mxu0 0.0
    %3363 = vmatpush1.msra.mxu0 0.0
    %3364 = vmatprep.subr.mxu0 0.0
    %3365 = vmatpush1.msra.mxu0 0.0
    %3366 = vmatprep.subr.mxu0 0.0
    %3367 = vmatpush1.msra.mxu0 0.0
    %3368 = vmatprep.subr.mxu0 0.0
    %3369 = vmatpush1.msra.mxu0 0.0
    %3370 = vmatprep.subr.mxu0 0.0
    %3371 = vmatpush1.msra.mxu0 0.0
    %3372 = vmatprep.subr.mxu0 0.0
    %3373 = vmatpush1.msra.mxu0 0.0
    %3374 = vmatprep.subr.mxu0 0.0
    %3375 = vmatpush1.msra.mxu0 0.0
    %3376 = vmatprep.subr.mxu0 0.0
    %3377 = vmatpush1.msra.mxu0 0.0
    %3378 = vmatprep.subr.mxu0 0.0
    %3379 = vmatpush1.msra.mxu0 0.0
    %3380 = vmatprep.subr.mxu0 0.0
    %3381 = vmatpush1.msra.mxu0 0.0
    %3382 = vmatprep.subr.mxu0 0.0
    %3383 = vmatpush1.msra.mxu0 0.0
    %3384 = vmatprep.subr.mxu0 0.0
    %3385 = vmatpush1.msra.mxu0 0.0
    %3386 = vmatprep.subr.mxu0 0.0
    %3387 = vmatpush1.msra.mxu0 0.0
    %3388 = vmatprep.subr.mxu0 0.0
    %3389 = vmatpush1.msra.mxu0 0.0
    %3390 = vmatprep.subr.mxu0 0.0
    %3391 = vmatpush1.msra.mxu0 0.0
    %3392 = vmatprep.subr.mxu0 0.0
    %3393 = vmatpush1.msra.mxu0 0.0
    %3394 = vmatprep.subr.mxu0 0.0
    %3395 = vmatpush1.msra.mxu0 0.0
    %3396 = vmatprep.subr.mxu0 0.0
    %3397 = vmatpush1.msra.mxu0 0.0
    %3398 = vmatprep.subr.mxu0 0.0
    %3399 = vmatpush1.msra.mxu0 0.0
    %3400 = vmatprep.subr.mxu0 0.0
    %3401 = vmatpush1.msra.mxu0 0.0
    %3402 = vmatprep.subr.mxu0 0.0
    %3403 = vmatpush1.msra.mxu0 0.0
    %3404 = vmatprep.subr.mxu0 0.0
    %3405 = vmatpush1.msra.mxu0 0.0
    %3406 = vmatprep.subr.mxu0 0.0
    %3407 = vmatpush1.msra.mxu0 0.0
    %3408 = vmatprep.subr.mxu0 0.0
    %3409 = vmatpush1.msra.mxu0 0.0
    %3410 = vmatprep.subr.mxu0 0.0
    %3411 = vmatpush1.msra.mxu0 0.0
    %3412 = vmatprep.subr.mxu0 0.0
    %3413 = vmatpush1.msra.mxu0 0.0
    %3414 = vmatprep.subr.mxu0 0.0
    %3415 = vmatpush1.msra.mxu0 0.0
    %3416 = vmatprep.subr.mxu0 0.0
    %3417 = vmatpush1.msra.mxu0 0.0
    %3418 = vmatprep.subr.mxu0 0.0
    %3419 = vmatpush1.msra.mxu0 0.0
    %3420 = vmatprep.subr.mxu0 0.0
    %3421 = vmatpush1.msra.mxu0 0.0
    %3422 = vmatprep.subr.mxu0 0.0
    %3423 = vmatpush1.msra.mxu0 0.0
    %3424 = vmatprep.mubr.f32.mxu0 0.0
    %3425 = vmatmul.mubr.f32.gmra.mrb[0].mxu0 %v3358
    %v3426 = vpop.f32.mrb[0].mxu0
    %v3427 = vadd.f32 0.0, %v3426
    %v3428 = vpop.f32.mrb[0].mxu0
    %3429 = vdwg.mxu0
    %v3431 = vsel %vm190, %v3208, 0
    %3433 = vmatprep.subr.mxu0 0.0
    %3434 = vmatpush1.msra.mxu0 %v2543
    %3435 = vmatprep.subr.mxu0 0.0
    %3436 = vmatpush1.msra.mxu0 0.0
    %3437 = vmatprep.subr.mxu0 0.0
    %3438 = vmatpush1.msra.mxu0 0.0
    %3439 = vmatprep.subr.mxu0 0.0
    %3440 = vmatpush1.msra.mxu0 0.0
    %3441 = vmatprep.subr.mxu0 0.0
    %3442 = vmatpush1.msra.mxu0 0.0
    %3443 = vmatprep.subr.mxu0 0.0
    %3444 = vmatpush1.msra.mxu0 0.0
    %3445 = vmatprep.subr.mxu0 0.0
    %3446 = vmatpush1.msra.mxu0 0.0
    %3447 = vmatprep.subr.mxu0 0.0
    %3448 = vmatpush1.msra.mxu0 0.0
    %3449 = vmatprep.subr.mxu0 0.0
    %3450 = vmatpush1.msra.mxu0 0.0
    %3451 = vmatprep.subr.mxu0 0.0
    %3452 = vmatpush1.msra.mxu0 0.0
    %3453 = vmatprep.subr.mxu0 0.0
    %3454 = vmatpush1.msra.mxu0 0.0
    %3455 = vmatprep.subr.mxu0 0.0
    %3456 = vmatpush1.msra.mxu0 0.0
    %3457 = vmatprep.subr.mxu0 0.0
    %3458 = vmatpush1.msra.mxu0 0.0
    %3459 = vmatprep.subr.mxu0 0.0
    %3460 = vmatpush1.msra.mxu0 0.0
    %3461 = vmatprep.subr.mxu0 0.0
    %3462 = vmatpush1.msra.mxu0 0.0
    %3463 = vmatprep.subr.mxu0 0.0
    %3464 = vmatpush1.msra.mxu0 0.0
    %3465 = vmatprep.subr.mxu0 0.0
    %3466 = vmatpush1.msra.mxu0 0.0
    %3467 = vmatprep.subr.mxu0 0.0
    %3468 = vmatpush1.msra.mxu0 0.0
    %3469 = vmatprep.subr.mxu0 0.0
    %3470 = vmatpush1.msra.mxu0 0.0
    %3471 = vmatprep.subr.mxu0 0.0
    %3472 = vmatpush1.msra.mxu0 0.0
    %3473 = vmatprep.subr.mxu0 0.0
    %3474 = vmatpush1.msra.mxu0 0.0
    %3475 = vmatprep.subr.mxu0 0.0
    %3476 = vmatpush1.msra.mxu0 0.0
    %3477 = vmatprep.subr.mxu0 0.0
    %3478 = vmatpush1.msra.mxu0 0.0
    %3479 = vmatprep.subr.mxu0 0.0
    %3480 = vmatpush1.msra.mxu0 0.0
    %3481 = vmatprep.subr.mxu0 0.0
    %3482 = vmatpush1.msra.mxu0 0.0
    %3483 = vmatprep.subr.mxu0 0.0
    %3484 = vmatpush1.msra.mxu0 0.0
    %3485 = vmatprep.subr.mxu0 0.0
    %3486 = vmatpush1.msra.mxu0 0.0
    %3487 = vmatprep.subr.mxu0 0.0
    %3488 = vmatpush1.msra.mxu0 0.0
    %3489 = vmatprep.subr.mxu0 0.0
    %3490 = vmatpush1.msra.mxu0 0.0
    %3491 = vmatprep.subr.mxu0 0.0
    %3492 = vmatpush1.msra.mxu0 0.0
    %3493 = vmatprep.subr.mxu0 0.0
    %3494 = vmatpush1.msra.mxu0 0.0
    %3495 = vmatprep.subr.mxu0 0.0
    %3496 = vmatpush1.msra.mxu0 0.0
    %3497 = vmatprep.mubr.f32.mxu0 0.0
    %3498 = vmatmul.mubr.f32.gmra.mrb[0].mxu0 %v3431
    %v3499 = vpop.f32.mrb[0].mxu0
    %v3500 = vadd.f32 0.0, %v3499
    %v3501 = vpop.f32.mrb[0].mxu0
    %3502 = vdwg.mxu0
    %v3503 = vadd.f32 %v3281, %v3354
    %v3504 = vadd.f32 %v3503, %v3427
    %v3505 = vadd.f32 %v3504, %v3500
    %3507 = vrot.lane.b32.xlu0 %v2536, 120
    %v3508 = vpop.permute.xlu0 %3507
    %3509 = vrot.lane.b32.xlu0 %v2536, 112
    %v3510 = vpop.permute.xlu0 %3509
    %3511 = vrot.lane.b32.xlu0 %v2536, 104
    %v3512 = vpop.permute.xlu0 %3511
    %3513 = vrot.lane.b32.xlu0 %v2536, 96
    %v3514 = vpop.permute.xlu0 %3513
    %v3515 = vsel %vm190, %v2536, 0
    %v3517 = vsel %vm190, %v3514, 0
    %3519 = vmatprep.subr.mxu0 0.0
    %3520 = vmatpush1.xpose.msra.mxu0 %v3517
    %3521 = vmatprep.subr.mxu0 0.0
    %3522 = vmatpush1.xpose.msra.mxu0 0.0
    %3523 = vmatprep.subr.mxu0 0.0
    %3524 = vmatpush1.xpose.msra.mxu0 0.0
    %3525 = vmatprep.subr.mxu0 0.0
    %3526 = vmatpush1.xpose.msra.mxu0 0.0
    %3527 = vmatprep.subr.mxu0 0.0
    %3528 = vmatpush1.xpose.msra.mxu0 0.0
    %3529 = vmatprep.subr.mxu0 0.0
    %3530 = vmatpush1.xpose.msra.mxu0 0.0
    %3531 = vmatprep.subr.mxu0 0.0
    %3532 = vmatpush1.xpose.msra.mxu0 0.0
    %3533 = vmatprep.subr.mxu0 0.0
    %3534 = vmatpush1.xpose.msra.mxu0 0.0
    %3535 = vmatprep.subr.mxu0 0.0
    %3536 = vmatpush1.xpose.msra.mxu0 0.0
    %3537 = vmatprep.subr.mxu0 0.0
    %3538 = vmatpush1.xpose.msra.mxu0 0.0
    %3539 = vmatprep.subr.mxu0 0.0
    %3540 = vmatpush1.xpose.msra.mxu0 0.0
    %3541 = vmatprep.subr.mxu0 0.0
    %3542 = vmatpush1.xpose.msra.mxu0 0.0
    %3543 = vmatprep.subr.mxu0 0.0
    %3544 = vmatpush1.xpose.msra.mxu0 0.0
    %3545 = vmatprep.subr.mxu0 0.0
    %3546 = vmatpush1.xpose.msra.mxu0 0.0
    %3547 = vmatprep.subr.mxu0 0.0
    %3548 = vmatpush1.xpose.msra.mxu0 0.0
    %3549 = vmatprep.subr.mxu0 0.0
    %3550 = vmatpush1.xpose.msra.mxu0 0.0
    %3551 = vmatprep.subr.mxu0 0.0
    %3552 = vmatpush1.xpose.msra.mxu0 0.0
    %3553 = vmatprep.subr.mxu0 0.0
    %3554 = vmatpush1.xpose.msra.mxu0 0.0
    %3555 = vmatprep.subr.mxu0 0.0
    %3556 = vmatpush1.xpose.msra.mxu0 0.0
    %3557 = vmatprep.subr.mxu0 0.0
    %3558 = vmatpush1.xpose.msra.mxu0 0.0
    %3559 = vmatprep.subr.mxu0 0.0
    %3560 = vmatpush1.xpose.msra.mxu0 0.0
    %3561 = vmatprep.subr.mxu0 0.0
    %3562 = vmatpush1.xpose.msra.mxu0 0.0
    %3563 = vmatprep.subr.mxu0 0.0
    %3564 = vmatpush1.xpose.msra.mxu0 0.0
    %3565 = vmatprep.subr.mxu0 0.0
    %3566 = vmatpush1.xpose.msra.mxu0 0.0
    %3567 = vmatprep.subr.mxu0 0.0
    %3568 = vmatpush1.xpose.msra.mxu0 0.0
    %3569 = vmatprep.subr.mxu0 0.0
    %3570 = vmatpush1.xpose.msra.mxu0 0.0
    %3571 = vmatprep.subr.mxu0 0.0
    %3572 = vmatpush1.xpose.msra.mxu0 0.0
    %3573 = vmatprep.subr.mxu0 0.0
    %3574 = vmatpush1.xpose.msra.mxu0 0.0
    %3575 = vmatprep.subr.mxu0 0.0
    %3576 = vmatpush1.xpose.msra.mxu0 0.0
    %3577 = vmatprep.subr.mxu0 0.0
    %3578 = vmatpush1.xpose.msra.mxu0 0.0
    %3579 = vmatprep.subr.mxu0 0.0
    %3580 = vmatpush1.xpose.msra.mxu0 0.0
    %3581 = vmatprep.subr.mxu0 0.0
    %3582 = vmatpush1.xpose.msra.mxu0 0.0
    %3583 = vmatprep.mubr.f32.mxu0 0.0
    %3584 = vmatmul.mubr.f32.gmra.mrb[0].mxu0 %v3515
    %v3585 = vpop.f32.mrb[0].mxu0
    %v3586 = vadd.f32 0.0, %v3585
    %v3587 = vpop.f32.mrb[0].mxu0
    %3588 = vdwg.mxu0
    %3589 = vrot.lane.b32.xlu0 %v3508, 96
    %v3590 = vpop.permute.xlu0 %3589
    %v3591 = vsel %vm190, %v3508, 0
    %v3593 = vsel %vm190, %v3590, 0
    %3595 = vmatprep.subr.mxu0 0.0
    %3596 = vmatpush1.xpose.msra.mxu0 %v3593
    %3597 = vmatprep.subr.mxu0 0.0
    %3598 = vmatpush1.xpose.msra.mxu0 0.0
    %3599 = vmatprep.subr.mxu0 0.0
    %3600 = vmatpush1.xpose.msra.mxu0 0.0
    %3601 = vmatprep.subr.mxu0 0.0
    %3602 = vmatpush1.xpose.msra.mxu0 0.0
    %3603 = vmatprep.subr.mxu0 0.0
    %3604 = vmatpush1.xpose.msra.mxu0 0.0
    %3605 = vmatprep.subr.mxu0 0.0
    %3606 = vmatpush1.xpose.msra.mxu0 0.0
    %3607 = vmatprep.subr.mxu0 0.0
    %3608 = vmatpush1.xpose.msra.mxu0 0.0
    %3609 = vmatprep.subr.mxu0 0.0
    %3610 = vmatpush1.xpose.msra.mxu0 0.0
    %3611 = vmatprep.subr.mxu0 0.0
    %3612 = vmatpush1.xpose.msra.mxu0 0.0
    %3613 = vmatprep.subr.mxu0 0.0
    %3614 = vmatpush1.xpose.msra.mxu0 0.0
    %3615 = vmatprep.subr.mxu0 0.0
    %3616 = vmatpush1.xpose.msra.mxu0 0.0
    %3617 = vmatprep.subr.mxu0 0.0
    %3618 = vmatpush1.xpose.msra.mxu0 0.0
    %3619 = vmatprep.subr.mxu0 0.0
    %3620 = vmatpush1.xpose.msra.mxu0 0.0
    %3621 = vmatprep.subr.mxu0 0.0
    %3622 = vmatpush1.xpose.msra.mxu0 0.0
    %3623 = vmatprep.subr.mxu0 0.0
    %3624 = vmatpush1.xpose.msra.mxu0 0.0
    %3625 = vmatprep.subr.mxu0 0.0
    %3626 = vmatpush1.xpose.msra.mxu0 0.0
    %3627 = vmatprep.subr.mxu0 0.0
    %3628 = vmatpush1.xpose.msra.mxu0 0.0
    %3629 = vmatprep.subr.mxu0 0.0
    %3630 = vmatpush1.xpose.msra.mxu0 0.0
    %3631 = vmatprep.subr.mxu0 0.0
    %3632 = vmatpush1.xpose.msra.mxu0 0.0
    %3633 = vmatprep.subr.mxu0 0.0
    %3634 = vmatpush1.xpose.msra.mxu0 0.0
    %3635 = vmatprep.subr.mxu0 0.0
    %3636 = vmatpush1.xpose.msra.mxu0 0.0
    %3637 = vmatprep.subr.mxu0 0.0
    %3638 = vmatpush1.xpose.msra.mxu0 0.0
    %3639 = vmatprep.subr.mxu0 0.0
    %3640 = vmatpush1.xpose.msra.mxu0 0.0
    %3641 = vmatprep.subr.mxu0 0.0
    %3642 = vmatpush1.xpose.msra.mxu0 0.0
    %3643 = vmatprep.subr.mxu0 0.0
    %3644 = vmatpush1.xpose.msra.mxu0 0.0
    %3645 = vmatprep.subr.mxu0 0.0
    %3646 = vmatpush1.xpose.msra.mxu0 0.0
    %3647 = vmatprep.subr.mxu0 0.0
    %3648 = vmatpush1.xpose.msra.mxu0 0.0
    %3649 = vmatprep.subr.mxu0 0.0
    %3650 = vmatpush1.xpose.msra.mxu0 0.0
    %3651 = vmatprep.subr.mxu0 0.0
    %3652 = vmatpush1.xpose.msra.mxu0 0.0
    %3653 = vmatprep.subr.mxu0 0.0
    %3654 = vmatpush1.xpose.msra.mxu0 0.0
    %3655 = vmatprep.subr.mxu0 0.0
    %3656 = vmatpush1.xpose.msra.mxu0 0.0
    %3657 = vmatprep.subr.mxu0 0.0
    %3658 = vmatpush1.xpose.msra.mxu0 0.0
    %3659 = vmatprep.mubr.f32.mxu0 0.0
    %3660 = vmatmul.mubr.f32.gmra.mrb[0].mxu0 %v3591
    %v3661 = vpop.f32.mrb[0].mxu0
    %v3662 = vadd.f32 0.0, %v3661
    %v3663 = vpop.f32.mrb[0].mxu0
    %3664 = vdwg.mxu0
    %3665 = vrot.lane.b32.xlu0 %v3510, 96
    %v3666 = vpop.permute.xlu0 %3665
    %v3667 = vsel %vm190, %v3510, 0
    %v3669 = vsel %vm190, %v3666, 0
    %3671 = vmatprep.subr.mxu0 0.0
    %3672 = vmatpush1.xpose.msra.mxu0 %v3669
    %3673 = vmatprep.subr.mxu0 0.0
    %3674 = vmatpush1.xpose.msra.mxu0 0.0
    %3675 = vmatprep.subr.mxu0 0.0
    %3676 = vmatpush1.xpose.msra.mxu0 0.0
    %3677 = vmatprep.subr.mxu0 0.0
    %3678 = vmatpush1.xpose.msra.mxu0 0.0
    %3679 = vmatprep.subr.mxu0 0.0
    %3680 = vmatpush1.xpose.msra.mxu0 0.0
    %3681 = vmatprep.subr.mxu0 0.0
    %3682 = vmatpush1.xpose.msra.mxu0 0.0
    %3683 = vmatprep.subr.mxu0 0.0
    %3684 = vmatpush1.xpose.msra.mxu0 0.0
    %3685 = vmatprep.subr.mxu0 0.0
    %3686 = vmatpush1.xpose.msra.mxu0 0.0
    %3687 = vmatprep.subr.mxu0 0.0
    %3688 = vmatpush1.xpose.msra.mxu0 0.0
    %3689 = vmatprep.subr.mxu0 0.0
    %3690 = vmatpush1.xpose.msra.mxu0 0.0
    %3691 = vmatprep.subr.mxu0 0.0
    %3692 = vmatpush1.xpose.msra.mxu0 0.0
    %3693 = vmatprep.subr.mxu0 0.0
    %3694 = vmatpush1.xpose.msra.mxu0 0.0
    %3695 = vmatprep.subr.mxu0 0.0
    %3696 = vmatpush1.xpose.msra.mxu0 0.0
    %3697 = vmatprep.subr.mxu0 0.0
    %3698 = vmatpush1.xpose.msra.mxu0 0.0
    %3699 = vmatprep.subr.mxu0 0.0
    %3700 = vmatpush1.xpose.msra.mxu0 0.0
    %3701 = vmatprep.subr.mxu0 0.0
    %3702 = vmatpush1.xpose.msra.mxu0 0.0
    %3703 = vmatprep.subr.mxu0 0.0
    %3704 = vmatpush1.xpose.msra.mxu0 0.0
    %3705 = vmatprep.subr.mxu0 0.0
    %3706 = vmatpush1.xpose.msra.mxu0 0.0
    %3707 = vmatprep.subr.mxu0 0.0
    %3708 = vmatpush1.xpose.msra.mxu0 0.0
    %3709 = vmatprep.subr.mxu0 0.0
    %3710 = vmatpush1.xpose.msra.mxu0 0.0
    %3711 = vmatprep.subr.mxu0 0.0
    %3712 = vmatpush1.xpose.msra.mxu0 0.0
    %3713 = vmatprep.subr.mxu0 0.0
    %3714 = vmatpush1.xpose.msra.mxu0 0.0
    %3715 = vmatprep.subr.mxu0 0.0
    %3716 = vmatpush1.xpose.msra.mxu0 0.0
    %3717 = vmatprep.subr.mxu0 0.0
    %3718 = vmatpush1.xpose.msra.mxu0 0.0
    %3719 = vmatprep.subr.mxu0 0.0
    %3720 = vmatpush1.xpose.msra.mxu0 0.0
    %3721 = vmatprep.subr.mxu0 0.0
    %3722 = vmatpush1.xpose.msra.mxu0 0.0
    %3723 = vmatprep.subr.mxu0 0.0
    %3724 = vmatpush1.xpose.msra.mxu0 0.0
    %3725 = vmatprep.subr.mxu0 0.0
    %3726 = vmatpush1.xpose.msra.mxu0 0.0
    %3727 = vmatprep.subr.mxu0 0.0
    %3728 = vmatpush1.xpose.msra.mxu0 0.0
    %3729 = vmatprep.subr.mxu0 0.0
    %3730 = vmatpush1.xpose.msra.mxu0 0.0
    %3731 = vmatprep.subr.mxu0 0.0
    %3732 = vmatpush1.xpose.msra.mxu0 0.0
    %3733 = vmatprep.subr.mxu0 0.0
    %3734 = vmatpush1.xpose.msra.mxu0 0.0
    %3735 = vmatprep.mubr.f32.mxu0 0.0
    %3736 = vmatmul.mubr.f32.gmra.mrb[0].mxu0 %v3667
    %v3737 = vpop.f32.mrb[0].mxu0
    %v3738 = vadd.f32 0.0, %v3737
    %v3739 = vpop.f32.mrb[0].mxu0
    %3740 = vdwg.mxu0
    %3741 = vrot.lane.b32.xlu0 %v3512, 96
    %v3742 = vpop.permute.xlu0 %3741
    %v3743 = vsel %vm190, %v3512, 0
    %v3745 = vsel %vm190, %v3742, 0
    %3747 = vmatprep.subr.mxu0 0.0
    %3748 = vmatpush1.xpose.msra.mxu0 %v3745
    %3749 = vmatprep.subr.mxu0 0.0
    %3750 = vmatpush1.xpose.msra.mxu0 0.0
    %3751 = vmatprep.subr.mxu0 0.0
    %3752 = vmatpush1.xpose.msra.mxu0 0.0
    %3753 = vmatprep.subr.mxu0 0.0
    %3754 = vmatpush1.xpose.msra.mxu0 0.0
    %3755 = vmatprep.subr.mxu0 0.0
    %3756 = vmatpush1.xpose.msra.mxu0 0.0
    %3757 = vmatprep.subr.mxu0 0.0
    %3758 = vmatpush1.xpose.msra.mxu0 0.0
    %3759 = vmatprep.subr.mxu0 0.0
    %3760 = vmatpush1.xpose.msra.mxu0 0.0
    %3761 = vmatprep.subr.mxu0 0.0
    %3762 = vmatpush1.xpose.msra.mxu0 0.0
    %3763 = vmatprep.subr.mxu0 0.0
    %3764 = vmatpush1.xpose.msra.mxu0 0.0
    %3765 = vmatprep.subr.mxu0 0.0
    %3766 = vmatpush1.xpose.msra.mxu0 0.0
    %3767 = vmatprep.subr.mxu0 0.0
    %3768 = vmatpush1.xpose.msra.mxu0 0.0
    %3769 = vmatprep.subr.mxu0 0.0
    %3770 = vmatpush1.xpose.msra.mxu0 0.0
    %3771 = vmatprep.subr.mxu0 0.0
    %3772 = vmatpush1.xpose.msra.mxu0 0.0
    %3773 = vmatprep.subr.mxu0 0.0
    %3774 = vmatpush1.xpose.msra.mxu0 0.0
    %3775 = vmatprep.subr.mxu0 0.0
    %3776 = vmatpush1.xpose.msra.mxu0 0.0
    %3777 = vmatprep.subr.mxu0 0.0
    %3778 = vmatpush1.xpose.msra.mxu0 0.0
    %3779 = vmatprep.subr.mxu0 0.0
    %3780 = vmatpush1.xpose.msra.mxu0 0.0
    %3781 = vmatprep.subr.mxu0 0.0
    %3782 = vmatpush1.xpose.msra.mxu0 0.0
    %3783 = vmatprep.subr.mxu0 0.0
    %3784 = vmatpush1.xpose.msra.mxu0 0.0
    %3785 = vmatprep.subr.mxu0 0.0
    %3786 = vmatpush1.xpose.msra.mxu0 0.0
    %3787 = vmatprep.subr.mxu0 0.0
    %3788 = vmatpush1.xpose.msra.mxu0 0.0
    %3789 = vmatprep.subr.mxu0 0.0
    %3790 = vmatpush1.xpose.msra.mxu0 0.0
    %3791 = vmatprep.subr.mxu0 0.0
    %3792 = vmatpush1.xpose.msra.mxu0 0.0
    %3793 = vmatprep.subr.mxu0 0.0
    %3794 = vmatpush1.xpose.msra.mxu0 0.0
    %3795 = vmatprep.subr.mxu0 0.0
    %3796 = vmatpush1.xpose.msra.mxu0 0.0
    %3797 = vmatprep.subr.mxu0 0.0
    %3798 = vmatpush1.xpose.msra.mxu0 0.0
    %3799 = vmatprep.subr.mxu0 0.0
    %3800 = vmatpush1.xpose.msra.mxu0 0.0
    %3801 = vmatprep.subr.mxu0 0.0
    %3802 = vmatpush1.xpose.msra.mxu0 0.0
    %3803 = vmatprep.subr.mxu0 0.0
    %3804 = vmatpush1.xpose.msra.mxu0 0.0
    %3805 = vmatprep.subr.mxu0 0.0
    %3806 = vmatpush1.xpose.msra.mxu0 0.0
    %3807 = vmatprep.subr.mxu0 0.0
    %3808 = vmatpush1.xpose.msra.mxu0 0.0
    %3809 = vmatprep.subr.mxu0 0.0
    %3810 = vmatpush1.xpose.msra.mxu0 0.0
    %3811 = vmatprep.mubr.f32.mxu0 0.0
    %3812 = vmatmul.mubr.f32.gmra.mrb[0].mxu0 %v3743
    %v3813 = vpop.f32.mrb[0].mxu0
    %v3814 = vadd.f32 0.0, %v3813
    %v3815 = vpop.f32.mrb[0].mxu0
    %3816 = vdwg.mxu0
    %v3817 = vmul.f32 %v3586, 0.35355338
    %v3818 = vmul.f32 %v3662, 0.35355338
    %v3819 = vmul.f32 %v3738, 0.35355338
    %v3820 = vmul.f32 %v3814, 0.35355338
    %v3821 = vadd.f32 %v3817, %v1469
    %v3822 = vadd.f32 %v3818, %v1469
    %v3823 = vadd.f32 %v3819, %v1469
    %v3824 = vadd.f32 %v3820, %v1469
    %v3825 = vsel %vm190, %v3821, -inf
    %3826 = vmax.xlane.f32.xlu0 %v3825
    %v3827 = vpop.xlane.xlu0 %3826
    %v3828 = vsel %vm190, %v3822, -inf
    %3829 = vmax.xlane.f32.xlu0 %v3828
    %v3830 = vpop.xlane.xlu0 %3829
    %v3831 = vsel %vm190, %v3823, -inf
    %3832 = vmax.xlane.f32.xlu0 %v3831
    %v3833 = vpop.xlane.xlu0 %3832
    %v3834 = vsel %vm190, %v3824, -inf
    %3835 = vmax.xlane.f32.xlu0 %v3834
    %v3836 = vpop.xlane.xlu0 %3835
    %v3837 = vsub.f32 %v3821, %v3827
    %v3838 = vsub.f32 %v3822, %v3830
    %v3839 = vsub.f32 %v3823, %v3833
    %v3840 = vsub.f32 %v3824, %v3836
    %v3841 = vmul.f32 %v3837, 1.442695
    %v3842 = vpow.pop %v3841
    %v3843 = vmul.f32 %v3838, 1.442695
    %v3844 = vpow.pop %v3843
    %v3845 = vmul.f32 %v3839, 1.442695
    %v3846 = vpow.pop %v3845
    %v3847 = vmul.f32 %v3840, 1.442695
    %v3848 = vpow.pop %v3847
    %v3849 = vsel %vm190, %v3842, 0.0
    %3850 = vadd.xlane.f32.xlu0 %v3849
    %v3851 = vpop.xlane.xlu0 %3850
    %v3852 = vsel %vm190, %v3844, 0.0
    %3853 = vadd.xlane.f32.xlu0 %v3852
    %v3854 = vpop.xlane.xlu0 %3853
    %v3855 = vsel %vm190, %v3846, 0.0
    %3856 = vadd.xlane.f32.xlu0 %v3855
    %v3857 = vpop.xlane.xlu0 %3856
    %v3858 = vsel %vm190, %v3848, 0.0
    %3859 = vadd.xlane.f32.xlu0 %v3858
    %v3860 = vpop.xlane.xlu0 %3859
    %v3861 = vrcp.pop %v3851
    %v3862 = vmul.f32 %v3842, %v3861
    %v3863 = vrcp.pop %v3854
    %v3864 = vmul.f32 %v3844, %v3863
    %v3865 = vrcp.pop %v3857
    %v3866 = vmul.f32 %v3846, %v3865
    %v3867 = vrcp.pop %v3860
    %v3868 = vmul.f32 %v3848, %v3867
    %3869 = vrot.lane.b32.xlu0 %v2536, 64
    %v3870 = vpop.permute.xlu0 %3869
    %v3873 = vsel %vm190, %v3862, 0
    %3875 = vmatprep.subr.mxu0 0.0
    %3876 = vmatpush1.msra.mxu0 %v3870
    %3877 = vmatprep.subr.mxu0 0.0
    %3878 = vmatpush1.msra.mxu0 0.0
    %3879 = vmatprep.subr.mxu0 0.0
    %3880 = vmatpush1.msra.mxu0 0.0
    %3881 = vmatprep.subr.mxu0 0.0
    %3882 = vmatpush1.msra.mxu0 0.0
    %3883 = vmatprep.subr.mxu0 0.0
    %3884 = vmatpush1.msra.mxu0 0.0
    %3885 = vmatprep.subr.mxu0 0.0
    %3886 = vmatpush1.msra.mxu0 0.0
    %3887 = vmatprep.subr.mxu0 0.0
    %3888 = vmatpush1.msra.mxu0 0.0
    %3889 = vmatprep.subr.mxu0 0.0
    %3890 = vmatpush1.msra.mxu0 0.0
    %3891 = vmatprep.subr.mxu0 0.0
    %3892 = vmatpush1.msra.mxu0 0.0
    %3893 = vmatprep.subr.mxu0 0.0
    %3894 = vmatpush1.msra.mxu0 0.0
    %3895 = vmatprep.subr.mxu0 0.0
    %3896 = vmatpush1.msra.mxu0 0.0
    %3897 = vmatprep.subr.mxu0 0.0
    %3898 = vmatpush1.msra.mxu0 0.0
    %3899 = vmatprep.subr.mxu0 0.0
    %3900 = vmatpush1.msra.mxu0 0.0
    %3901 = vmatprep.subr.mxu0 0.0
    %3902 = vmatpush1.msra.mxu0 0.0
    %3903 = vmatprep.subr.mxu0 0.0
    %3904 = vmatpush1.msra.mxu0 0.0
    %3905 = vmatprep.subr.mxu0 0.0
    %3906 = vmatpush1.msra.mxu0 0.0
    %3907 = vmatprep.subr.mxu0 0.0
    %3908 = vmatpush1.msra.mxu0 0.0
    %3909 = vmatprep.subr.mxu0 0.0
    %3910 = vmatpush1.msra.mxu0 0.0
    %3911 = vmatprep.subr.mxu0 0.0
    %3912 = vmatpush1.msra.mxu0 0.0
    %3913 = vmatprep.subr.mxu0 0.0
    %3914 = vmatpush1.msra.mxu0 0.0
    %3915 = vmatprep.subr.mxu0 0.0
    %3916 = vmatpush1.msra.mxu0 0.0
    %3917 = vmatprep.subr.mxu0 0.0
    %3918 = vmatpush1.msra.mxu0 0.0
    %3919 = vmatprep.subr.mxu0 0.0
    %3920 = vmatpush1.msra.mxu0 0.0
    %3921 = vmatprep.subr.mxu0 0.0
    %3922 = vmatpush1.msra.mxu0 0.0
    %3923 = vmatprep.subr.mxu0 0.0
    %3924 = vmatpush1.msra.mxu0 0.0
    %3925 = vmatprep.subr.mxu0 0.0
    %3926 = vmatpush1.msra.mxu0 0.0
    %3927 = vmatprep.subr.mxu0 0.0
    %3928 = vmatpush1.msra.mxu0 0.0
    %3929 = vmatprep.subr.mxu0 0.0
    %3930 = vmatpush1.msra.mxu0 0.0
    %3931 = vmatprep.subr.mxu0 0.0
    %3932 = vmatpush1.msra.mxu0 0.0
    %3933 = vmatprep.subr.mxu0 0.0
    %3934 = vmatpush1.msra.mxu0 0.0
    %3935 = vmatprep.subr.mxu0 0.0
    %3936 = vmatpush1.msra.mxu0 0.0
    %3937 = vmatprep.subr.mxu0 0.0
    %3938 = vmatpush1.msra.mxu0 0.0
    %3939 = vmatprep.mubr.f32.mxu0 0.0
    %3940 = vmatmul.mubr.f32.gmra.mrb[0].mxu0 %v3873
    %v3941 = vpop.f32.mrb[0].mxu0
    %v3942 = vadd.f32 0.0, %v3941
    %v3943 = vpop.f32.mrb[0].mxu0
    %3944 = vdwg.mxu0
    %3945 = vrot.lane.b32.xlu0 %v3508, 64
    %v3946 = vpop.permute.xlu0 %3945
    %v3949 = vsel %vm190, %v3864, 0
    %3951 = vmatprep.subr.mxu0 0.0
    %3952 = vmatpush1.msra.mxu0 %v3946
    %3953 = vmatprep.subr.mxu0 0.0
    %3954 = vmatpush1.msra.mxu0 0.0
    %3955 = vmatprep.subr.mxu0 0.0
    %3956 = vmatpush1.msra.mxu0 0.0
    %3957 = vmatprep.subr.mxu0 0.0
    %3958 = vmatpush1.msra.mxu0 0.0
    %3959 = vmatprep.subr.mxu0 0.0
    %3960 = vmatpush1.msra.mxu0 0.0
    %3961 = vmatprep.subr.mxu0 0.0
    %3962 = vmatpush1.msra.mxu0 0.0
    %3963 = vmatprep.subr.mxu0 0.0
    %3964 = vmatpush1.msra.mxu0 0.0
    %3965 = vmatprep.subr.mxu0 0.0
    %3966 = vmatpush1.msra.mxu0 0.0
    %3967 = vmatprep.subr.mxu0 0.0
    %3968 = vmatpush1.msra.mxu0 0.0
    %3969 = vmatprep.subr.mxu0 0.0
    %3970 = vmatpush1.msra.mxu0 0.0
    %3971 = vmatprep.subr.mxu0 0.0
    %3972 = vmatpush1.msra.mxu0 0.0
    %3973 = vmatprep.subr.mxu0 0.0
    %3974 = vmatpush1.msra.mxu0 0.0
    %3975 = vmatprep.subr.mxu0 0.0
    %3976 = vmatpush1.msra.mxu0 0.0
    %3977 = vmatprep.subr.mxu0 0.0
    %3978 = vmatpush1.msra.mxu0 0.0
    %3979 = vmatprep.subr.mxu0 0.0
    %3980 = vmatpush1.msra.mxu0 0.0
    %3981 = vmatprep.subr.mxu0 0.0
    %3982 = vmatpush1.msra.mxu0 0.0
    %3983 = vmatprep.subr.mxu0 0.0
    %3984 = vmatpush1.msra.mxu0 0.0
    %3985 = vmatprep.subr.mxu0 0.0
    %3986 = vmatpush1.msra.mxu0 0.0
    %3987 = vmatprep.subr.mxu0 0.0
    %3988 = vmatpush1.msra.mxu0 0.0
    %3989 = vmatprep.subr.mxu0 0.0
    %3990 = vmatpush1.msra.mxu0 0.0
    %3991 = vmatprep.subr.mxu0 0.0
    %3992 = vmatpush1.msra.mxu0 0.0
    %3993 = vmatprep.subr.mxu0 0.0
    %3994 = vmatpush1.msra.mxu0 0.0
    %3995 = vmatprep.subr.mxu0 0.0
    %3996 = vmatpush1.msra.mxu0 0.0
    %3997 = vmatprep.subr.mxu0 0.0
    %3998 = vmatpush1.msra.mxu0 0.0
    %3999 = vmatprep.subr.mxu0 0.0
    %4000 = vmatpush1.msra.mxu0 0.0
    %4001 = vmatprep.subr.mxu0 0.0
    %4002 = vmatpush1.msra.mxu0 0.0
    %4003 = vmatprep.subr.mxu0 0.0
    %4004 = vmatpush1.msra.mxu0 0.0
    %4005 = vmatprep.subr.mxu0 0.0
    %4006 = vmatpush1.msra.mxu0 0.0
    %4007 = vmatprep.subr.mxu0 0.0
    %4008 = vmatpush1.msra.mxu0 0.0
    %4009 = vmatprep.subr.mxu0 0.0
    %4010 = vmatpush1.msra.mxu0 0.0
    %4011 = vmatprep.subr.mxu0 0.0
    %4012 = vmatpush1.msra.mxu0 0.0
    %4013 = vmatprep.subr.mxu0 0.0
    %4014 = vmatpush1.msra.mxu0 0.0
    %4015 = vmatprep.mubr.f32.mxu0 0.0
    %4016 = vmatmul.mubr.f32.gmra.mrb[0].mxu0 %v3949
    %v4017 = vpop.f32.mrb[0].mxu0
    %v4018 = vadd.f32 0.0, %v4017
    %v4019 = vpop.f32.mrb[0].mxu0
    %4020 = vdwg.mxu0
    %4021 = vrot.lane.b32.xlu0 %v3510, 64
    %v4022 = vpop.permute.xlu0 %4021
    %v4025 = vsel %vm190, %v3866, 0
    %4027 = vmatprep.subr.mxu0 0.0
    %4028 = vmatpush1.msra.mxu0 %v4022
    %4029 = vmatprep.subr.mxu0 0.0
    %4030 = vmatpush1.msra.mxu0 0.0
    %4031 = vmatprep.subr.mxu0 0.0
    %4032 = vmatpush1.msra.mxu0 0.0
    %4033 = vmatprep.subr.mxu0 0.0
    %4034 = vmatpush1.msra.mxu0 0.0
    %4035 = vmatprep.subr.mxu0 0.0
    %4036 = vmatpush1.msra.mxu0 0.0
    %4037 = vmatprep.subr.mxu0 0.0
    %4038 = vmatpush1.msra.mxu0 0.0
    %4039 = vmatprep.subr.mxu0 0.0
    %4040 = vmatpush1.msra.mxu0 0.0
    %4041 = vmatprep.subr.mxu0 0.0
    %4042 = vmatpush1.msra.mxu0 0.0
    %4043 = vmatprep.subr.mxu0 0.0
    %4044 = vmatpush1.msra.mxu0 0.0
    %4045 = vmatprep.subr.mxu0 0.0
    %4046 = vmatpush1.msra.mxu0 0.0
    %4047 = vmatprep.subr.mxu0 0.0
    %4048 = vmatpush1.msra.mxu0 0.0
    %4049 = vmatprep.subr.mxu0 0.0
    %4050 = vmatpush1.msra.mxu0 0.0
    %4051 = vmatprep.subr.mxu0 0.0
    %4052 = vmatpush1.msra.mxu0 0.0
    %4053 = vmatprep.subr.mxu0 0.0
    %4054 = vmatpush1.msra.mxu0 0.0
    %4055 = vmatprep.subr.mxu0 0.0
    %4056 = vmatpush1.msra.mxu0 0.0
    %4057 = vmatprep.subr.mxu0 0.0
    %4058 = vmatpush1.msra.mxu0 0.0
    %4059 = vmatprep.subr.mxu0 0.0
    %4060 = vmatpush1.msra.mxu0 0.0
    %4061 = vmatprep.subr.mxu0 0.0
    %4062 = vmatpush1.msra.mxu0 0.0
    %4063 = vmatprep.subr.mxu0 0.0
    %4064 = vmatpush1.msra.mxu0 0.0
    %4065 = vmatprep.subr.mxu0 0.0
    %4066 = vmatpush1.msra.mxu0 0.0
    %4067 = vmatprep.subr.mxu0 0.0
    %4068 = vmatpush1.msra.mxu0 0.0
    %4069 = vmatprep.subr.mxu0 0.0
    %4070 = vmatpush1.msra.mxu0 0.0
    %4071 = vmatprep.subr.mxu0 0.0
    %4072 = vmatpush1.msra.mxu0 0.0
    %4073 = vmatprep.subr.mxu0 0.0
    %4074 = vmatpush1.msra.mxu0 0.0
    %4075 = vmatprep.subr.mxu0 0.0
    %4076 = vmatpush1.msra.mxu0 0.0
    %4077 = vmatprep.subr.mxu0 0.0
    %4078 = vmatpush1.msra.mxu0 0.0
    %4079 = vmatprep.subr.mxu0 0.0
    %4080 = vmatpush1.msra.mxu0 0.0
    %4081 = vmatprep.subr.mxu0 0.0
    %4082 = vmatpush1.msra.mxu0 0.0
    %4083 = vmatprep.subr.mxu0 0.0
    %4084 = vmatpush1.msra.mxu0 0.0
    %4085 = vmatprep.subr.mxu0 0.0
    %4086 = vmatpush1.msra.mxu0 0.0
    %4087 = vmatprep.subr.mxu0 0.0
    %4088 = vmatpush1.msra.mxu0 0.0
    %4089 = vmatprep.subr.mxu0 0.0
    %4090 = vmatpush1.msra.mxu0 0.0
    %4091 = vmatprep.mubr.f32.mxu0 0.0
    %4092 = vmatmul.mubr.f32.gmra.mrb[0].mxu0 %v4025
    %v4093 = vpop.f32.mrb[0].mxu0
    %v4094 = vadd.f32 0.0, %v4093
    %v4095 = vpop.f32.mrb[0].mxu0
    %4096 = vdwg.mxu0
    %4097 = vrot.lane.b32.xlu0 %v3512, 64
    %v4098 = vpop.permute.xlu0 %4097
    %v4101 = vsel %vm190, %v3868, 0
    %4103 = vmatprep.subr.mxu0 0.0
    %4104 = vmatpush1.msra.mxu0 %v4098
    %4105 = vmatprep.subr.mxu0 0.0
    %4106 = vmatpush1.msra.mxu0 0.0
    %4107 = vmatprep.subr.mxu0 0.0
    %4108 = vmatpush1.msra.mxu0 0.0
    %4109 = vmatprep.subr.mxu0 0.0
    %4110 = vmatpush1.msra.mxu0 0.0
    %4111 = vmatprep.subr.mxu0 0.0
    %4112 = vmatpush1.msra.mxu0 0.0
    %4113 = vmatprep.subr.mxu0 0.0
    %4114 = vmatpush1.msra.mxu0 0.0
    %4115 = vmatprep.subr.mxu0 0.0
    %4116 = vmatpush1.msra.mxu0 0.0
    %4117 = vmatprep.subr.mxu0 0.0
    %4118 = vmatpush1.msra.mxu0 0.0
    %4119 = vmatprep.subr.mxu0 0.0
    %4120 = vmatpush1.msra.mxu0 0.0
    %4121 = vmatprep.subr.mxu0 0.0
    %4122 = vmatpush1.msra.mxu0 0.0
    %4123 = vmatprep.subr.mxu0 0.0
    %4124 = vmatpush1.msra.mxu0 0.0
    %4125 = vmatprep.subr.mxu0 0.0
    %4126 = vmatpush1.msra.mxu0 0.0
    %4127 = vmatprep.subr.mxu0 0.0
    %4128 = vmatpush1.msra.mxu0 0.0
    %4129 = vmatprep.subr.mxu0 0.0
    %4130 = vmatpush1.msra.mxu0 0.0
    %4131 = vmatprep.subr.mxu0 0.0
    %4132 = vmatpush1.msra.mxu0 0.0
    %4133 = vmatprep.subr.mxu0 0.0
    %4134 = vmatpush1.msra.mxu0 0.0
    %4135 = vmatprep.subr.mxu0 0.0
    %4136 = vmatpush1.msra.mxu0 0.0
    %4137 = vmatprep.subr.mxu0 0.0
    %4138 = vmatpush1.msra.mxu0 0.0
    %4139 = vmatprep.subr.mxu0 0.0
    %4140 = vmatpush1.msra.mxu0 0.0
    %4141 = vmatprep.subr.mxu0 0.0
    %4142 = vmatpush1.msra.mxu0 0.0
    %4143 = vmatprep.subr.mxu0 0.0
    %4144 = vmatpush1.msra.mxu0 0.0
    %4145 = vmatprep.subr.mxu0 0.0
    %4146 = vmatpush1.msra.mxu0 0.0
    %4147 = vmatprep.subr.mxu0 0.0
    %4148 = vmatpush1.msra.mxu0 0.0
    %4149 = vmatprep.subr.mxu0 0.0
    %4150 = vmatpush1.msra.mxu0 0.0
    %4151 = vmatprep.subr.mxu0 0.0
    %4152 = vmatpush1.msra.mxu0 0.0
    %4153 = vmatprep.subr.mxu0 0.0
    %4154 = vmatpush1.msra.mxu0 0.0
    %4155 = vmatprep.subr.mxu0 0.0
    %4156 = vmatpush1.msra.mxu0 0.0
    %4157 = vmatprep.subr.mxu0 0.0
    %4158 = vmatpush1.msra.mxu0 0.0
    %4159 = vmatprep.subr.mxu0 0.0
    %4160 = vmatpush1.msra.mxu0 0.0
    %4161 = vmatprep.subr.mxu0 0.0
    %4162 = vmatpush1.msra.mxu0 0.0
    %4163 = vmatprep.subr.mxu0 0.0
    %4164 = vmatpush1.msra.mxu0 0.0
    %4165 = vmatprep.subr.mxu0 0.0
    %4166 = vmatpush1.msra.mxu0 0.0
    %4167 = vmatprep.mubr.f32.mxu0 0.0
    %4168 = vmatmul.mubr.f32.gmra.mrb[0].mxu0 %v4101
    %v4169 = vpop.f32.mrb[0].mxu0
    %v4170 = vadd.f32 0.0, %v4169
    %v4171 = vpop.f32.mrb[0].mxu0
    %4172 = vdwg.mxu0
    %v4174 = vsel %vm190, %v3942, 0
    %4176 = vmatprep.subr.mxu0 0.0
    %4177 = vmatpush1.msra.mxu0 %v2540
    %4178 = vmatprep.subr.mxu0 0.0
    %4179 = vmatpush1.msra.mxu0 0.0
    %4180 = vmatprep.subr.mxu0 0.0
    %4181 = vmatpush1.msra.mxu0 0.0
    %4182 = vmatprep.subr.mxu0 0.0
    %4183 = vmatpush1.msra.mxu0 0.0
    %4184 = vmatprep.subr.mxu0 0.0
    %4185 = vmatpush1.msra.mxu0 0.0
    %4186 = vmatprep.subr.mxu0 0.0
    %4187 = vmatpush1.msra.mxu0 0.0
    %4188 = vmatprep.subr.mxu0 0.0
    %4189 = vmatpush1.msra.mxu0 0.0
    %4190 = vmatprep.subr.mxu0 0.0
    %4191 = vmatpush1.msra.mxu0 0.0
    %4192 = vmatprep.subr.mxu0 0.0
    %4193 = vmatpush1.msra.mxu0 0.0
    %4194 = vmatprep.subr.mxu0 0.0
    %4195 = vmatpush1.msra.mxu0 0.0
    %4196 = vmatprep.subr.mxu0 0.0
    %4197 = vmatpush1.msra.mxu0 0.0
    %4198 = vmatprep.subr.mxu0 0.0
    %4199 = vmatpush1.msra.mxu0 0.0
    %4200 = vmatprep.subr.mxu0 0.0
    %4201 = vmatpush1.msra.mxu0 0.0
    %4202 = vmatprep.subr.mxu0 0.0
    %4203 = vmatpush1.msra.mxu0 0.0
    %4204 = vmatprep.subr.mxu0 0.0
    %4205 = vmatpush1.msra.mxu0 0.0
    %4206 = vmatprep.subr.mxu0 0.0
    %4207 = vmatpush1.msra.mxu0 0.0
    %4208 = vmatprep.subr.mxu0 0.0
    %4209 = vmatpush1.msra.mxu0 0.0
    %4210 = vmatprep.subr.mxu0 0.0
    %4211 = vmatpush1.msra.mxu0 0.0
    %4212 = vmatprep.subr.mxu0 0.0
    %4213 = vmatpush1.msra.mxu0 0.0
    %4214 = vmatprep.subr.mxu0 0.0
    %4215 = vmatpush1.msra.mxu0 0.0
    %4216 = vmatprep.subr.mxu0 0.0
    %4217 = vmatpush1.msra.mxu0 0.0
    %4218 = vmatprep.subr.mxu0 0.0
    %4219 = vmatpush1.msra.mxu0 0.0
    %4220 = vmatprep.subr.mxu0 0.0
    %4221 = vmatpush1.msra.mxu0 0.0
    %4222 = vmatprep.subr.mxu0 0.0
    %4223 = vmatpush1.msra.mxu0 0.0
    %4224 = vmatprep.subr.mxu0 0.0
    %4225 = vmatpush1.msra.mxu0 0.0
    %4226 = vmatprep.subr.mxu0 0.0
    %4227 = vmatpush1.msra.mxu0 0.0
    %4228 = vmatprep.subr.mxu0 0.0
    %4229 = vmatpush1.msra.mxu0 0.0
    %4230 = vmatprep.subr.mxu0 0.0
    %4231 = vmatpush1.msra.mxu0 0.0
    %4232 = vmatprep.subr.mxu0 0.0
    %4233 = vmatpush1.msra.mxu0 0.0
    %4234 = vmatprep.subr.mxu0 0.0
    %4235 = vmatpush1.msra.mxu0 0.0
    %4236 = vmatprep.subr.mxu0 0.0
    %4237 = vmatpush1.msra.mxu0 0.0
    %4238 = vmatprep.subr.mxu0 0.0
    %4239 = vmatpush1.msra.mxu0 0.0
    %4240 = vmatprep.mubr.f32.mxu0 0.0
    %4241 = vmatmul.mubr.f32.gmra.mrb[0].mxu0 %v4174
    %v4242 = vpop.f32.mrb[0].mxu0
    %v4243 = vadd.f32 0.0, %v4242
    %v4244 = vpop.f32.mrb[0].mxu0
    %4245 = vdwg.mxu0
    %v4247 = vsel %vm190, %v4018, 0
    %4249 = vmatprep.subr.mxu0 0.0
    %4250 = vmatpush1.msra.mxu0 %v2541
    %4251 = vmatprep.subr.mxu0 0.0
    %4252 = vmatpush1.msra.mxu0 0.0
    %4253 = vmatprep.subr.mxu0 0.0
    %4254 = vmatpush1.msra.mxu0 0.0
    %4255 = vmatprep.subr.mxu0 0.0
    %4256 = vmatpush1.msra.mxu0 0.0
    %4257 = vmatprep.subr.mxu0 0.0
    %4258 = vmatpush1.msra.mxu0 0.0
    %4259 = vmatprep.subr.mxu0 0.0
    %4260 = vmatpush1.msra.mxu0 0.0
    %4261 = vmatprep.subr.mxu0 0.0
    %4262 = vmatpush1.msra.mxu0 0.0
    %4263 = vmatprep.subr.mxu0 0.0
    %4264 = vmatpush1.msra.mxu0 0.0
    %4265 = vmatprep.subr.mxu0 0.0
    %4266 = vmatpush1.msra.mxu0 0.0
    %4267 = vmatprep.subr.mxu0 0.0
    %4268 = vmatpush1.msra.mxu0 0.0
    %4269 = vmatprep.subr.mxu0 0.0
    %4270 = vmatpush1.msra.mxu0 0.0
    %4271 = vmatprep.subr.mxu0 0.0
    %4272 = vmatpush1.msra.mxu0 0.0
    %4273 = vmatprep.subr.mxu0 0.0
    %4274 = vmatpush1.msra.mxu0 0.0
    %4275 = vmatprep.subr.mxu0 0.0
    %4276 = vmatpush1.msra.mxu0 0.0
    %4277 = vmatprep.subr.mxu0 0.0
    %4278 = vmatpush1.msra.mxu0 0.0
    %4279 = vmatprep.subr.mxu0 0.0
    %4280 = vmatpush1.msra.mxu0 0.0
    %4281 = vmatprep.subr.mxu0 0.0
    %4282 = vmatpush1.msra.mxu0 0.0
    %4283 = vmatprep.subr.mxu0 0.0
    %4284 = vmatpush1.msra.mxu0 0.0
    %4285 = vmatprep.subr.mxu0 0.0
    %4286 = vmatpush1.msra.mxu0 0.0
    %4287 = vmatprep.subr.mxu0 0.0
    %4288 = vmatpush1.msra.mxu0 0.0
    %4289 = vmatprep.subr.mxu0 0.0
    %4290 = vmatpush1.msra.mxu0 0.0
    %4291 = vmatprep.subr.mxu0 0.0
    %4292 = vmatpush1.msra.mxu0 0.0
    %4293 = vmatprep.subr.mxu0 0.0
    %4294 = vmatpush1.msra.mxu0 0.0
    %4295 = vmatprep.subr.mxu0 0.0
    %4296 = vmatpush1.msra.mxu0 0.0
    %4297 = vmatprep.subr.mxu0 0.0
    %4298 = vmatpush1.msra.mxu0 0.0
    %4299 = vmatprep.subr.mxu0 0.0
    %4300 = vmatpush1.msra.mxu0 0.0
    %4301 = vmatprep.subr.mxu0 0.0
    %4302 = vmatpush1.msra.mxu0 0.0
    %4303 = vmatprep.subr.mxu0 0.0
    %4304 = vmatpush1.msra.mxu0 0.0
    %4305 = vmatprep.subr.mxu0 0.0
    %4306 = vmatpush1.msra.mxu0 0.0
    %4307 = vmatprep.subr.mxu0 0.0
    %4308 = vmatpush1.msra.mxu0 0.0
    %4309 = vmatprep.subr.mxu0 0.0
    %4310 = vmatpush1.msra.mxu0 0.0
    %4311 = vmatprep.subr.mxu0 0.0
    %4312 = vmatpush1.msra.mxu0 0.0
    %4313 = vmatprep.mubr.f32.mxu0 0.0
    %4314 = vmatmul.mubr.f32.gmra.mrb[0].mxu0 %v4247
    %v4315 = vpop.f32.mrb[0].mxu0
    %v4316 = vadd.f32 0.0, %v4315
    %v4317 = vpop.f32.mrb[0].mxu0
    %4318 = vdwg.mxu0
    %v4320 = vsel %vm190, %v4094, 0
    %4322 = vmatprep.subr.mxu0 0.0
    %4323 = vmatpush1.msra.mxu0 %v2542
    %4324 = vmatprep.subr.mxu0 0.0
    %4325 = vmatpush1.msra.mxu0 0.0
    %4326 = vmatprep.subr.mxu0 0.0
    %4327 = vmatpush1.msra.mxu0 0.0
    %4328 = vmatprep.subr.mxu0 0.0
    %4329 = vmatpush1.msra.mxu0 0.0
    %4330 = vmatprep.subr.mxu0 0.0
    %4331 = vmatpush1.msra.mxu0 0.0
    %4332 = vmatprep.subr.mxu0 0.0
    %4333 = vmatpush1.msra.mxu0 0.0
    %4334 = vmatprep.subr.mxu0 0.0
    %4335 = vmatpush1.msra.mxu0 0.0
    %4336 = vmatprep.subr.mxu0 0.0
    %4337 = vmatpush1.msra.mxu0 0.0
    %4338 = vmatprep.subr.mxu0 0.0
    %4339 = vmatpush1.msra.mxu0 0.0
    %4340 = vmatprep.subr.mxu0 0.0
    %4341 = vmatpush1.msra.mxu0 0.0
    %4342 = vmatprep.subr.mxu0 0.0
    %4343 = vmatpush1.msra.mxu0 0.0
    %4344 = vmatprep.subr.mxu0 0.0
    %4345 = vmatpush1.msra.mxu0 0.0
    %4346 = vmatprep.subr.mxu0 0.0
    %4347 = vmatpush1.msra.mxu0 0.0
    %4348 = vmatprep.subr.mxu0 0.0
    %4349 = vmatpush1.msra.mxu0 0.0
    %4350 = vmatprep.subr.mxu0 0.0
    %4351 = vmatpush1.msra.mxu0 0.0
    %4352 = vmatprep.subr.mxu0 0.0
    %4353 = vmatpush1.msra.mxu0 0.0
    %4354 = vmatprep.subr.mxu0 0.0
    %4355 = vmatpush1.msra.mxu0 0.0
    %4356 = vmatprep.subr.mxu0 0.0
    %4357 = vmatpush1.msra.mxu0 0.0
    %4358 = vmatprep.subr.mxu0 0.0
    %4359 = vmatpush1.msra.mxu0 0.0
    %4360 = vmatprep.subr.mxu0 0.0
    %4361 = vmatpush1.msra.mxu0 0.0
    %4362 = vmatprep.subr.mxu0 0.0
    %4363 = vmatpush1.msra.mxu0 0.0
    %4364 = vmatprep.subr.mxu0 0.0
    %4365 = vmatpush1.msra.mxu0 0.0
    %4366 = vmatprep.subr.mxu0 0.0
    %4367 = vmatpush1.msra.mxu0 0.0
    %4368 = vmatprep.subr.mxu0 0.0
    %4369 = vmatpush1.msra.mxu0 0.0
    %4370 = vmatprep.subr.mxu0 0.0
    %4371 = vmatpush1.msra.mxu0 0.0
    %4372 = vmatprep.subr.mxu0 0.0
    %4373 = vmatpush1.msra.mxu0 0.0
    %4374 = vmatprep.subr.mxu0 0.0
    %4375 = vmatpush1.msra.mxu0 0.0
    %4376 = vmatprep.subr.mxu0 0.0
    %4377 = vmatpush1.msra.mxu0 0.0
    %4378 = vmatprep.subr.mxu0 0.0
    %4379 = vmatpush1.msra.mxu0 0.0
    %4380 = vmatprep.subr.mxu0 0.0
    %4381 = vmatpush1.msra.mxu0 0.0
    %4382 = vmatprep.subr.mxu0 0.0
    %4383 = vmatpush1.msra.mxu0 0.0
    %4384 = vmatprep.subr.mxu0 0.0
    %4385 = vmatpush1.msra.mxu0 0.0
    %4386 = vmatprep.mubr.f32.mxu0 0.0
    %4387 = vmatmul.mubr.f32.gmra.mrb[0].mxu0 %v4320
    %v4388 = vpop.f32.mrb[0].mxu0
    %v4389 = vadd.f32 0.0, %v4388
    %v4390 = vpop.f32.mrb[0].mxu0
    %4391 = vdwg.mxu0
    %v4393 = vsel %vm190, %v4170, 0
    %4395 = vmatprep.subr.mxu0 0.0
    %4396 = vmatpush1.msra.mxu0 %v2543
    %4397 = vmatprep.subr.mxu0 0.0
    %4398 = vmatpush1.msra.mxu0 0.0
    %4399 = vmatprep.subr.mxu0 0.0
    %4400 = vmatpush1.msra.mxu0 0.0
    %4401 = vmatprep.subr.mxu0 0.0
    %4402 = vmatpush1.msra.mxu0 0.0
    %4403 = vmatprep.subr.mxu0 0.0
    %4404 = vmatpush1.msra.mxu0 0.0
    %4405 = vmatprep.subr.mxu0 0.0
    %4406 = vmatpush1.msra.mxu0 0.0
    %4407 = vmatprep.subr.mxu0 0.0
    %4408 = vmatpush1.msra.mxu0 0.0
    %4409 = vmatprep.subr.mxu0 0.0
    %4410 = vmatpush1.msra.mxu0 0.0
    %4411 = vmatprep.subr.mxu0 0.0
    %4412 = vmatpush1.msra.mxu0 0.0
    %4413 = vmatprep.subr.mxu0 0.0
    %4414 = vmatpush1.msra.mxu0 0.0
    %4415 = vmatprep.subr.mxu0 0.0
    %4416 = vmatpush1.msra.mxu0 0.0
    %4417 = vmatprep.subr.mxu0 0.0
    %4418 = vmatpush1.msra.mxu0 0.0
    %4419 = vmatprep.subr.mxu0 0.0
    %4420 = vmatpush1.msra.mxu0 0.0
    %4421 = vmatprep.subr.mxu0 0.0
    %4422 = vmatpush1.msra.mxu0 0.0
    %4423 = vmatprep.subr.mxu0 0.0
    %4424 = vmatpush1.msra.mxu0 0.0
    %4425 = vmatprep.subr.mxu0 0.0
    %4426 = vmatpush1.msra.mxu0 0.0
    %4427 = vmatprep.subr.mxu0 0.0
    %4428 = vmatpush1.msra.mxu0 0.0
    %4429 = vmatprep.subr.mxu0 0.0
    %4430 = vmatpush1.msra.mxu0 0.0
    %4431 = vmatprep.subr.mxu0 0.0
    %4432 = vmatpush1.msra.mxu0 0.0
    %4433 = vmatprep.subr.mxu0 0.0
    %4434 = vmatpush1.msra.mxu0 0.0
    %4435 = vmatprep.subr.mxu0 0.0
    %4436 = vmatpush1.msra.mxu0 0.0
    %4437 = vmatprep.subr.mxu0 0.0
    %4438 = vmatpush1.msra.mxu0 0.0
    %4439 = vmatprep.subr.mxu0 0.0
    %4440 = vmatpush1.msra.mxu0 0.0
    %4441 = vmatprep.subr.mxu0 0.0
    %4442 = vmatpush1.msra.mxu0 0.0
    %4443 = vmatprep.subr.mxu0 0.0
    %4444 = vmatpush1.msra.mxu0 0.0
    %4445 = vmatprep.subr.mxu0 0.0
    %4446 = vmatpush1.msra.mxu0 0.0
    %4447 = vmatprep.subr.mxu0 0.0
    %4448 = vmatpush1.msra.mxu0 0.0
    %4449 = vmatprep.subr.mxu0 0.0
    %4450 = vmatpush1.msra.mxu0 0.0
    %4451 = vmatprep.subr.mxu0 0.0
    %4452 = vmatpush1.msra.mxu0 0.0
    %4453 = vmatprep.subr.mxu0 0.0
    %4454 = vmatpush1.msra.mxu0 0.0
    %4455 = vmatprep.subr.mxu0 0.0
    %4456 = vmatpush1.msra.mxu0 0.0
    %4457 = vmatprep.subr.mxu0 0.0
    %4458 = vmatpush1.msra.mxu0 0.0
    %4459 = vmatprep.mubr.f32.mxu0 0.0
    %4460 = vmatmul.mubr.f32.gmra.mrb[0].mxu0 %v4393
    %v4461 = vpop.f32.mrb[0].mxu0
    %v4462 = vadd.f32 0.0, %v4461
    %v4463 = vpop.f32.mrb[0].mxu0
    %4464 = vdwg.mxu0
    %v4465 = vadd.f32 %v4243, %v4316
    %v4466 = vadd.f32 %v4465, %v4389
    %v4467 = vadd.f32 %v4466, %v4462
    %v4468 = vlaneseq
    %v4469 = vshrl.u32 %v4468, 7
    %v4470 = vsub.s32 0, %v4469
    %v4471 = vrot.slane %v2442, %v4470
    %v4472 = vadd.f32 %v3505, %v4471
    %v4473 = vadd.f32 %v4467, %v4471
    %v4474 = vadd.f32 %v2439, %v4472
    %v4475 = vadd.f32 %v2440, %v4473
    %v4476 = vsel %vm34, %v4474, 0.0
    %4477 = vadd.xlane.f32.xlu0 %v4476
    %v4478 = vpop.xlane.xlu0 %4477
    %v4479 = vsel %vm34, %v4475, 0.0
    %4480 = vadd.xlane.f32.xlu0 %v4479
    %v4481 = vpop.xlane.xlu0 %4480
    %v4482 = vmul.f32 %v4478, %v41
    %v4483 = vmul.f32 %v4481, %v41
    %v4484 = vsub.f32 %v4474, %v4482
    %v4485 = vsub.f32 %v4475, %v4483
    %v4486 = vmul.f32 %v4484, %v4484
    %v4487 = vmul.f32 %v4485, %v4485
    %v4488 = vsel %vm34, %v4486, 0.0
    %4489 = vadd.xlane.f32.xlu0 %v4488
    %v4490 = vpop.xlane.xlu0 %4489
    %v4491 = vsel %vm34, %v4487, 0.0
    %4492 = vadd.xlane.f32.xlu0 %v4491
    %v4493 = vpop.xlane.xlu0 %4492
    %v4494 = vmul.f32 %v4490, %v41
    %v4495 = vmul.f32 %v4493, %v41
    %v4496 = vadd.f32 %v4494, 1e-12
    %v4497 = vadd.f32 %v4495, 1e-12
    %v4498 = vrsqrt.pop %v4496
    %v4499 = vrsqrt.pop %v4497
    %v4500 = vmul.f32 %v4484, %v4498
    %v4501 = vmul.f32 %v4485, %v4499
    %v4502 = vlaneseq
    %v4503 = vshrl.u32 %v4502, 7
    %v4504 = vsub.s32 0, %v4503
    %v4505 = vrot.slane %v2443, %v4504
    %v4506 = vmul.f32 %v4500, %v4505
    %v4507 = vmul.f32 %v4501, %v4505
    %v4508 = vlaneseq
    %v4509 = vshrl.u32 %v4508, 7
    %v4510 = vsub.s32 0, %v4509
    %v4511 = vrot.slane %v2444, %v4510
    %v4512 = vadd.f32 %v4506, %v4511
    %v4513 = vadd.f32 %v4507, %v4511
    %s4514 = scalar_lea.vmem %s5, 32
    %v4515 = vld [vmem:[%s4514] sm:$0xff]
    %v4516 = vld [vmem:[%s4514 + $0x8] sm:$0xff]
    %v4517 = vld [vmem:[%s4514 + $0x10] sm:$0xff]
    %v4518 = vld [vmem:[%s4514 + $0x18] sm:$0xff]
    %v4519 = vlaneseq
    %v4520 = vshrl.u32 %v4519, 7
    %v4521 = vsub.s32 0, %v4520
    %v4522 = vrot.slane %v2445, %v4521
    %v4524 = vsel %vm34, %v4512, 0
    %v4527 = vsel %vm34, %v4513, 0
    %4529 = vmatprep.subr.mxu0 0.0
    %4530 = vmatpush1.msra.mxu0 %v4515
    %4531 = vmatprep.subr.mxu0 0.0
    %4532 = vmatpush1.msra.mxu0 %v4516
    %4533 = vmatprep.subr.mxu0 0.0
    %4534 = vmatpush1.msra.mxu0 %v4517
    %4535 = vmatprep.subr.mxu0 0.0
    %4536 = vmatpush1.msra.mxu0 %v4518
    %4537 = vmatprep.subr.mxu0 0.0
    %4538 = vmatpush1.msra.mxu0 0.0
    %4539 = vmatprep.subr.mxu0 0.0
    %4540 = vmatpush1.msra.mxu0 0.0
    %4541 = vmatprep.subr.mxu0 0.0
    %4542 = vmatpush1.msra.mxu0 0.0
    %4543 = vmatprep.subr.mxu0 0.0
    %4544 = vmatpush1.msra.mxu0 0.0
    %4545 = vmatprep.subr.mxu0 0.0
    %4546 = vmatpush1.msra.mxu0 0.0
    %4547 = vmatprep.subr.mxu0 0.0
    %4548 = vmatpush1.msra.mxu0 0.0
    %4549 = vmatprep.subr.mxu0 0.0
    %4550 = vmatpush1.msra.mxu0 0.0
    %4551 = vmatprep.subr.mxu0 0.0
    %4552 = vmatpush1.msra.mxu0 0.0
    %4553 = vmatprep.subr.mxu0 0.0
    %4554 = vmatpush1.msra.mxu0 0.0
    %4555 = vmatprep.subr.mxu0 0.0
    %4556 = vmatpush1.msra.mxu0 0.0
    %4557 = vmatprep.subr.mxu0 0.0
    %4558 = vmatpush1.msra.mxu0 0.0
    %4559 = vmatprep.subr.mxu0 0.0
    %4560 = vmatpush1.msra.mxu0 0.0
    %4561 = vmatprep.subr.mxu0 0.0
    %4562 = vmatpush1.msra.mxu0 0.0
    %4563 = vmatprep.subr.mxu0 0.0
    %4564 = vmatpush1.msra.mxu0 0.0
    %4565 = vmatprep.subr.mxu0 0.0
    %4566 = vmatpush1.msra.mxu0 0.0
    %4567 = vmatprep.subr.mxu0 0.0
    %4568 = vmatpush1.msra.mxu0 0.0
    %4569 = vmatprep.subr.mxu0 0.0
    %4570 = vmatpush1.msra.mxu0 0.0
    %4571 = vmatprep.subr.mxu0 0.0
    %4572 = vmatpush1.msra.mxu0 0.0
    %4573 = vmatprep.subr.mxu0 0.0
    %4574 = vmatpush1.msra.mxu0 0.0
    %4575 = vmatprep.subr.mxu0 0.0
    %4576 = vmatpush1.msra.mxu0 0.0
    %4577 = vmatprep.subr.mxu0 0.0
    %4578 = vmatpush1.msra.mxu0 0.0
    %4579 = vmatprep.subr.mxu0 0.0
    %4580 = vmatpush1.msra.mxu0 0.0
    %4581 = vmatprep.subr.mxu0 0.0
    %4582 = vmatpush1.msra.mxu0 0.0
    %4583 = vmatprep.subr.mxu0 0.0
    %4584 = vmatpush1.msra.mxu0 0.0
    %4585 = vmatprep.subr.mxu0 0.0
    %4586 = vmatpush1.msra.mxu0 0.0
    %4587 = vmatprep.subr.mxu0 0.0
    %4588 = vmatpush1.msra.mxu0 0.0
    %4589 = vmatprep.subr.mxu0 0.0
    %4590 = vmatpush1.msra.mxu0 0.0
    %4591 = vmatprep.subr.mxu0 0.0
    %4592 = vmatpush1.msra.mxu0 0.0
    %4593 = vmatprep.mubr.f32.mxu0 0.0
    %4594 = vmatmul.mubr.f32.gmra.mrb[0].mxu0 %v4524
    %v4595 = vpop.f32.mrb[0].mxu0
    %v4596 = vadd.f32 %v4522, %v4595
    %v4597 = vpop.f32.mrb[0].mxu0
    %4598 = vmatprep.mubr.f32.mxu0 0.0
    %4599 = vmatmul.mubr.f32.gmra.mrb[0].mxu0 %v4527
    %v4600 = vpop.f32.mrb[0].mxu0
    %v4601 = vadd.f32 %v4522, %v4600
    %v4602 = vpop.f32.mrb[0].mxu0
    %4603 = vdwg.mxu0
    %v4604 = vmul.f32 %v4596, 0.5
    %v4605 = vmul.f32 %v4601, 0.5
    %v4606 = vmul.f32 %v4596, 0.70710677
    %v4607 = vmul.f32 %v4601, 0.70710677
    %vm4608 = vcmp.ge.f32.partialorder %v4606, 0.0
    %vm4609 = vcmp.ge.f32.partialorder %v4607, 0.0
    %v4610 = vsel %vm4608, 1.0, -1.0
    %v4611 = vsel %vm4609, 1.0, -1.0
    %v4612 = vand.u32 2147483647, %v4606
    %v4613 = vand.u32 2147483647, %v4607
    %v4614 = vmul.f32 %v4612, 0.3275911
    %v4615 = vmul.f32 %v4613, 0.3275911
    %v4616 = vadd.f32 %v4614, 1.0
    %v4617 = vadd.f32 %v4615, 1.0
    %v4618 = vrcp.pop %v4616
    %v4619 = vmul.f32 1.0, %v4618
    %v4620 = vrcp.pop %v4617
    %v4621 = vmul.f32 1.0, %v4620
    %v4622 = vmul.f32 %v4619, 1.0614054
    %v4623 = vmul.f32 %v4621, 1.0614054
    %v4624 = vadd.f32 %v4622, -1.4531521
    %v4625 = vadd.f32 %v4623, -1.4531521
    %v4626 = vmul.f32 %v4624, %v4619
    %v4627 = vmul.f32 %v4625, %v4621
    %v4628 = vadd.f32 %v4626, 1.4214138
    %v4629 = vadd.f32 %v4627, 1.4214138
    %v4630 = vmul.f32 %v4628, %v4619
    %v4631 = vmul.f32 %v4629, %v4621
    %v4632 = vadd.f32 %v4630, -0.28449672
    %v4633 = vadd.f32 %v4631, -0.28449672
    %v4634 = vmul.f32 %v4632, %v4619
    %v4635 = vmul.f32 %v4633, %v4621
    %v4636 = vadd.f32 %v4634, 0.2548296
    %v4637 = vadd.f32 %v4635, 0.2548296
    %v4638 = vmul.f32 %v4636, %v4619
    %v4639 = vmul.f32 %v4637, %v4621
    %v4640 = vsub.f32 0.0, %v4612
    %v4641 = vsub.f32 0.0, %v4613
    %v4642 = vmul.f32 %v4640, %v4612
    %v4643 = vmul.f32 %v4641, %v4613
    %v4644 = vmul.f32 %v4642, 1.442695
    %v4645 = vpow.pop %v4644
    %v4646 = vmul.f32 %v4643, 1.442695
    %v4647 = vpow.pop %v4646
    %v4648 = vmul.f32 %v4638, %v4645
    %v4649 = vmul.f32 %v4639, %v4647
    %v4650 = vsub.f32 1.0, %v4648
    %v4651 = vsub.f32 1.0, %v4649
    %v4652 = vmul.f32 %v4610, %v4650
    %v4653 = vmul.f32 %v4611, %v4651
    %v4654 = vadd.f32 %v4652, 1.0
    %v4655 = vadd.f32 %v4653, 1.0
    %v4656 = vmul.f32 %v4604, %v4654
    %v4657 = vmul.f32 %v4605, %v4655
    %s4658 = scalar_lea.vmem %s6, 64
    %v4659 = vld [vmem:[%s4658] sm:$0xff]
    %v4660 = vld [vmem:[%s4658 + $0x8] sm:$0xff]
    %v4661 = vld [vmem:[%s4658 + $0x10] sm:$0xff]
    %v4662 = vld [vmem:[%s4658 + $0x18] sm:$0xff]
    %v4663 = vld [vmem:[%s4658 + $0x20] sm:$0xff]
    %v4664 = vld [vmem:[%s4658 + $0x28] sm:$0xff]
    %v4665 = vld [vmem:[%s4658 + $0x30] sm:$0xff]
    %v4666 = vld [vmem:[%s4658 + $0x38] sm:$0xff]
    %v4667 = vlaneseq
    %v4668 = vshrl.u32 %v4667, 7
    %v4669 = vsub.s32 0, %v4668
    %v4670 = vrot.slane %v2446, %v4669
    %v4672 = vsel %vm2319, %v4656, 0
    %v4675 = vsel %vm2319, %v4657, 0
    %4677 = vmatprep.subr.mxu0 0.0
    %4678 = vmatpush1.msra.mxu0 %v4659
    %4679 = vmatprep.subr.mxu0 0.0
    %4680 = vmatpush1.msra.mxu0 %v4660
    %4681 = vmatprep.subr.mxu0 0.0
    %4682 = vmatpush1.msra.mxu0 %v4661
    %4683 = vmatprep.subr.mxu0 0.0
    %4684 = vmatpush1.msra.mxu0 %v4662
    %4685 = vmatprep.subr.mxu0 0.0
    %4686 = vmatpush1.msra.mxu0 %v4663
    %4687 = vmatprep.subr.mxu0 0.0
    %4688 = vmatpush1.msra.mxu0 %v4664
    %4689 = vmatprep.subr.mxu0 0.0
    %4690 = vmatpush1.msra.mxu0 %v4665
    %4691 = vmatprep.subr.mxu0 0.0
    %4692 = vmatpush1.msra.mxu0 %v4666
    %4693 = vmatprep.subr.mxu0 0.0
    %4694 = vmatpush1.msra.mxu0 0.0
    %4695 = vmatprep.subr.mxu0 0.0
    %4696 = vmatpush1.msra.mxu0 0.0
    %4697 = vmatprep.subr.mxu0 0.0
    %4698 = vmatpush1.msra.mxu0 0.0
    %4699 = vmatprep.subr.mxu0 0.0
    %4700 = vmatpush1.msra.mxu0 0.0
    %4701 = vmatprep.subr.mxu0 0.0
    %4702 = vmatpush1.msra.mxu0 0.0
    %4703 = vmatprep.subr.mxu0 0.0
    %4704 = vmatpush1.msra.mxu0 0.0
    %4705 = vmatprep.subr.mxu0 0.0
    %4706 = vmatpush1.msra.mxu0 0.0
    %4707 = vmatprep.subr.mxu0 0.0
    %4708 = vmatpush1.msra.mxu0 0.0
    %4709 = vmatprep.subr.mxu0 0.0
    %4710 = vmatpush1.msra.mxu0 0.0
    %4711 = vmatprep.subr.mxu0 0.0
    %4712 = vmatpush1.msra.mxu0 0.0
    %4713 = vmatprep.subr.mxu0 0.0
    %4714 = vmatpush1.msra.mxu0 0.0
    %4715 = vmatprep.subr.mxu0 0.0
    %4716 = vmatpush1.msra.mxu0 0.0
    %4717 = vmatprep.subr.mxu0 0.0
    %4718 = vmatpush1.msra.mxu0 0.0
    %4719 = vmatprep.subr.mxu0 0.0
    %4720 = vmatpush1.msra.mxu0 0.0
    %4721 = vmatprep.subr.mxu0 0.0
    %4722 = vmatpush1.msra.mxu0 0.0
    %4723 = vmatprep.subr.mxu0 0.0
    %4724 = vmatpush1.msra.mxu0 0.0
    %4725 = vmatprep.subr.mxu0 0.0
    %4726 = vmatpush1.msra.mxu0 0.0
    %4727 = vmatprep.subr.mxu0 0.0
    %4728 = vmatpush1.msra.mxu0 0.0
    %4729 = vmatprep.subr.mxu0 0.0
    %4730 = vmatpush1.msra.mxu0 0.0
    %4731 = vmatprep.subr.mxu0 0.0
    %4732 = vmatpush1.msra.mxu0 0.0
    %4733 = vmatprep.subr.mxu0 0.0
    %4734 = vmatpush1.msra.mxu0 0.0
    %4735 = vmatprep.subr.mxu0 0.0
    %4736 = vmatpush1.msra.mxu0 0.0
    %4737 = vmatprep.subr.mxu0 0.0
    %4738 = vmatpush1.msra.mxu0 0.0
    %4739 = vmatprep.subr.mxu0 0.0
    %4740 = vmatpush1.msra.mxu0 0.0
    %4741 = vmatprep.mubr.f32.mxu0 0.0
    %4742 = vmatmul.mubr.f32.gmra.mrb[0].mxu0 %v4672
    %v4743 = vpop.f32.mrb[0].mxu0
    %v4744 = vadd.f32 %v4670, %v4743
    %v4745 = vpop.f32.mrb[0].mxu0
    %4746 = vmatprep.mubr.f32.mxu0 0.0
    %4747 = vmatmul.mubr.f32.gmra.mrb[0].mxu0 %v4675
    %v4748 = vpop.f32.mrb[0].mxu0
    %v4749 = vadd.f32 %v4670, %v4748
    %v4750 = vpop.f32.mrb[0].mxu0
    %4751 = vdwg.mxu0
    %v4752 = vadd.f32 %v4512, %v4744
    %v4753 = vadd.f32 %v4513, %v4749
    %v4754 = vsel %vm34, %v4752, 0.0
    %4755 = vadd.xlane.f32.xlu0 %v4754
    %v4756 = vpop.xlane.xlu0 %4755
    %v4757 = vsel %vm34, %v4753, 0.0
    %4758 = vadd.xlane.f32.xlu0 %v4757
    %v4759 = vpop.xlane.xlu0 %4758
    %v4760 = vmul.f32 %v4756, %v41
    %v4761 = vmul.f32 %v4759, %v41
    %v4762 = vsub.f32 %v4752, %v4760
    %v4763 = vsub.f32 %v4753, %v4761
    %v4764 = vmul.f32 %v4762, %v4762
    %v4765 = vmul.f32 %v4763, %v4763
    %v4766 = vsel %vm34, %v4764, 0.0
    %4767 = vadd.xlane.f32.xlu0 %v4766
    %v4768 = vpop.xlane.xlu0 %4767
    %v4769 = vsel %vm34, %v4765, 0.0
    %4770 = vadd.xlane.f32.xlu0 %v4769
    %v4771 = vpop.xlane.xlu0 %4770
    %v4772 = vmul.f32 %v4768, %v41
    %v4773 = vmul.f32 %v4771, %v41
    %v4774 = vadd.f32 %v4772, 1e-12
    %v4775 = vadd.f32 %v4773, 1e-12
    %v4776 = vrsqrt.pop %v4774
    %v4777 = vrsqrt.pop %v4775
    %v4778 = vmul.f32 %v4762, %v4776
    %v4779 = vmul.f32 %v4763, %v4777
    %v4780 = vlaneseq
    %v4781 = vshrl.u32 %v4780, 7
    %v4782 = vsub.s32 0, %v4781
    %v4783 = vrot.slane %v2447, %v4782
    %v4784 = vmul.f32 %v4778, %v4783
    %v4785 = vmul.f32 %v4779, %v4783
    %v4786 = vlaneseq
    %v4787 = vshrl.u32 %v4786, 7
    %v4788 = vsub.s32 0, %v4787
    %v4789 = vrot.slane %v2448, %v4788
    %v4790 = vadd.f32 %v4784, %v4789
    %v4791 = vadd.f32 %v4785, %v4789
    %v4793 = vrot.slane %v4791, 7
    %vm4795 = vcmask 1040384
    %v4796 = vsel %vm4795, %v4790, %v4793
    %v4797 = vld [vmem:[%s7] sm:$0xff]
    %v4798 = vld [vmem:[%s7 + $0x10] sm:$0xff]
    %v4799 = vld [vmem:[%s7 + $0x20] sm:$0xff]
    %v4800 = vld [vmem:[%s7 + $0x30] sm:$0xff]
    %v4801 = vld [vmem:[%s7 + $0x8] sm:$0xff]
    %v4802 = vld [vmem:[%s7 + $0x18] sm:$0xff]
    %v4803 = vld [vmem:[%s7 + $0x28] sm:$0xff]
    %v4804 = vld [vmem:[%s7 + $0x38] sm:$0xff]
    %v4805 = vld [vmem:[%s2 + $0x12] sm:$0x1]
    %v4806 = vld [vmem:[%s2 + $0x13] sm:$0x1]
    %v4807 = vlaneseq
    %v4808 = vshrl.u32 %v4807, 7
    %v4809 = vsub.s32 0, %v4808
    %v4810 = vrot.slane %v4805, %v4809
    %v4812 = vsel %vm34, %v4796, 0
    %4814 = vmatprep.subr.mxu0 0.0
    %4815 = vmatpush1.msra.mxu0 %v4797
    %4816 = vmatprep.subr.mxu0 0.0
    %4817 = vmatpush1.msra.mxu0 %v4798
    %4818 = vmatprep.subr.mxu0 0.0
    %4819 = vmatpush1.msra.mxu0 %v4799
    %4820 = vmatprep.subr.mxu0 0.0
    %4821 = vmatpush1.msra.mxu0 %v4800
    %4822 = vmatprep.subr.mxu0 0.0
    %4823 = vmatpush1.msra.mxu0 0.0
    %4824 = vmatprep.subr.mxu0 0.0
    %4825 = vmatpush1.msra.mxu0 0.0
    %4826 = vmatprep.subr.mxu0 0.0
    %4827 = vmatpush1.msra.mxu0 0.0
    %4828 = vmatprep.subr.mxu0 0.0
    %4829 = vmatpush1.msra.mxu0 0.0
    %4830 = vmatprep.subr.mxu0 0.0
    %4831 = vmatpush1.msra.mxu0 0.0
    %4832 = vmatprep.subr.mxu0 0.0
    %4833 = vmatpush1.msra.mxu0 0.0
    %4834 = vmatprep.subr.mxu0 0.0
    %4835 = vmatpush1.msra.mxu0 0.0
    %4836 = vmatprep.subr.mxu0 0.0
    %4837 = vmatpush1.msra.mxu0 0.0
    %4838 = vmatprep.subr.mxu0 0.0
    %4839 = vmatpush1.msra.mxu0 0.0
    %4840 = vmatprep.subr.mxu0 0.0
    %4841 = vmatpush1.msra.mxu0 0.0
    %4842 = vmatprep.subr.mxu0 0.0
    %4843 = vmatpush1.msra.mxu0 0.0
    %4844 = vmatprep.subr.mxu0 0.0
    %4845 = vmatpush1.msra.mxu0 0.0
    %4846 = vmatprep.subr.mxu0 0.0
    %4847 = vmatpush1.msra.mxu0 0.0
    %4848 = vmatprep.subr.mxu0 0.0
    %4849 = vmatpush1.msra.mxu0 0.0
    %4850 = vmatprep.subr.mxu0 0.0
    %4851 = vmatpush1.msra.mxu0 0.0
    %4852 = vmatprep.subr.mxu0 0.0
    %4853 = vmatpush1.msra.mxu0 0.0
    %4854 = vmatprep.subr.mxu0 0.0
    %4855 = vmatpush1.msra.mxu0 0.0
    %4856 = vmatprep.subr.mxu0 0.0
    %4857 = vmatpush1.msra.mxu0 0.0
    %4858 = vmatprep.subr.mxu0 0.0
    %4859 = vmatpush1.msra.mxu0 0.0
    %4860 = vmatprep.subr.mxu0 0.0
    %4861 = vmatpush1.msra.mxu0 0.0
    %4862 = vmatprep.subr.mxu0 0.0
    %4863 = vmatpush1.msra.mxu0 0.0
    %4864 = vmatprep.subr.mxu0 0.0
    %4865 = vmatpush1.msra.mxu0 0.0
    %4866 = vmatprep.subr.mxu0 0.0
    %4867 = vmatpush1.msra.mxu0 0.0
    %4868 = vmatprep.subr.mxu0 0.0
    %4869 = vmatpush1.msra.mxu0 0.0
    %4870 = vmatprep.subr.mxu0 0.0
    %4871 = vmatpush1.msra.mxu0 0.0
    %4872 = vmatprep.subr.mxu0 0.0
    %4873 = vmatpush1.msra.mxu0 0.0
    %4874 = vmatprep.subr.mxu0 0.0
    %4875 = vmatpush1.msra.mxu0 0.0
    %4876 = vmatprep.subr.mxu0 0.0
    %4877 = vmatpush1.msra.mxu0 0.0
    %4878 = vmatprep.mubr.f32.mxu0 0.0
    %4879 = vmatmul.mubr.f32.gmra.mrb[0].mxu0 %v4812
    %v4880 = vpop.f32.mrb[0].mxu0
    %v4881 = vadd.f32 %v4810, %v4880
    %v4882 = vpop.f32.mrb[0].mxu0
    %4883 = vdwg.mxu0
    %v4884 = vtanh.pop %v4881
    %v4885 = vlaneseq
    %v4886 = vshrl.u32 %v4885, 7
    %v4887 = vsub.s32 0, %v4886
    %v4888 = vrot.slane %v4806, %v4887
    %v4890 = vsel %vm34, %v4884, 0
    %4892 = vmatprep.subr.mxu0 0.0
    %4893 = vmatpush1.msra.mxu0 %v4801
    %4894 = vmatprep.subr.mxu0 0.0
    %4895 = vmatpush1.msra.mxu0 %v4802
    %4896 = vmatprep.subr.mxu0 0.0
    %4897 = vmatpush1.msra.mxu0 %v4803
    %4898 = vmatprep.subr.mxu0 0.0
    %4899 = vmatpush1.msra.mxu0 %v4804
    %4900 = vmatprep.subr.mxu0 0.0
    %4901 = vmatpush1.msra.mxu0 0.0
    %4902 = vmatprep.subr.mxu0 0.0
    %4903 = vmatpush1.msra.mxu0 0.0
    %4904 = vmatprep.subr.mxu0 0.0
    %4905 = vmatpush1.msra.mxu0 0.0
    %4906 = vmatprep.subr.mxu0 0.0
    %4907 = vmatpush1.msra.mxu0 0.0
    %4908 = vmatprep.subr.mxu0 0.0
    %4909 = vmatpush1.msra.mxu0 0.0
    %4910 = vmatprep.subr.mxu0 0.0
    %4911 = vmatpush1.msra.mxu0 0.0
    %4912 = vmatprep.subr.mxu0 0.0
    %4913 = vmatpush1.msra.mxu0 0.0
    %4914 = vmatprep.subr.mxu0 0.0
    %4915 = vmatpush1.msra.mxu0 0.0
    %4916 = vmatprep.subr.mxu0 0.0
    %4917 = vmatpush1.msra.mxu0 0.0
    %4918 = vmatprep.subr.mxu0 0.0
    %4919 = vmatpush1.msra.mxu0 0.0
    %4920 = vmatprep.subr.mxu0 0.0
    %4921 = vmatpush1.msra.mxu0 0.0
    %4922 = vmatprep.subr.mxu0 0.0
    %4923 = vmatpush1.msra.mxu0 0.0
    %4924 = vmatprep.subr.mxu0 0.0
    %4925 = vmatpush1.msra.mxu0 0.0
    %4926 = vmatprep.subr.mxu0 0.0
    %4927 = vmatpush1.msra.mxu0 0.0
    %4928 = vmatprep.subr.mxu0 0.0
    %4929 = vmatpush1.msra.mxu0 0.0
    %4930 = vmatprep.subr.mxu0 0.0
    %4931 = vmatpush1.msra.mxu0 0.0
    %4932 = vmatprep.subr.mxu0 0.0
    %4933 = vmatpush1.msra.mxu0 0.0
    %4934 = vmatprep.subr.mxu0 0.0
    %4935 = vmatpush1.msra.mxu0 0.0
    %4936 = vmatprep.subr.mxu0 0.0
    %4937 = vmatpush1.msra.mxu0 0.0
    %4938 = vmatprep.subr.mxu0 0.0
    %4939 = vmatpush1.msra.mxu0 0.0
    %4940 = vmatprep.subr.mxu0 0.0
    %4941 = vmatpush1.msra.mxu0 0.0
    %4942 = vmatprep.subr.mxu0 0.0
    %4943 = vmatpush1.msra.mxu0 0.0
    %4944 = vmatprep.subr.mxu0 0.0
    %4945 = vmatpush1.msra.mxu0 0.0
    %4946 = vmatprep.subr.mxu0 0.0
    %4947 = vmatpush1.msra.mxu0 0.0
    %4948 = vmatprep.subr.mxu0 0.0
    %4949 = vmatpush1.msra.mxu0 0.0
    %4950 = vmatprep.subr.mxu0 0.0
    %4951 = vmatpush1.msra.mxu0 0.0
    %4952 = vmatprep.subr.mxu0 0.0
    %4953 = vmatpush1.msra.mxu0 0.0
    %4954 = vmatprep.subr.mxu0 0.0
    %4955 = vmatpush1.msra.mxu0 0.0
    %4956 = vmatprep.mubr.f32.mxu0 0.0
    %4957 = vmatmul.mubr.f32.gmra.mrb[0].mxu0 %v4890
    %v4958 = vpop.f32.mrb[0].mxu0
    %v4959 = vadd.f32 %v4888, %v4958
    %v4960 = vpop.f32.mrb[0].mxu0
    %4961 = vdwg.mxu0
    %v4962 = vxor.u32 %v4959, 2147483648
    %v4963 = vmul.f32 %v4962, 1.442695
    %v4964 = vpow.pop %v4963
    %v4965 = vadd.f32 %v4964, 1.0
    %v4966 = vrcp.pop %v4965
    %v4967 = vmul.f32 1.0, %v4966
    %v4970 = vunpack.c.l.s4 1966171168
    %v4971 = vunpack.c.0.s8 %v4970
    %v4972 = vlaneseq
    %v4973 = vshrl.u32 %v4972, 7
    %v4974 = vsub.s32 %v4971, %v4973
    %v4975 = vrot.slane %v4967, %v4974
    %v4976 = vcombine.high %v4975, %v4975
    %v4978 = vunpack.c.l.s4 1966171168
    %v4979 = vunpack.c.0.s8 %v4978
    %v4980 = vlaneseq
    %v4981 = vshrl.u32 %v4980, 7
    %v4982 = vsub.s32 %v4979, %v4981
    %v4983 = vrot.slane %v4975, %v4982
    %v4985 = vunpack.c.l.s4 1966171168
    %v4986 = vunpack.c.0.s8 %v4985
    %v4987 = vlaneseq
    %v4988 = vshrl.u32 %v4987, 7
    %v4989 = vsub.s32 %v4986, %v4988
    %v4990 = vrot.slane %v4976, %v4989
    %4993 = vst [vmem:[#allocation2] sm:$0x1] %v4983
    %4994 = vst [vmem:[#allocation2 + $0x1] sm:$0x1] %v4990
    // Predicated region
    $region34: #{legalbert_multicls_forward.1} parent=1 // pred_check
      _
    $region35: #{legalbert_multicls_forward.1} parent=1 // pred_check_branch
      %4996 = sbr.rel (0) target = $region37
    $region36: #{legalbert_multicls_forward.1} parent=1 // pred_region
      %s4998 = ssub.s32 32, 32
      %4999 = vsyncadd [#allocation3], %s4998
      %s5000 = sshll.u32 [#allocation2], 4
      %s5001 = int_to_ptr.vmem [resolvable:$true] %s5000
      %5006 = dma.vmem_to_hbm [thread:$0]  %s5001, 32, %s8, [#allocation3], 16, 16, 1
    $region37: #{legalbert_multicls_forward.1} parent=1 // pred_fallthru
      _
    // Predicated region
    $region38: #{legalbert_multicls_forward.1} parent=1 // pred_check
      _
    $region39: #{legalbert_multicls_forward.1} parent=1 // pred_check_branch
      %5008 = sbr.rel (0) target = $region41
    $region40: #{legalbert_multicls_forward.1} parent=1 // pred_region
      %5009 = dma.done [#allocation3], 32
    $region41: #{legalbert_multicls_forward.1} parent=1 // pred_fallthru
      _
    %5010 = vsyncpa [#allocation3], 1

</llo_original>
